<compile_context>
chip_gen: v7x
topology: tpu7x:2x2x1
jax: 0.10.0
libtpu: 0.0.40
codegen_flags: <defaults>
</compile_context>

<pallas_src>
import functools

import jax
import jax.numpy as jnp
from jax.experimental import pallas as pl
from jax.experimental.pallas import tpu as pltpu


# ----------------------------------------------------------------------------
# Kernel 1: fused [prev-layer BN affine + ReLU] -> KxK "same" conv
#                 -> per-channel sum / sum-of-squares (BN batch statistics).
# One batch element per grid step, channels-major (C, H*W) layout in VMEM.
# ----------------------------------------------------------------------------
def _conv_bn_stats_kernel(x_ref, w_ref, m_ref, s_ref, b_ref,
                          y_ref, sum_ref, sq_ref, *,
                          H, W, KH, KW, Cin, Cout, apply_input_act, mxu_dtype):
    HW = H * W
    ph, pw = KH // 2, KW // 2

    xf = x_ref[0].astype(jnp.float32)                       # (Cin, H*W)
    if apply_input_act:
        # Previous layer's folded BatchNorm + ReLU, fused here so the
        # post-activation tensor never makes a standalone HBM round trip.
        # (fp32 elementwise math -- keeps v5e's VPU on its native path.)
        xf = jnp.maximum(xf * s_ref[...] + b_ref[...], 0.0)

    # Zero-extend the flattened image along the lane axis so every tap of the
    # "same" convolution becomes a static lane slice (no HBM pad pass, no
    # (C,H,W)<->(C,H*W) relayout inside the kernel).
    S = ph * W + pw                                         # max |flat shift|
    if S > 0:
        zpad = jnp.zeros((Cin, S), jnp.float32)
        xpad = jnp.concatenate([zpad, xf, zpad], axis=1)    # (Cin, H*W + 2S)
    else:
        xpad = xf

    masks = m_ref[...]                                      # (KH*KW, H*W) 0/1
    w_all = w_ref[...]                                      # (KH*KW, Cout, Cin)

    acc = jnp.zeros((Cout, HW), jnp.float32)
    for dy in range(KH):                                    # unrolled taps
        for dx in range(KW):
            t = dy * KW + dx
            start = (dy - ph) * W + (dx - pw) + S           # static
            win = xpad[:, start:start + HW]                 # (Cin, H*W)
            tap = win * masks[t:t + 1, :]                   # zero out-of-image
            # (Cout, Cin) @ (Cin, H*W): lane-dense 256-wide MXU output.
            acc = acc + jnp.dot(w_all[t], tap.astype(mxu_dtype),
                                preferred_element_type=jnp.float32)

    # Lane-dense store: a (Cout, H*W) slab with H*W a multiple of 128.
    # NOTE: the conv bias is intentionally omitted -- training-mode BatchNorm
    # subtracts the batch mean, so it cancels exactly.
    y_ref[0] = acc.astype(y_ref.dtype)
    # Per-batch-element partial BN statistics (reduced over N in the wrapper;
    # per-n partials keep the batch grid axis fully "parallel").
    sum_ref[0] = jnp.sum(acc, axis=1, keepdims=True)        # (Cout, 1)
    sq_ref[0] = jnp.sum(acc * acc, axis=1, keepdims=True)   # (Cout, 1)


def conv_bn_stats(x_flat, w_k, tap_mask, in_scale, in_bias, *,
                  H, W, KH, KW, apply_input_act, mxu_dtype, out_dtype):
    """x_flat: (N, Cin, H*W); w_k: (KH*KW, Cout, Cin); tap_mask: (KH*KW, H*W)."""
    N, Cin, HW = x_flat.shape
    KK, Cout, _ = w_k.shape
    kern = functools.partial(
        _conv_bn_stats_kernel, H=H, W=W, KH=KH, KW=KW, Cin=Cin, Cout=Cout,
        apply_input_act=apply_input_act, mxu_dtype=mxu_dtype)
    return pl.pallas_call(
        kern,
        out_shape=(jax.ShapeDtypeStruct((N, Cout, HW), out_dtype),
                   jax.ShapeDtypeStruct((N, Cout, 1), jnp.float32),
                   jax.ShapeDtypeStruct((N, Cout, 1), jnp.float32)),
        grid=(N,),
        in_specs=[
            pl.BlockSpec((1, Cin, HW), lambda n: (n, 0, 0)),
            pl.BlockSpec((KK, Cout, Cin), lambda n: (0, 0, 0)),
            pl.BlockSpec((KK, HW), lambda n: (0, 0)),
            pl.BlockSpec((Cin, 1), lambda n: (0, 0)),
            pl.BlockSpec((Cin, 1), lambda n: (0, 0)),
        ],
        out_specs=(
            pl.BlockSpec((1, Cout, HW), lambda n: (n, 0, 0)),
            pl.BlockSpec((1, Cout, 1), lambda n: (n, 0, 0)),
            pl.BlockSpec((1, Cout, 1), lambda n: (n, 0, 0)),
        ),
        compiler_params=pltpu.CompilerParams(
            dimension_semantics=("parallel",),
            vmem_limit_bytes=32 * 1024 * 1024),
    )(x_flat, w_k, tap_mask, in_scale, in_bias)


# ----------------------------------------------------------------------------
# Kernel 2: final folded-BN affine + ReLU (only needed once, after the last
# conv layer of the block), lane-dense (C, H*W) elementwise pass.
# ----------------------------------------------------------------------------
def _affine_relu_kernel(y_ref, s_ref, b_ref, o_ref):
    y = y_ref[0].astype(jnp.float32)                        # (C, H*W)
    o_ref[0] = jnp.maximum(y * s_ref[...] + b_ref[...], 0.0).astype(o_ref.dtype)


def affine_relu(y_flat, scale, bias):
    N, C, HW = y_flat.shape
    return pl.pallas_call(
        _affine_relu_kernel,
        out_shape=jax.ShapeDtypeStruct((N, C, HW), jnp.float32),
        grid=(N,),
        in_specs=[
            pl.BlockSpec((1, C, HW), lambda n: (n, 0, 0)),
            pl.BlockSpec((C, 1), lambda n: (0, 0)),
            pl.BlockSpec((C, 1), lambda n: (0, 0)),
        ],
        out_specs=pl.BlockSpec((1, C, HW), lambda n: (n, 0, 0)),
        compiler_params=pltpu.CompilerParams(
            dimension_semantics=("parallel",),
            vmem_limit_bytes=32 * 1024 * 1024),
    )(y_flat, scale, bias)


# ----------------------------------------------------------------------------
# Host-side helpers.
# ----------------------------------------------------------------------------
def _tap_masks(H, W, KH, KW):
    """(KH*KW, H*W) 0/1 validity masks for each conv tap on the flat image."""
    ph, pw = KH // 2, KW // 2
    idx = jnp.arange(H * W, dtype=jnp.int32)
    r, c = idx // W, idx % W
    rows = []
    for dy in range(KH):
        for dx in range(KW):
            oy, ox = dy - ph, dx - pw
            ok = (r + oy >= 0) & (r + oy < H) & (c + ox >= 0) & (c + ox < W)
            rows.append(ok)
    return jnp.stack(rows, axis=0).astype(jnp.float32)


# ----------------------------------------------------------------------------
# BasicBlock forward: (conv -> BN(train) -> ReLU) x 2, NCHW in / NCHW out.
# ----------------------------------------------------------------------------
@functools.partial(jax.jit, static_argnames=("use_bf16",))
def basic_block_forward(x_nchw, params, eps=1e-5, use_bf16=False):
    N, C0, H, W = x_nchw.shape
    HW = H * W
    mxu_dtype = jnp.bfloat16 if use_bf16 else jnp.float32   # MXU operands
    act_dtype = jnp.bfloat16 if use_bf16 else jnp.float32   # inter-layer HBM

    x = x_nchw.reshape(N, C0, HW).astype(jnp.float32)       # NCHW, flattened
    scale = jnp.ones((C0, 1), jnp.float32)                  # unused on layer 1
    bias = jnp.zeros((C0, 1), jnp.float32)
    apply_act = False
    for i in (1, 2):
        w = params[f"conv{i}_w"]                            # (KH, KW, Cin, Cout)
        gamma = params[f"bn{i}_gamma"]
        beta = params[f"bn{i}_beta"]
        KH, KW, cin, cout = w.shape
        # conv bias (params[f"conv{i}_b"]) is NOT used: exactly cancelled by
        # training-mode BatchNorm's mean subtraction.
        w_k = jnp.transpose(w, (0, 1, 3, 2)).reshape(KH * KW, cout, cin)
        w_k = w_k.astype(mxu_dtype)
        tap_mask = _tap_masks(H, W, KH, KW)

        y, psum, psq = conv_bn_stats(
            x, w_k, tap_mask, scale, bias,
            H=H, W=W, KH=KH, KW=KW,
            apply_input_act=apply_act, mxu_dtype=mxu_dtype, out_dtype=act_dtype)

        # Finalize training-mode BatchNorm (biased batch variance) and fold
        # gamma/beta into a single per-channel affine.  fp32 throughout.
        cnt = N * HW
        mean = jnp.sum(psum, axis=0)[:, 0] / cnt
        var = jnp.sum(psq, axis=0)[:, 0] / cnt - mean * mean
        s = gamma * jax.lax.rsqrt(var + eps)
        scale = s.reshape(cout, 1)
        bias = (beta - mean * s).reshape(cout, 1)
        apply_act = True
        x = y                                               # fused into next conv

    out = affine_relu(x, scale, bias)                       # last layer's BN+ReLU
    return out.reshape(N, out.shape[1], H, W)


# ----------------------------------------------------------------------------
# Pure-JAX reference (correctness check only; keeps the conv bias to show the
# bias-drop is exact under training-mode BatchNorm).
# ----------------------------------------------------------------------------
def ref_forward(x_nchw, params, eps=1e-5):
    x = x_nchw.astype(jnp.float32)
    for i in (1, 2):
        w = params[f"conv{i}_w"]                            # HWIO
        b = params[f"conv{i}_b"]
        g = params[f"bn{i}_gamma"]
        be = params[f"bn{i}_beta"]
        y = jax.lax.conv_general_dilated(
            x, w, window_strides=(1, 1), padding="SAME",
            dimension_numbers=("NCHW", "HWIO", "NCHW"))
        y = y + b[None, :, None, None]
        mean = jnp.mean(y, axis=(0, 2, 3))
        var = jnp.var(y, axis=(0, 2, 3))
        yn = (y - mean[None, :, None, None]) * jax.lax.rsqrt(
            var[None, :, None, None] + eps)
        x = jnp.maximum(yn * g[None, :, None, None] + be[None, :, None, None], 0.0)
    return x


def init_params(key, in_channels, out_channels, k1=3, k2=3):
    ks = jax.random.split(key, 8)

    def conv_init(k, kh, kw, cin, cout):
        bound = 1.0 / jnp.sqrt(cin * kh * kw)
        return jax.random.uniform(k, (kh, kw, cin, cout), jnp.float32,
                                  -bound, bound)

    return {
        "conv1_w": conv_init(ks[0], k1, k1, in_channels, out_channels),
        "conv1_b": jax.random.uniform(ks[1], (out_channels,), jnp.float32, -0.1, 0.1),
        "bn1_gamma": 1.0 + 0.1 * jax.random.normal(ks[2], (out_channels,), jnp.float32),
        "bn1_beta": 0.05 * jax.random.normal(ks[3], (out_channels,), jnp.float32),
        "conv2_w": conv_init(ks[4], k2, k2, out_channels, out_channels),
        "conv2_b": jax.random.uniform(ks[5], (out_channels,), jnp.float32, -0.1, 0.1),
        "bn2_gamma": 1.0 + 0.1 * jax.random.normal(ks[6], (out_channels,), jnp.float32),
        "bn2_beta": 0.05 * jax.random.normal(ks[7], (out_channels,), jnp.float32),
    }


if __name__ == "__main__":
    key = jax.random.PRNGKey(0)
    k_x, k_p = jax.random.split(key)

    N, Cin, H, W = 2, 4, 16, 16
    Cout = 8
    x = jax.random.normal(k_x, (N, Cin, H, W), jnp.float32)
    params = init_params(k_p, Cin, Cout)

    # fp32 path (strict check against the fp32 reference).
    out = jax.block_until_ready(basic_block_forward(x, params))
    assert out.shape == (N, Cout, H, W), out.shape
    ref = jax.block_until_ready(ref_forward(x, params))
    err = float(jnp.max(jnp.abs(out - ref)))
    assert jnp.allclose(out, ref, atol=2e-3, rtol=2e-3), err

    # bf16 MXU / bf16 inter-layer activation path (fp32 accumulation & stats).
    out_bf16 = jax.block_until_ready(basic_block_forward(x, params, use_bf16=True))
    err_bf16 = float(jnp.max(jnp.abs(out_bf16 - ref)))
    assert jnp.allclose(out_bf16, ref, atol=5e-2, rtol=5e-2), err_bf16

    print("KERNEL_OK")
</pallas_src>

<mosaic_0001>
module attributes {stable_mosaic.version = 11 : i64} {
  func.func @_conv_bn_stats_kernel(%arg0: i32, %arg1: memref<1x4x256xf32, #tpu.memory_space<vmem>>, %arg2: memref<9x8x4xf32, #tpu.memory_space<vmem>>, %arg3: memref<9x256xf32, #tpu.memory_space<vmem>>, %arg4: memref<4x1xf32, #tpu.memory_space<vmem>>, %arg5: memref<4x1xf32, #tpu.memory_space<vmem>>, %arg6: memref<1x8x256xf32, #tpu.memory_space<vmem>>, %arg7: memref<1x8x1xf32, #tpu.memory_space<vmem>>, %arg8: memref<1x8x1xf32, #tpu.memory_space<vmem>>) attributes {dimension_semantics = [#tpu.dimension_semantics<parallel>], iteration_bounds = array<i64: 2>, scalar_prefetch = 0 : i64, scratch_operands = 0 : i64, tpu.core_type = #tpu.core_type<tc>, window_params = [{transform_indices = @transform_0, window_bounds = array<i64: 1, 4, 256>}, {pipeline_mode = #tpu.pipeline_mode<synchronous>, transform_indices = @transform_1, window_bounds = array<i64: 9, 8, 4>}, {pipeline_mode = #tpu.pipeline_mode<synchronous>, transform_indices = @transform_2, window_bounds = array<i64: 9, 256>}, {pipeline_mode = #tpu.pipeline_mode<synchronous>, transform_indices = @transform_3, window_bounds = array<i64: 4, 1>}, {pipeline_mode = #tpu.pipeline_mode<synchronous>, transform_indices = @transform_4, window_bounds = array<i64: 4, 1>}, {transform_indices = @transform_5, window_bounds = array<i64: 1, 8, 256>}, {transform_indices = @transform_6, window_bounds = array<i64: 1, 8, 1>}, {transform_indices = @transform_7, window_bounds = array<i64: 1, 8, 1>}]} {
    %c0 = arith.constant 0 : index
    %c0_0 = arith.constant 0 : index
    %c0_1 = arith.constant 0 : index
    %0 = vector.load %arg1[%c0, %c0_0, %c0_1] : memref<1x4x256xf32, #tpu.memory_space<vmem>>, vector<1x4x256xf32>
    %1 = vector.shape_cast %0 : vector<1x4x256xf32> to vector<4x256xf32>
    %cst = arith.constant 0.000000e+00 : f32
    %2 = vector.broadcast %cst : f32 to vector<4x17xf32>
    %3 = tpu.concatenate %2, %1, %2 in 1 : vector<4x17xf32>, vector<4x256xf32>, vector<4x17xf32> -> vector<4x290xf32>
    %c0_2 = arith.constant 0 : index
    %c0_3 = arith.constant 0 : index
    %4 = vector.load %arg3[%c0_2, %c0_3] : memref<9x256xf32, #tpu.memory_space<vmem>>, vector<9x256xf32>
    %c0_4 = arith.constant 0 : index
    %c0_5 = arith.constant 0 : index
    %c0_6 = arith.constant 0 : index
    %5 = vector.load %arg2[%c0_4, %c0_5, %c0_6] : memref<9x8x4xf32, #tpu.memory_space<vmem>>, vector<9x8x4xf32>
    %cst_7 = arith.constant 0.000000e+00 : f32
    %6 = vector.broadcast %cst_7 : f32 to vector<8x256xf32>
    %7 = vector.extract_strided_slice %3 {offsets = [0, 0], sizes = [4, 256], strides = [1, 1]} : vector<4x290xf32> to vector<4x256xf32>
    %8 = vector.extract_strided_slice %4 {offsets = [0, 0], sizes = [1, 256], strides = [1, 1]} : vector<9x256xf32> to vector<1x256xf32>
    %9 = vector.broadcast %8 : vector<1x256xf32> to vector<4x256xf32>
    %10 = arith.mulf %7, %9 : vector<4x256xf32>
    %11 = vector.extract_strided_slice %5 {offsets = [0, 0, 0], sizes = [1, 8, 4], strides = [1, 1, 1]} : vector<9x8x4xf32> to vector<1x8x4xf32>
    %12 = vector.shape_cast %11 : vector<1x8x4xf32> to vector<8x4xf32>
    %cst_8 = arith.constant dense<0.000000e+00> : vector<8x256xf32>
    %13 = tpu.matmul %12, %10, %cst_8 {dimension_numbers = #tpu.dot_dimension_numbers<[1], [0], [0], [1], [0, 0, 1, 1], [], []>} : vector<8x4xf32>, vector<4x256xf32>, vector<8x256xf32> -> vector<8x256xf32>
    %14 = arith.addf %6, %13 : vector<8x256xf32>
    %15 = vector.extract_strided_slice %3 {offsets = [0, 1], sizes = [4, 256], strides = [1, 1]} : vector<4x290xf32> to vector<4x256xf32>
    %16 = vector.extract_strided_slice %4 {offsets = [1, 0], sizes = [1, 256], strides = [1, 1]} : vector<9x256xf32> to vector<1x256xf32>
    %17 = vector.broadcast %16 : vector<1x256xf32> to vector<4x256xf32>
    %18 = arith.mulf %15, %17 : vector<4x256xf32>
    %19 = vector.extract_strided_slice %5 {offsets = [1, 0, 0], sizes = [1, 8, 4], strides = [1, 1, 1]} : vector<9x8x4xf32> to vector<1x8x4xf32>
    %20 = vector.shape_cast %19 : vector<1x8x4xf32> to vector<8x4xf32>
    %cst_9 = arith.constant dense<0.000000e+00> : vector<8x256xf32>
    %21 = tpu.matmul %20, %18, %cst_9 {dimension_numbers = #tpu.dot_dimension_numbers<[1], [0], [0], [1], [0, 0, 1, 1], [], []>} : vector<8x4xf32>, vector<4x256xf32>, vector<8x256xf32> -> vector<8x256xf32>
    %22 = arith.addf %14, %21 : vector<8x256xf32>
    %23 = vector.extract_strided_slice %3 {offsets = [0, 2], sizes = [4, 256], strides = [1, 1]} : vector<4x290xf32> to vector<4x256xf32>
    %24 = vector.extract_strided_slice %4 {offsets = [2, 0], sizes = [1, 256], strides = [1, 1]} : vector<9x256xf32> to vector<1x256xf32>
    %25 = vector.broadcast %24 : vector<1x256xf32> to vector<4x256xf32>
    %26 = arith.mulf %23, %25 : vector<4x256xf32>
    %27 = vector.extract_strided_slice %5 {offsets = [2, 0, 0], sizes = [1, 8, 4], strides = [1, 1, 1]} : vector<9x8x4xf32> to vector<1x8x4xf32>
    %28 = vector.shape_cast %27 : vector<1x8x4xf32> to vector<8x4xf32>
    %cst_10 = arith.constant dense<0.000000e+00> : vector<8x256xf32>
    %29 = tpu.matmul %28, %26, %cst_10 {dimension_numbers = #tpu.dot_dimension_numbers<[1], [0], [0], [1], [0, 0, 1, 1], [], []>} : vector<8x4xf32>, vector<4x256xf32>, vector<8x256xf32> -> vector<8x256xf32>
    %30 = arith.addf %22, %29 : vector<8x256xf32>
    %31 = vector.extract_strided_slice %3 {offsets = [0, 16], sizes = [4, 256], strides = [1, 1]} : vector<4x290xf32> to vector<4x256xf32>
    %32 = vector.extract_strided_slice %4 {offsets = [3, 0], sizes = [1, 256], strides = [1, 1]} : vector<9x256xf32> to vector<1x256xf32>
    %33 = vector.broadcast %32 : vector<1x256xf32> to vector<4x256xf32>
    %34 = arith.mulf %31, %33 : vector<4x256xf32>
    %35 = vector.extract_strided_slice %5 {offsets = [3, 0, 0], sizes = [1, 8, 4], strides = [1, 1, 1]} : vector<9x8x4xf32> to vector<1x8x4xf32>
    %36 = vector.shape_cast %35 : vector<1x8x4xf32> to vector<8x4xf32>
    %cst_11 = arith.constant dense<0.000000e+00> : vector<8x256xf32>
    %37 = tpu.matmul %36, %34, %cst_11 {dimension_numbers = #tpu.dot_dimension_numbers<[1], [0], [0], [1], [0, 0, 1, 1], [], []>} : vector<8x4xf32>, vector<4x256xf32>, vector<8x256xf32> -> vector<8x256xf32>
    %38 = arith.addf %30, %37 : vector<8x256xf32>
    %39 = vector.extract_strided_slice %3 {offsets = [0, 17], sizes = [4, 256], strides = [1, 1]} : vector<4x290xf32> to vector<4x256xf32>
    %40 = vector.extract_strided_slice %4 {offsets = [4, 0], sizes = [1, 256], strides = [1, 1]} : vector<9x256xf32> to vector<1x256xf32>
    %41 = vector.broadcast %40 : vector<1x256xf32> to vector<4x256xf32>
    %42 = arith.mulf %39, %41 : vector<4x256xf32>
    %43 = vector.extract_strided_slice %5 {offsets = [4, 0, 0], sizes = [1, 8, 4], strides = [1, 1, 1]} : vector<9x8x4xf32> to vector<1x8x4xf32>
    %44 = vector.shape_cast %43 : vector<1x8x4xf32> to vector<8x4xf32>
    %cst_12 = arith.constant dense<0.000000e+00> : vector<8x256xf32>
    %45 = tpu.matmul %44, %42, %cst_12 {dimension_numbers = #tpu.dot_dimension_numbers<[1], [0], [0], [1], [0, 0, 1, 1], [], []>} : vector<8x4xf32>, vector<4x256xf32>, vector<8x256xf32> -> vector<8x256xf32>
    %46 = arith.addf %38, %45 : vector<8x256xf32>
    %47 = vector.extract_strided_slice %3 {offsets = [0, 18], sizes = [4, 256], strides = [1, 1]} : vector<4x290xf32> to vector<4x256xf32>
    %48 = vector.extract_strided_slice %4 {offsets = [5, 0], sizes = [1, 256], strides = [1, 1]} : vector<9x256xf32> to vector<1x256xf32>
    %49 = vector.broadcast %48 : vector<1x256xf32> to vector<4x256xf32>
    %50 = arith.mulf %47, %49 : vector<4x256xf32>
    %51 = vector.extract_strided_slice %5 {offsets = [5, 0, 0], sizes = [1, 8, 4], strides = [1, 1, 1]} : vector<9x8x4xf32> to vector<1x8x4xf32>
    %52 = vector.shape_cast %51 : vector<1x8x4xf32> to vector<8x4xf32>
    %cst_13 = arith.constant dense<0.000000e+00> : vector<8x256xf32>
    %53 = tpu.matmul %52, %50, %cst_13 {dimension_numbers = #tpu.dot_dimension_numbers<[1], [0], [0], [1], [0, 0, 1, 1], [], []>} : vector<8x4xf32>, vector<4x256xf32>, vector<8x256xf32> -> vector<8x256xf32>
    %54 = arith.addf %46, %53 : vector<8x256xf32>
    %55 = vector.extract_strided_slice %3 {offsets = [0, 32], sizes = [4, 256], strides = [1, 1]} : vector<4x290xf32> to vector<4x256xf32>
    %56 = vector.extract_strided_slice %4 {offsets = [6, 0], sizes = [1, 256], strides = [1, 1]} : vector<9x256xf32> to vector<1x256xf32>
    %57 = vector.broadcast %56 : vector<1x256xf32> to vector<4x256xf32>
    %58 = arith.mulf %55, %57 : vector<4x256xf32>
    %59 = vector.extract_strided_slice %5 {offsets = [6, 0, 0], sizes = [1, 8, 4], strides = [1, 1, 1]} : vector<9x8x4xf32> to vector<1x8x4xf32>
    %60 = vector.shape_cast %59 : vector<1x8x4xf32> to vector<8x4xf32>
    %cst_14 = arith.constant dense<0.000000e+00> : vector<8x256xf32>
    %61 = tpu.matmul %60, %58, %cst_14 {dimension_numbers = #tpu.dot_dimension_numbers<[1], [0], [0], [1], [0, 0, 1, 1], [], []>} : vector<8x4xf32>, vector<4x256xf32>, vector<8x256xf32> -> vector<8x256xf32>
    %62 = arith.addf %54, %61 : vector<8x256xf32>
    %63 = vector.extract_strided_slice %3 {offsets = [0, 33], sizes = [4, 256], strides = [1, 1]} : vector<4x290xf32> to vector<4x256xf32>
    %64 = vector.extract_strided_slice %4 {offsets = [7, 0], sizes = [1, 256], strides = [1, 1]} : vector<9x256xf32> to vector<1x256xf32>
    %65 = vector.broadcast %64 : vector<1x256xf32> to vector<4x256xf32>
    %66 = arith.mulf %63, %65 : vector<4x256xf32>
    %67 = vector.extract_strided_slice %5 {offsets = [7, 0, 0], sizes = [1, 8, 4], strides = [1, 1, 1]} : vector<9x8x4xf32> to vector<1x8x4xf32>
    %68 = vector.shape_cast %67 : vector<1x8x4xf32> to vector<8x4xf32>
    %cst_15 = arith.constant dense<0.000000e+00> : vector<8x256xf32>
    %69 = tpu.matmul %68, %66, %cst_15 {dimension_numbers = #tpu.dot_dimension_numbers<[1], [0], [0], [1], [0, 0, 1, 1], [], []>} : vector<8x4xf32>, vector<4x256xf32>, vector<8x256xf32> -> vector<8x256xf32>
    %70 = arith.addf %62, %69 : vector<8x256xf32>
    %71 = vector.extract_strided_slice %3 {offsets = [0, 34], sizes = [4, 256], strides = [1, 1]} : vector<4x290xf32> to vector<4x256xf32>
    %72 = vector.extract_strided_slice %4 {offsets = [8, 0], sizes = [1, 256], strides = [1, 1]} : vector<9x256xf32> to vector<1x256xf32>
    %73 = vector.broadcast %72 : vector<1x256xf32> to vector<4x256xf32>
    %74 = arith.mulf %71, %73 : vector<4x256xf32>
    %75 = vector.extract_strided_slice %5 {offsets = [8, 0, 0], sizes = [1, 8, 4], strides = [1, 1, 1]} : vector<9x8x4xf32> to vector<1x8x4xf32>
    %76 = vector.shape_cast %75 : vector<1x8x4xf32> to vector<8x4xf32>
    %cst_16 = arith.constant dense<0.000000e+00> : vector<8x256xf32>
    %77 = tpu.matmul %76, %74, %cst_16 {dimension_numbers = #tpu.dot_dimension_numbers<[1], [0], [0], [1], [0, 0, 1, 1], [], []>} : vector<8x4xf32>, vector<4x256xf32>, vector<8x256xf32> -> vector<8x256xf32>
    %78 = arith.addf %70, %77 : vector<8x256xf32>
    %c0_17 = arith.constant 0 : index
    %c0_18 = arith.constant 0 : index
    %c0_19 = arith.constant 0 : index
    %79 = vector.load %arg6[%c0_17, %c0_18, %c0_19] : memref<1x8x256xf32, #tpu.memory_space<vmem>>, vector<1x8x256xf32>
    %80 = vector.shape_cast %79 : vector<1x8x256xf32> to vector<8x256xf32>
    %81 = vector.shape_cast %78 : vector<8x256xf32> to vector<1x8x256xf32>
    tpu.vector_store %arg6[%c0_17, %c0_18, %c0_19], %81 {strides = array<i32>} : memref<1x8x256xf32, #tpu.memory_space<vmem>>, vector<1x8x256xf32>,
    %cst_20 = arith.constant dense<0.000000e+00> : vector<8xf32>
    %82 = vector.multi_reduction <add>, %78, %cst_20 [1] : vector<8x256xf32> to vector<8xf32>
    %83 = vector.shape_cast %82 : vector<8xf32> to vector<8x1xf32>
    %c0_21 = arith.constant 0 : index
    %c0_22 = arith.constant 0 : index
    %c0_23 = arith.constant 0 : index
    %84 = vector.load %arg7[%c0_21, %c0_22, %c0_23] : memref<1x8x1xf32, #tpu.memory_space<vmem>>, vector<1x8x1xf32>
    %85 = vector.shape_cast %84 : vector<1x8x1xf32> to vector<8x1xf32>
    %86 = vector.shape_cast %83 : vector<8x1xf32> to vector<1x8x1xf32>
    tpu.vector_store %arg7[%c0_21, %c0_22, %c0_23], %86 {strides = array<i32>} : memref<1x8x1xf32, #tpu.memory_space<vmem>>, vector<1x8x1xf32>,
    %87 = arith.mulf %78, %78 : vector<8x256xf32>
    %cst_24 = arith.constant dense<0.000000e+00> : vector<8xf32>
    %88 = vector.multi_reduction <add>, %87, %cst_24 [1] : vector<8x256xf32> to vector<8xf32>
    %89 = vector.shape_cast %88 : vector<8xf32> to vector<8x1xf32>
    %c0_25 = arith.constant 0 : index
    %c0_26 = arith.constant 0 : index
    %c0_27 = arith.constant 0 : index
    %90 = vector.load %arg8[%c0_25, %c0_26, %c0_27] : memref<1x8x1xf32, #tpu.memory_space<vmem>>, vector<1x8x1xf32>
    %91 = vector.shape_cast %90 : vector<1x8x1xf32> to vector<8x1xf32>
    %92 = vector.shape_cast %89 : vector<8x1xf32> to vector<1x8x1xf32>
    tpu.vector_store %arg8[%c0_25, %c0_26, %c0_27], %92 {strides = array<i32>} : memref<1x8x1xf32, #tpu.memory_space<vmem>>, vector<1x8x1xf32>,
    return
  }
  func.func @transform_0(%arg0: i32) -> (i32, i32, i32) {
    %c0_i32 = arith.constant 0 : i32
    %c0_i32_0 = arith.constant 0 : i32
    %c0_i32_1 = arith.constant 0 : i32
    return %arg0, %c0_i32, %c0_i32_0 : i32, i32, i32
  }
  func.func @transform_1(%arg0: i32) -> (i32, i32, i32) {
    %c0_i32 = arith.constant 0 : i32
    %c0_i32_0 = arith.constant 0 : i32
    %c0_i32_1 = arith.constant 0 : i32
    %c0_i32_2 = arith.constant 0 : i32
    return %c0_i32, %c0_i32_0, %c0_i32_1 : i32, i32, i32
  }
  func.func @transform_2(%arg0: i32) -> (i32, i32) {
    %c0_i32 = arith.constant 0 : i32
    %c0_i32_0 = arith.constant 0 : i32
    %c0_i32_1 = arith.constant 0 : i32
    return %c0_i32, %c0_i32_0 : i32, i32
  }
  func.func @transform_3(%arg0: i32) -> (i32, i32) {
    %c0_i32 = arith.constant 0 : i32
    %c0_i32_0 = arith.constant 0 : i32
    %c0_i32_1 = arith.constant 0 : i32
    return %c0_i32, %c0_i32_0 : i32, i32
  }
  func.func @transform_4(%arg0: i32) -> (i32, i32) {
    %c0_i32 = arith.constant 0 : i32
    %c0_i32_0 = arith.constant 0 : i32
    %c0_i32_1 = arith.constant 0 : i32
    return %c0_i32, %c0_i32_0 : i32, i32
  }
  func.func @transform_5(%arg0: i32) -> (i32, i32, i32) {
    %c0_i32 = arith.constant 0 : i32
    %c0_i32_0 = arith.constant 0 : i32
    %c0_i32_1 = arith.constant 0 : i32
    return %arg0, %c0_i32, %c0_i32_0 : i32, i32, i32
  }
  func.func @transform_6(%arg0: i32) -> (i32, i32, i32) {
    %c0_i32 = arith.constant 0 : i32
    %c0_i32_0 = arith.constant 0 : i32
    %c0_i32_1 = arith.constant 0 : i32
    return %arg0, %c0_i32, %c0_i32_0 : i32, i32, i32
  }
  func.func @transform_7(%arg0: i32) -> (i32, i32, i32) {
    %c0_i32 = arith.constant 0 : i32
    %c0_i32_0 = arith.constant 0 : i32
    %c0_i32_1 = arith.constant 0 : i32
    return %arg0, %c0_i32, %c0_i32_0 : i32, i32, i32
  }
}

module attributes {stable_mosaic.version = 11 : i64} {
  func.func @_conv_bn_stats_kernel(%arg0: i32, %arg1: memref<1x8x256xf32, #tpu.memory_space<vmem>>, %arg2: memref<9x8x8xf32, #tpu.memory_space<vmem>>, %arg3: memref<9x256xf32, #tpu.memory_space<vmem>>, %arg4: memref<8x1xf32, #tpu.memory_space<vmem>>, %arg5: memref<8x1xf32, #tpu.memory_space<vmem>>, %arg6: memref<1x8x256xf32, #tpu.memory_space<vmem>>, %arg7: memref<1x8x1xf32, #tpu.memory_space<vmem>>, %arg8: memref<1x8x1xf32, #tpu.memory_space<vmem>>) attributes {dimension_semantics = [#tpu.dimension_semantics<parallel>], iteration_bounds = array<i64: 2>, scalar_prefetch = 0 : i64, scratch_operands = 0 : i64, tpu.core_type = #tpu.core_type<tc>, window_params = [{transform_indices = @transform_0, window_bounds = array<i64: 1, 8, 256>}, {pipeline_mode = #tpu.pipeline_mode<synchronous>, transform_indices = @transform_1, window_bounds = array<i64: 9, 8, 8>}, {pipeline_mode = #tpu.pipeline_mode<synchronous>, transform_indices = @transform_2, window_bounds = array<i64: 9, 256>}, {pipeline_mode = #tpu.pipeline_mode<synchronous>, transform_indices = @transform_3, window_bounds = array<i64: 8, 1>}, {pipeline_mode = #tpu.pipeline_mode<synchronous>, transform_indices = @transform_4, window_bounds = array<i64: 8, 1>}, {transform_indices = @transform_5, window_bounds = array<i64: 1, 8, 256>}, {transform_indices = @transform_6, window_bounds = array<i64: 1, 8, 1>}, {transform_indices = @transform_7, window_bounds = array<i64: 1, 8, 1>}]} {
    %c0 = arith.constant 0 : index
    %c0_0 = arith.constant 0 : index
    %c0_1 = arith.constant 0 : index
    %0 = vector.load %arg1[%c0, %c0_0, %c0_1] : memref<1x8x256xf32, #tpu.memory_space<vmem>>, vector<1x8x256xf32>
    %1 = vector.shape_cast %0 : vector<1x8x256xf32> to vector<8x256xf32>
    %c0_2 = arith.constant 0 : index
    %c0_3 = arith.constant 0 : index
    %2 = vector.load %arg4[%c0_2, %c0_3] : memref<8x1xf32, #tpu.memory_space<vmem>>, vector<8x1xf32>
    %3 = vector.broadcast %2 : vector<8x1xf32> to vector<8x256xf32>
    %4 = arith.mulf %1, %3 : vector<8x256xf32>
    %c0_4 = arith.constant 0 : index
    %c0_5 = arith.constant 0 : index
    %5 = vector.load %arg5[%c0_4, %c0_5] : memref<8x1xf32, #tpu.memory_space<vmem>>, vector<8x1xf32>
    %6 = vector.broadcast %5 : vector<8x1xf32> to vector<8x256xf32>
    %7 = arith.addf %4, %6 : vector<8x256xf32>
    %cst = arith.constant 0.000000e+00 : f32
    %8 = vector.broadcast %cst : f32 to vector<8x256xf32>
    %9 = arith.maximumf %7, %8 : vector<8x256xf32>
    %cst_6 = arith.constant 0.000000e+00 : f32
    %10 = vector.broadcast %cst_6 : f32 to vector<8x17xf32>
    %11 = tpu.concatenate %10, %9, %10 in 1 : vector<8x17xf32>, vector<8x256xf32>, vector<8x17xf32> -> vector<8x290xf32>
    %c0_7 = arith.constant 0 : index
    %c0_8 = arith.constant 0 : index
    %12 = vector.load %arg3[%c0_7, %c0_8] : memref<9x256xf32, #tpu.memory_space<vmem>>, vector<9x256xf32>
    %c0_9 = arith.constant 0 : index
    %c0_10 = arith.constant 0 : index
    %c0_11 = arith.constant 0 : index
    %13 = vector.load %arg2[%c0_9, %c0_10, %c0_11] : memref<9x8x8xf32, #tpu.memory_space<vmem>>, vector<9x8x8xf32>
    %cst_12 = arith.constant 0.000000e+00 : f32
    %14 = vector.broadcast %cst_12 : f32 to vector<8x256xf32>
    %15 = vector.extract_strided_slice %11 {offsets = [0, 0], sizes = [8, 256], strides = [1, 1]} : vector<8x290xf32> to vector<8x256xf32>
    %16 = vector.extract_strided_slice %12 {offsets = [0, 0], sizes = [1, 256], strides = [1, 1]} : vector<9x256xf32> to vector<1x256xf32>
    %17 = vector.broadcast %16 : vector<1x256xf32> to vector<8x256xf32>
    %18 = arith.mulf %15, %17 : vector<8x256xf32>
    %19 = vector.extract_strided_slice %13 {offsets = [0, 0, 0], sizes = [1, 8, 8], strides = [1, 1, 1]} : vector<9x8x8xf32> to vector<1x8x8xf32>
    %20 = vector.shape_cast %19 : vector<1x8x8xf32> to vector<8x8xf32>
    %cst_13 = arith.constant dense<0.000000e+00> : vector<8x256xf32>
    %21 = tpu.matmul %20, %18, %cst_13 {dimension_numbers = #tpu.dot_dimension_numbers<[1], [0], [0], [1], [0, 0, 1, 1], [], []>} : vector<8x8xf32>, vector<8x256xf32>, vector<8x256xf32> -> vector<8x256xf32>
    %22 = arith.addf %14, %21 : vector<8x256xf32>
    %23 = vector.extract_strided_slice %11 {offsets = [0, 1], sizes = [8, 256], strides = [1, 1]} : vector<8x290xf32> to vector<8x256xf32>
    %24 = vector.extract_strided_slice %12 {offsets = [1, 0], sizes = [1, 256], strides = [1, 1]} : vector<9x256xf32> to vector<1x256xf32>
    %25 = vector.broadcast %24 : vector<1x256xf32> to vector<8x256xf32>
    %26 = arith.mulf %23, %25 : vector<8x256xf32>
    %27 = vector.extract_strided_slice %13 {offsets = [1, 0, 0], sizes = [1, 8, 8], strides = [1, 1, 1]} : vector<9x8x8xf32> to vector<1x8x8xf32>
    %28 = vector.shape_cast %27 : vector<1x8x8xf32> to vector<8x8xf32>
    %cst_14 = arith.constant dense<0.000000e+00> : vector<8x256xf32>
    %29 = tpu.matmul %28, %26, %cst_14 {dimension_numbers = #tpu.dot_dimension_numbers<[1], [0], [0], [1], [0, 0, 1, 1], [], []>} : vector<8x8xf32>, vector<8x256xf32>, vector<8x256xf32> -> vector<8x256xf32>
    %30 = arith.addf %22, %29 : vector<8x256xf32>
    %31 = vector.extract_strided_slice %11 {offsets = [0, 2], sizes = [8, 256], strides = [1, 1]} : vector<8x290xf32> to vector<8x256xf32>
    %32 = vector.extract_strided_slice %12 {offsets = [2, 0], sizes = [1, 256], strides = [1, 1]} : vector<9x256xf32> to vector<1x256xf32>
    %33 = vector.broadcast %32 : vector<1x256xf32> to vector<8x256xf32>
    %34 = arith.mulf %31, %33 : vector<8x256xf32>
    %35 = vector.extract_strided_slice %13 {offsets = [2, 0, 0], sizes = [1, 8, 8], strides = [1, 1, 1]} : vector<9x8x8xf32> to vector<1x8x8xf32>
    %36 = vector.shape_cast %35 : vector<1x8x8xf32> to vector<8x8xf32>
    %cst_15 = arith.constant dense<0.000000e+00> : vector<8x256xf32>
    %37 = tpu.matmul %36, %34, %cst_15 {dimension_numbers = #tpu.dot_dimension_numbers<[1], [0], [0], [1], [0, 0, 1, 1], [], []>} : vector<8x8xf32>, vector<8x256xf32>, vector<8x256xf32> -> vector<8x256xf32>
    %38 = arith.addf %30, %37 : vector<8x256xf32>
    %39 = vector.extract_strided_slice %11 {offsets = [0, 16], sizes = [8, 256], strides = [1, 1]} : vector<8x290xf32> to vector<8x256xf32>
    %40 = vector.extract_strided_slice %12 {offsets = [3, 0], sizes = [1, 256], strides = [1, 1]} : vector<9x256xf32> to vector<1x256xf32>
    %41 = vector.broadcast %40 : vector<1x256xf32> to vector<8x256xf32>
    %42 = arith.mulf %39, %41 : vector<8x256xf32>
    %43 = vector.extract_strided_slice %13 {offsets = [3, 0, 0], sizes = [1, 8, 8], strides = [1, 1, 1]} : vector<9x8x8xf32> to vector<1x8x8xf32>
    %44 = vector.shape_cast %43 : vector<1x8x8xf32> to vector<8x8xf32>
    %cst_16 = arith.constant dense<0.000000e+00> : vector<8x256xf32>
    %45 = tpu.matmul %44, %42, %cst_16 {dimension_numbers = #tpu.dot_dimension_numbers<[1], [0], [0], [1], [0, 0, 1, 1], [], []>} : vector<8x8xf32>, vector<8x256xf32>, vector<8x256xf32> -> vector<8x256xf32>
    %46 = arith.addf %38, %45 : vector<8x256xf32>
    %47 = vector.extract_strided_slice %11 {offsets = [0, 17], sizes = [8, 256], strides = [1, 1]} : vector<8x290xf32> to vector<8x256xf32>
    %48 = vector.extract_strided_slice %12 {offsets = [4, 0], sizes = [1, 256], strides = [1, 1]} : vector<9x256xf32> to vector<1x256xf32>
    %49 = vector.broadcast %48 : vector<1x256xf32> to vector<8x256xf32>
    %50 = arith.mulf %47, %49 : vector<8x256xf32>
    %51 = vector.extract_strided_slice %13 {offsets = [4, 0, 0], sizes = [1, 8, 8], strides = [1, 1, 1]} : vector<9x8x8xf32> to vector<1x8x8xf32>
    %52 = vector.shape_cast %51 : vector<1x8x8xf32> to vector<8x8xf32>
    %cst_17 = arith.constant dense<0.000000e+00> : vector<8x256xf32>
    %53 = tpu.matmul %52, %50, %cst_17 {dimension_numbers = #tpu.dot_dimension_numbers<[1], [0], [0], [1], [0, 0, 1, 1], [], []>} : vector<8x8xf32>, vector<8x256xf32>, vector<8x256xf32> -> vector<8x256xf32>
    %54 = arith.addf %46, %53 : vector<8x256xf32>
    %55 = vector.extract_strided_slice %11 {offsets = [0, 18], sizes = [8, 256], strides = [1, 1]} : vector<8x290xf32> to vector<8x256xf32>
    %56 = vector.extract_strided_slice %12 {offsets = [5, 0], sizes = [1, 256], strides = [1, 1]} : vector<9x256xf32> to vector<1x256xf32>
    %57 = vector.broadcast %56 : vector<1x256xf32> to vector<8x256xf32>
    %58 = arith.mulf %55, %57 : vector<8x256xf32>
    %59 = vector.extract_strided_slice %13 {offsets = [5, 0, 0], sizes = [1, 8, 8], strides = [1, 1, 1]} : vector<9x8x8xf32> to vector<1x8x8xf32>
    %60 = vector.shape_cast %59 : vector<1x8x8xf32> to vector<8x8xf32>
    %cst_18 = arith.constant dense<0.000000e+00> : vector<8x256xf32>
    %61 = tpu.matmul %60, %58, %cst_18 {dimension_numbers = #tpu.dot_dimension_numbers<[1], [0], [0], [1], [0, 0, 1, 1], [], []>} : vector<8x8xf32>, vector<8x256xf32>, vector<8x256xf32> -> vector<8x256xf32>
    %62 = arith.addf %54, %61 : vector<8x256xf32>
    %63 = vector.extract_strided_slice %11 {offsets = [0, 32], sizes = [8, 256], strides = [1, 1]} : vector<8x290xf32> to vector<8x256xf32>
    %64 = vector.extract_strided_slice %12 {offsets = [6, 0], sizes = [1, 256], strides = [1, 1]} : vector<9x256xf32> to vector<1x256xf32>
    %65 = vector.broadcast %64 : vector<1x256xf32> to vector<8x256xf32>
    %66 = arith.mulf %63, %65 : vector<8x256xf32>
    %67 = vector.extract_strided_slice %13 {offsets = [6, 0, 0], sizes = [1, 8, 8], strides = [1, 1, 1]} : vector<9x8x8xf32> to vector<1x8x8xf32>
    %68 = vector.shape_cast %67 : vector<1x8x8xf32> to vector<8x8xf32>
    %cst_19 = arith.constant dense<0.000000e+00> : vector<8x256xf32>
    %69 = tpu.matmul %68, %66, %cst_19 {dimension_numbers = #tpu.dot_dimension_numbers<[1], [0], [0], [1], [0, 0, 1, 1], [], []>} : vector<8x8xf32>, vector<8x256xf32>, vector<8x256xf32> -> vector<8x256xf32>
    %70 = arith.addf %62, %69 : vector<8x256xf32>
    %71 = vector.extract_strided_slice %11 {offsets = [0, 33], sizes = [8, 256], strides = [1, 1]} : vector<8x290xf32> to vector<8x256xf32>
    %72 = vector.extract_strided_slice %12 {offsets = [7, 0], sizes = [1, 256], strides = [1, 1]} : vector<9x256xf32> to vector<1x256xf32>
    %73 = vector.broadcast %72 : vector<1x256xf32> to vector<8x256xf32>
    %74 = arith.mulf %71, %73 : vector<8x256xf32>
    %75 = vector.extract_strided_slice %13 {offsets = [7, 0, 0], sizes = [1, 8, 8], strides = [1, 1, 1]} : vector<9x8x8xf32> to vector<1x8x8xf32>
    %76 = vector.shape_cast %75 : vector<1x8x8xf32> to vector<8x8xf32>
    %cst_20 = arith.constant dense<0.000000e+00> : vector<8x256xf32>
    %77 = tpu.matmul %76, %74, %cst_20 {dimension_numbers = #tpu.dot_dimension_numbers<[1], [0], [0], [1], [0, 0, 1, 1], [], []>} : vector<8x8xf32>, vector<8x256xf32>, vector<8x256xf32> -> vector<8x256xf32>
    %78 = arith.addf %70, %77 : vector<8x256xf32>
    %79 = vector.extract_strided_slice %11 {offsets = [0, 34], sizes = [8, 256], strides = [1, 1]} : vector<8x290xf32> to vector<8x256xf32>
    %80 = vector.extract_strided_slice %12 {offsets = [8, 0], sizes = [1, 256], strides = [1, 1]} : vector<9x256xf32> to vector<1x256xf32>
    %81 = vector.broadcast %80 : vector<1x256xf32> to vector<8x256xf32>
    %82 = arith.mulf %79, %81 : vector<8x256xf32>
    %83 = vector.extract_strided_slice %13 {offsets = [8, 0, 0], sizes = [1, 8, 8], strides = [1, 1, 1]} : vector<9x8x8xf32> to vector<1x8x8xf32>
    %84 = vector.shape_cast %83 : vector<1x8x8xf32> to vector<8x8xf32>
    %cst_21 = arith.constant dense<0.000000e+00> : vector<8x256xf32>
    %85 = tpu.matmul %84, %82, %cst_21 {dimension_numbers = #tpu.dot_dimension_numbers<[1], [0], [0], [1], [0, 0, 1, 1], [], []>} : vector<8x8xf32>, vector<8x256xf32>, vector<8x256xf32> -> vector<8x256xf32>
    %86 = arith.addf %78, %85 : vector<8x256xf32>
    %c0_22 = arith.constant 0 : index
    %c0_23 = arith.constant 0 : index
    %c0_24 = arith.constant 0 : index
    %87 = vector.load %arg6[%c0_22, %c0_23, %c0_24] : memref<1x8x256xf32, #tpu.memory_space<vmem>>, vector<1x8x256xf32>
    %88 = vector.shape_cast %87 : vector<1x8x256xf32> to vector<8x256xf32>
    %89 = vector.shape_cast %86 : vector<8x256xf32> to vector<1x8x256xf32>
    tpu.vector_store %arg6[%c0_22, %c0_23, %c0_24], %89 {strides = array<i32>} : memref<1x8x256xf32, #tpu.memory_space<vmem>>, vector<1x8x256xf32>,
    %cst_25 = arith.constant dense<0.000000e+00> : vector<8xf32>
    %90 = vector.multi_reduction <add>, %86, %cst_25 [1] : vector<8x256xf32> to vector<8xf32>
    %91 = vector.shape_cast %90 : vector<8xf32> to vector<8x1xf32>
    %c0_26 = arith.constant 0 : index
    %c0_27 = arith.constant 0 : index
    %c0_28 = arith.constant 0 : index
    %92 = vector.load %arg7[%c0_26, %c0_27, %c0_28] : memref<1x8x1xf32, #tpu.memory_space<vmem>>, vector<1x8x1xf32>
    %93 = vector.shape_cast %92 : vector<1x8x1xf32> to vector<8x1xf32>
    %94 = vector.shape_cast %91 : vector<8x1xf32> to vector<1x8x1xf32>
    tpu.vector_store %arg7[%c0_26, %c0_27, %c0_28], %94 {strides = array<i32>} : memref<1x8x1xf32, #tpu.memory_space<vmem>>, vector<1x8x1xf32>,
    %95 = arith.mulf %86, %86 : vector<8x256xf32>
    %cst_29 = arith.constant dense<0.000000e+00> : vector<8xf32>
    %96 = vector.multi_reduction <add>, %95, %cst_29 [1] : vector<8x256xf32> to vector<8xf32>
    %97 = vector.shape_cast %96 : vector<8xf32> to vector<8x1xf32>
    %c0_30 = arith.constant 0 : index
    %c0_31 = arith.constant 0 : index
    %c0_32 = arith.constant 0 : index
    %98 = vector.load %arg8[%c0_30, %c0_31, %c0_32] : memref<1x8x1xf32, #tpu.memory_space<vmem>>, vector<1x8x1xf32>
    %99 = vector.shape_cast %98 : vector<1x8x1xf32> to vector<8x1xf32>
    %100 = vector.shape_cast %97 : vector<8x1xf32> to vector<1x8x1xf32>
    tpu.vector_store %arg8[%c0_30, %c0_31, %c0_32], %100 {strides = array<i32>} : memref<1x8x1xf32, #tpu.memory_space<vmem>>, vector<1x8x1xf32>,
    return
  }
  func.func @transform_0(%arg0: i32) -> (i32, i32, i32) {
    %c0_i32 = arith.constant 0 : i32
    %c0_i32_0 = arith.constant 0 : i32
    %c0_i32_1 = arith.constant 0 : i32
    return %arg0, %c0_i32, %c0_i32_0 : i32, i32, i32
  }
  func.func @transform_1(%arg0: i32) -> (i32, i32, i32) {
    %c0_i32 = arith.constant 0 : i32
    %c0_i32_0 = arith.constant 0 : i32
    %c0_i32_1 = arith.constant 0 : i32
    %c0_i32_2 = arith.constant 0 : i32
    return %c0_i32, %c0_i32_0, %c0_i32_1 : i32, i32, i32
  }
  func.func @transform_2(%arg0: i32) -> (i32, i32) {
    %c0_i32 = arith.constant 0 : i32
    %c0_i32_0 = arith.constant 0 : i32
    %c0_i32_1 = arith.constant 0 : i32
    return %c0_i32, %c0_i32_0 : i32, i32
  }
  func.func @transform_3(%arg0: i32) -> (i32, i32) {
    %c0_i32 = arith.constant 0 : i32
    %c0_i32_0 = arith.constant 0 : i32
    %c0_i32_1 = arith.constant 0 : i32
    return %c0_i32, %c0_i32_0 : i32, i32
  }
  func.func @transform_4(%arg0: i32) -> (i32, i32) {
    %c0_i32 = arith.constant 0 : i32
    %c0_i32_0 = arith.constant 0 : i32
    %c0_i32_1 = arith.constant 0 : i32
    return %c0_i32, %c0_i32_0 : i32, i32
  }
  func.func @transform_5(%arg0: i32) -> (i32, i32, i32) {
    %c0_i32 = arith.constant 0 : i32
    %c0_i32_0 = arith.constant 0 : i32
    %c0_i32_1 = arith.constant 0 : i32
    return %arg0, %c0_i32, %c0_i32_0 : i32, i32, i32
  }
  func.func @transform_6(%arg0: i32) -> (i32, i32, i32) {
    %c0_i32 = arith.constant 0 : i32
    %c0_i32_0 = arith.constant 0 : i32
    %c0_i32_1 = arith.constant 0 : i32
    return %arg0, %c0_i32, %c0_i32_0 : i32, i32, i32
  }
  func.func @transform_7(%arg0: i32) -> (i32, i32, i32) {
    %c0_i32 = arith.constant 0 : i32
    %c0_i32_0 = arith.constant 0 : i32
    %c0_i32_1 = arith.constant 0 : i32
    return %arg0, %c0_i32, %c0_i32_0 : i32, i32, i32
  }
}

module attributes {stable_mosaic.version = 11 : i64} {
  func.func @_affine_relu_kernel(%arg0: i32, %arg1: memref<1x8x256xf32, #tpu.memory_space<vmem>>, %arg2: memref<8x1xf32, #tpu.memory_space<vmem>>, %arg3: memref<8x1xf32, #tpu.memory_space<vmem>>, %arg4: memref<1x8x256xf32, #tpu.memory_space<vmem>>) attributes {dimension_semantics = [#tpu.dimension_semantics<parallel>], iteration_bounds = array<i64: 2>, scalar_prefetch = 0 : i64, scratch_operands = 0 : i64, tpu.core_type = #tpu.core_type<tc>, window_params = [{transform_indices = @transform_0, window_bounds = array<i64: 1, 8, 256>}, {pipeline_mode = #tpu.pipeline_mode<synchronous>, transform_indices = @transform_1, window_bounds = array<i64: 8, 1>}, {pipeline_mode = #tpu.pipeline_mode<synchronous>, transform_indices = @transform_2, window_bounds = array<i64: 8, 1>}, {transform_indices = @transform_3, window_bounds = array<i64: 1, 8, 256>}]} {
    %c0 = arith.constant 0 : index
    %c0_0 = arith.constant 0 : index
    %c0_1 = arith.constant 0 : index
    %0 = vector.load %arg1[%c0, %c0_0, %c0_1] : memref<1x8x256xf32, #tpu.memory_space<vmem>>, vector<1x8x256xf32>
    %1 = vector.shape_cast %0 : vector<1x8x256xf32> to vector<8x256xf32>
    %c0_2 = arith.constant 0 : index
    %c0_3 = arith.constant 0 : index
    %2 = vector.load %arg2[%c0_2, %c0_3] : memref<8x1xf32, #tpu.memory_space<vmem>>, vector<8x1xf32>
    %3 = vector.broadcast %2 : vector<8x1xf32> to vector<8x256xf32>
    %4 = arith.mulf %1, %3 : vector<8x256xf32>
    %c0_4 = arith.constant 0 : index
    %c0_5 = arith.constant 0 : index
    %5 = vector.load %arg3[%c0_4, %c0_5] : memref<8x1xf32, #tpu.memory_space<vmem>>, vector<8x1xf32>
    %6 = vector.broadcast %5 : vector<8x1xf32> to vector<8x256xf32>
    %7 = arith.addf %4, %6 : vector<8x256xf32>
    %cst = arith.constant 0.000000e+00 : f32
    %8 = vector.broadcast %cst : f32 to vector<8x256xf32>
    %9 = arith.maximumf %7, %8 : vector<8x256xf32>
    %c0_6 = arith.constant 0 : index
    %c0_7 = arith.constant 0 : index
    %c0_8 = arith.constant 0 : index
    %10 = vector.load %arg4[%c0_6, %c0_7, %c0_8] : memref<1x8x256xf32, #tpu.memory_space<vmem>>, vector<1x8x256xf32>
    %11 = vector.shape_cast %10 : vector<1x8x256xf32> to vector<8x256xf32>
    %12 = vector.shape_cast %9 : vector<8x256xf32> to vector<1x8x256xf32>
    tpu.vector_store %arg4[%c0_6, %c0_7, %c0_8], %12 {strides = array<i32>} : memref<1x8x256xf32, #tpu.memory_space<vmem>>, vector<1x8x256xf32>,
    return
  }
  func.func @transform_0(%arg0: i32) -> (i32, i32, i32) {
    %c0_i32 = arith.constant 0 : i32
    %c0_i32_0 = arith.constant 0 : i32
    %c0_i32_1 = arith.constant 0 : i32
    return %arg0, %c0_i32, %c0_i32_0 : i32, i32, i32
  }
  func.func @transform_1(%arg0: i32) -> (i32, i32) {
    %c0_i32 = arith.constant 0 : i32
    %c0_i32_0 = arith.constant 0 : i32
    %c0_i32_1 = arith.constant 0 : i32
    return %c0_i32, %c0_i32_0 : i32, i32
  }
  func.func @transform_2(%arg0: i32) -> (i32, i32) {
    %c0_i32 = arith.constant 0 : i32
    %c0_i32_0 = arith.constant 0 : i32
    %c0_i32_1 = arith.constant 0 : i32
    return %c0_i32, %c0_i32_0 : i32, i32
  }
  func.func @transform_3(%arg0: i32) -> (i32, i32, i32) {
    %c0_i32 = arith.constant 0 : i32
    %c0_i32_0 = arith.constant 0 : i32
    %c0_i32_1 = arith.constant 0 : i32
    return %arg0, %c0_i32, %c0_i32_0 : i32, i32, i32
  }
}

</mosaic_0001>

<llo_original>
// kernel: basic_block_forward.5
$region0: #{basic_block_forward.5}
  #allocation0 [shape = 'u32[]', space=smem, size = 0x4, offset = 0x4, fixed_abs, tag = 'smem constant byte address 0x4 - core index']
  #allocation1 [shape = 'u32[144,128]{1,0:T(1,128)}', space=vmem, size = 0x12000, scoped, tag = 'internal scratch']
  %s0 = inlined_call_operand.vmem [shape: f32[2,8,256], index: 0, kind: input, shape index: {}]
  %s1 = inlined_call_operand.vmem [shape: f32[8,1], index: 1, kind: input, shape index: {}]
  %s2 = inlined_call_operand.vmem [shape: f32[8,1], index: 2, kind: input, shape index: {}]
  %s3 = inlined_call_operand.vmem [shape: f32[2,8,256], index: 3, kind: output, shape index: {}]
  %s4 = sld [smem:[#allocation0]]
  $region45: #{basic_block_forward.5} parent=0
    _
  %s6 = ssub.s32 1, %s4
  %s7 = scalar_select 0, %s6, %s4
  loop: start=0, step=1, limit=4
  $region2: #{basic_block_forward.5} parent=0 // loop_pre_header
    _
  $region3: #{basic_block_forward.5} parent=0 // loop_header
    %s9 = sphi 0, %s13
    %p10 = scmp.ge.s32.totalorder %s9, 4
    %s19 = sphi 0, %s21
    %s22 = sphi 0, %s19
    %s23 = sphi 0, %s22
    %s39 = sphi 0, %s23
    %s43 = sphi 0, %s43
    %s45 = sphi 0, %s43
    %s46 = sphi 0, %s45
    %s60 = sphi 0, %s46
    %s64 = sphi 0, %s64
    %s66 = sphi 0, %s64
    %s67 = sphi 0, %s66
    %s81 = sphi 0, %s67
    %s87 = sphi 0, %s89
    %s90 = sphi 0, %s87
    %s91 = sphi 0, %s90
    %s107 = sphi 0, %s91
  $region4: #{basic_block_forward.5} parent=0 // loop_header_branch
    %12 = sbr.rel (%p10) target = $region8
  $region5: #{basic_block_forward.5} parent=0 // loop_body
    %s14 = ssub.s32 %s9, 1
    %s15 = ssub.s32 %s9, 2
    %s16 = sadd.s32 %s9, 1
    %s17 = ssub.s32 %s9, %s16
    %p18 = scmp.eq.s32.totalorder %s17, 0
    %s20 = sadd.s32 %s19, 1
    %s21 = scalar_select %p18, %s19, %s20
    %p24 = pneg %p18
    %p25 = scmp.eq.s32.totalorder %s9, 1
    %p26 = por %p24, %p25
    %p27 = scmp.ne.s32.totalorder %s19, %s22
    %p28 = scmp.eq.s32.totalorder %s9, 0
    %p29 = por %p27, %p28
    %p30 = scmp.ne.s32.totalorder %s19, %s22
    %p31 = scmp.eq.s32.totalorder %s14, 1
    %p32 = por %p30, %p31
    %p33 = scmp.ne.s32.totalorder %s22, %s23
    %p34 = scmp.eq.s32.totalorder %s14, 0
    %p35 = por %p33, %p34
    %p36 = scmp.ne.s32.totalorder %s22, %s23
    %p37 = scmp.eq.s32.totalorder %s15, 1
    %p38 = por %p36, %p37
    %p40 = scmp.ne.s32.totalorder %s23, %s39
    %p41 = scmp.eq.s32.totalorder %s15, 0
    %p42 = por %p40, %p41
    %s44 = sadd.s32 %s43, 1
    %p47 = scmp.eq.s32.totalorder %s9, 1
    %p48 = scmp.ne.s32.totalorder %s43, %s45
    %p49 = scmp.eq.s32.totalorder %s9, 0
    %p50 = por %p48, %p49
    %p51 = scmp.ne.s32.totalorder %s43, %s45
    %p52 = scmp.eq.s32.totalorder %s14, 1
    %p53 = por %p51, %p52
    %p54 = scmp.ne.s32.totalorder %s45, %s46
    %p55 = scmp.eq.s32.totalorder %s14, 0
    %p56 = por %p54, %p55
    %p57 = scmp.ne.s32.totalorder %s45, %s46
    %p58 = scmp.eq.s32.totalorder %s15, 1
    %p59 = por %p57, %p58
    %p61 = scmp.ne.s32.totalorder %s46, %s60
    %p62 = scmp.eq.s32.totalorder %s15, 0
    %p63 = por %p61, %p62
    %s65 = sadd.s32 %s64, 1
    %p68 = scmp.eq.s32.totalorder %s9, 1
    %p69 = scmp.ne.s32.totalorder %s64, %s66
    %p70 = scmp.eq.s32.totalorder %s9, 0
    %p71 = por %p69, %p70
    %p72 = scmp.ne.s32.totalorder %s64, %s66
    %p73 = scmp.eq.s32.totalorder %s14, 1
    %p74 = por %p72, %p73
    %p75 = scmp.ne.s32.totalorder %s66, %s67
    %p76 = scmp.eq.s32.totalorder %s14, 0
    %p77 = por %p75, %p76
    %p78 = scmp.ne.s32.totalorder %s66, %s67
    %p79 = scmp.eq.s32.totalorder %s15, 1
    %p80 = por %p78, %p79
    %p82 = scmp.ne.s32.totalorder %s67, %s81
    %p83 = scmp.eq.s32.totalorder %s15, 0
    %p84 = por %p82, %p83
    %s85 = ssub.s32 %s9, %s16
    %p86 = scmp.eq.s32.totalorder %s85, 0
    %s88 = sadd.s32 %s87, 1
    %s89 = scalar_select %p86, %s87, %s88
    %p92 = pneg %p86
    %p93 = scmp.eq.s32.totalorder %s9, 1
    %p94 = por %p92, %p93
    %p95 = scmp.ne.s32.totalorder %s87, %s90
    %p96 = scmp.eq.s32.totalorder %s9, 0
    %p97 = por %p95, %p96
    %p98 = scmp.ne.s32.totalorder %s87, %s90
    %p99 = scmp.eq.s32.totalorder %s14, 1
    %p100 = por %p98, %p99
    %p101 = scmp.ne.s32.totalorder %s90, %s91
    %p102 = scmp.eq.s32.totalorder %s14, 0
    %p103 = por %p101, %p102
    %p104 = scmp.ne.s32.totalorder %s90, %s91
    %p105 = scmp.eq.s32.totalorder %s15, 1
    %p106 = por %p104, %p105
    %p108 = scmp.ne.s32.totalorder %s91, %s107
    %p109 = scmp.eq.s32.totalorder %s15, 0
    %p110 = por %p108, %p109
    %p111 = scmp.le.s32.totalorder 1, %s9
    %p112 = scmp.lt.s32.totalorder %s9, 3
    %p113 = pnand %p111, %p112
    %p114 = pneg %p113
    // Predicated region
    $region9: #{basic_block_forward.5} parent=5 // pred_check
      _
    $region10: #{basic_block_forward.5} parent=5 // pred_check_branch
      %116 = sbr.rel (%p113) target = $region12
    $region11: #{basic_block_forward.5} parent=5 // pred_region
      %s117 = ssub.s32 %s9, 1
      // Predicated region
      $region13: #{basic_block_forward.5} parent=11 // pred_check
        %p118 = pneg %p56
      $region14: #{basic_block_forward.5} parent=11 // pred_check_branch
        %120 = sbr.rel (%p118) target = $region16
      $region15: #{basic_block_forward.5} parent=11 // pred_region
        _
      $region16: #{basic_block_forward.5} parent=11 // pred_fallthru
        _
      // Predicated region
      $region17: #{basic_block_forward.5} parent=11 // pred_check
        %p121 = pneg %p77
      $region18: #{basic_block_forward.5} parent=11 // pred_check_branch
        %123 = sbr.rel (%p121) target = $region20
      $region19: #{basic_block_forward.5} parent=11 // pred_region
        _
      $region20: #{basic_block_forward.5} parent=11 // pred_fallthru
        _
    $region12: #{basic_block_forward.5} parent=5 // pred_fallthru
      _
    %p124 = scmp.lt.s32.totalorder %s9, 2
    // Predicated region
    $region21: #{basic_block_forward.5} parent=5 // pred_check
      %p125 = pneg %p124
    $region22: #{basic_block_forward.5} parent=5 // pred_check_branch
      %127 = sbr.rel (%p125) target = $region24
    $region23: #{basic_block_forward.5} parent=5 // pred_region
      // Predicated region
      $region25: #{basic_block_forward.5} parent=23 // pred_check
        %p128 = pneg %p29
      $region26: #{basic_block_forward.5} parent=23 // pred_check_branch
        %130 = sbr.rel (%p128) target = $region28
      $region27: #{basic_block_forward.5} parent=23 // pred_region
        %p131 = scmp.lt.s32.totalorder %s9, 1
        %s132 = scalar_select %p131, %s9, 1
        %s133 = smul.addr %s132, 2
        %s134 = smul.addr %s133, 8
        %s135 = scalar_lea.vmem %s0, %s134
      $region28: #{basic_block_forward.5} parent=23 // pred_fallthru
        _
    $region24: #{basic_block_forward.5} parent=5 // pred_fallthru
      _
    %p136 = scmp.le.s32.totalorder 1, %s9
    %p137 = scmp.lt.s32.totalorder %s9, 3
    %p138 = pnand %p136, %p137
    %p139 = pneg %p138
    // Predicated region
    $region29: #{basic_block_forward.5} parent=5 // pred_check
      _
    $region30: #{basic_block_forward.5} parent=5 // pred_check_branch
      %141 = sbr.rel (%p138) target = $region32
    $region31: #{basic_block_forward.5} parent=5 // pred_region
      %s142 = ssub.s32 %s9, 1
      %p143 = scmp.lt.s32.totalorder %s14, 1
      %s144 = scalar_select %p143, %s14, 1
      %s145 = smul.addr %s144, 2
      %s146 = smul.addr %s145, 8
      %s147 = scalar_lea.vmem %s0, %s146
      %p148 = pneg %p35
      %p149 = pneg %p32
      %p150 = pneg %p56
      %p151 = pneg %p53
      %p152 = pneg %p77
      %p153 = pneg %p74
      %p154 = pneg %p103
      %p155 = pneg %p100
      %p156 = scmp.lt.s32.totalorder %s14, 1
      %s157 = scalar_select %p156, %s14, 1
      %s158 = smul.addr %s157, 2
      %s159 = smul.addr %s158, 8
      %s160 = scalar_lea.vmem %s3, %s159
      %p161 = scmp.lt.s32.totalorder %s14, 1
      %s162 = scalar_select %p161, %s14, 1
      %s163 = smul.addr %s162, 2
      %s164 = smul.addr %s163, 8
      %s165 = scalar_lea.vmem %s0, %s164
      %p166 = scmp.lt.s32.totalorder %s14, 1
      %s167 = scalar_select %p166, %s14, 1
      %s168 = smul.addr %s167, 2
      %s169 = smul.addr %s168, 8
      %s170 = scalar_lea.vmem %s3, %s169
      %v171 = vld [vmem:[%s165] sm:$0xff]
      %v172 = vld [vmem:[%s165 + $0x8] sm:$0xff]
      %v173 = vld [vmem:[%s1] sm:$0xff]
      %175 = vset.pattern.permute.xlu0 0
      %176 = vperm.xlu0 %175, %v173
      %v177 = vpop.permute.xlu0 %176
      %v179 = vmul.f32 %v171, %v177
      %v180 = vmul.f32 %v172, %v177
      %v181 = vld [vmem:[%s2] sm:$0xff]
      %183 = vset.pattern.permute.xlu0 0
      %184 = vperm.xlu0 %183, %v181
      %v185 = vpop.permute.xlu0 %184
      %v187 = vadd.f32 %v179, %v185
      %v188 = vadd.f32 %v180, %v185
      %v189 = vmax.f32 %v187, 0.0
      %v190 = vmax.f32 %v188, 0.0
      %191 = vst [vmem:[%s170] sm:$0xff] %v189
      %192 = vst [vmem:[%s170 + $0x8] sm:$0xff] %v190
      %p193 = scmp.lt.s32.totalorder %s14, 1
      %s194 = scalar_select %p193, %s14, 1
      %s195 = smul.addr %s194, 2
      %s196 = smul.addr %s195, 8
      %s197 = scalar_lea.vmem %s3, %s196
      // Predicated region
      $region33: #{basic_block_forward.5} parent=31 // pred_check
        %p198 = pneg %p100
      $region34: #{basic_block_forward.5} parent=31 // pred_check_branch
        %200 = sbr.rel (%p198) target = $region36
      $region35: #{basic_block_forward.5} parent=31 // pred_region
        _
      $region36: #{basic_block_forward.5} parent=31 // pred_fallthru
        _
    $region32: #{basic_block_forward.5} parent=5 // pred_fallthru
      _
    %p201 = scmp.le.s32.totalorder 2, %s9
    // Predicated region
    $region37: #{basic_block_forward.5} parent=5 // pred_check
      %p202 = pneg %p201
    $region38: #{basic_block_forward.5} parent=5 // pred_check_branch
      %204 = sbr.rel (%p202) target = $region40
    $region39: #{basic_block_forward.5} parent=5 // pred_region
      %s205 = ssub.s32 %s9, 2
      // Predicated region
      $region41: #{basic_block_forward.5} parent=39 // pred_check
        %p206 = pneg %p106
      $region42: #{basic_block_forward.5} parent=39 // pred_check_branch
        %208 = sbr.rel (%p206) target = $region44
      $region43: #{basic_block_forward.5} parent=39 // pred_region
        %p209 = scmp.lt.s32.totalorder %s15, 1
        %s210 = scalar_select %p209, %s15, 1
        %s211 = smul.addr %s210, 2
        %s212 = smul.addr %s211, 8
        %s213 = scalar_lea.vmem %s3, %s212
      $region44: #{basic_block_forward.5} parent=39 // pred_fallthru
        _
    $region40: #{basic_block_forward.5} parent=5 // pred_fallthru
      _
  $region6: #{basic_block_forward.5} parent=0 // loop_footer
    %s13 = sadd.s32 1, %s9
  $region7: #{basic_block_forward.5} parent=0 // loop_footer_branch
    %8 = sbr.rel target = $region3
  $region8: #{basic_block_forward.5} parent=0 // loop_exit
    _

// kernel: basic_block_forward.3
$region0: #{basic_block_forward.3}
  #allocation0 [shape = 'u32[]', space=smem, size = 0x4, offset = 0x4, fixed_abs, tag = 'smem constant byte address 0x4 - core index']
  #allocation1 [shape = 'u32[144,128]{1,0:T(1,128)}', space=vmem, size = 0x12000, scoped, tag = 'internal scratch']
  %s0 = inlined_call_operand.vmem [shape: f32[2,4,256], index: 0, kind: input, shape index: {}]
  %s1 = inlined_call_operand.vmem [shape: f32[9,8,4], index: 1, kind: input, shape index: {}]
  %s2 = inlined_call_operand.vmem [shape: f32[9,256], index: 2, kind: input, shape index: {}]
  %s3 = inlined_call_operand.vmem [shape: f32[4,1], index: 3, kind: input, shape index: {}]
  %s4 = inlined_call_operand.vmem [shape: f32[4,1], index: 4, kind: input, shape index: {}]
  %s5 = inlined_call_operand.vmem [shape: f32[2,8,256], index: 5, kind: output, shape index: {0}]
  %s6 = inlined_call_operand.vmem [shape: f32[2,8,1], index: 6, kind: output, shape index: {1}]
  %s7 = inlined_call_operand.vmem [shape: f32[2,8,1], index: 7, kind: output, shape index: {2}]
  %8 = xla_tuple %s5, %s6, %s7
  %s9 = sld [smem:[#allocation0]]
  $region69: #{basic_block_forward.3} parent=0
    _
  %s11 = ssub.s32 1, %s9
  %s12 = scalar_select 0, %s11, %s9
  loop: start=0, step=1, limit=4
  $region2: #{basic_block_forward.3} parent=0 // loop_pre_header
    _
  $region3: #{basic_block_forward.3} parent=0 // loop_header
    %s14 = sphi 0, %s18
    %p15 = scmp.ge.s32.totalorder %s14, 4
    %s24 = sphi 0, %s26
    %s27 = sphi 0, %s24
    %s28 = sphi 0, %s27
    %s44 = sphi 0, %s28
    %s48 = sphi 0, %s48
    %s50 = sphi 0, %s48
    %s51 = sphi 0, %s50
    %s65 = sphi 0, %s51
    %s69 = sphi 0, %s69
    %s71 = sphi 0, %s69
    %s72 = sphi 0, %s71
    %s86 = sphi 0, %s72
    %s90 = sphi 0, %s90
    %s92 = sphi 0, %s90
    %s93 = sphi 0, %s92
    %s107 = sphi 0, %s93
    %s111 = sphi 0, %s111
    %s113 = sphi 0, %s111
    %s114 = sphi 0, %s113
    %s128 = sphi 0, %s114
    %s134 = sphi 0, %s136
    %s137 = sphi 0, %s134
    %s138 = sphi 0, %s137
    %s154 = sphi 0, %s138
    %s160 = sphi 0, %s162
    %s163 = sphi 0, %s160
    %s164 = sphi 0, %s163
    %s180 = sphi 0, %s164
    %s186 = sphi 0, %s188
    %s189 = sphi 0, %s186
    %s190 = sphi 0, %s189
    %s206 = sphi 0, %s190
  $region4: #{basic_block_forward.3} parent=0 // loop_header_branch
    %17 = sbr.rel (%p15) target = $region8
  $region5: #{basic_block_forward.3} parent=0 // loop_body
    %s19 = ssub.s32 %s14, 1
    %s20 = ssub.s32 %s14, 2
    %s21 = sadd.s32 %s14, 1
    %s22 = ssub.s32 %s14, %s21
    %p23 = scmp.eq.s32.totalorder %s22, 0
    %s25 = sadd.s32 %s24, 1
    %s26 = scalar_select %p23, %s24, %s25
    %p29 = pneg %p23
    %p30 = scmp.eq.s32.totalorder %s14, 1
    %p31 = por %p29, %p30
    %p32 = scmp.ne.s32.totalorder %s24, %s27
    %p33 = scmp.eq.s32.totalorder %s14, 0
    %p34 = por %p32, %p33
    %p35 = scmp.ne.s32.totalorder %s24, %s27
    %p36 = scmp.eq.s32.totalorder %s19, 1
    %p37 = por %p35, %p36
    %p38 = scmp.ne.s32.totalorder %s27, %s28
    %p39 = scmp.eq.s32.totalorder %s19, 0
    %p40 = por %p38, %p39
    %p41 = scmp.ne.s32.totalorder %s27, %s28
    %p42 = scmp.eq.s32.totalorder %s20, 1
    %p43 = por %p41, %p42
    %p45 = scmp.ne.s32.totalorder %s28, %s44
    %p46 = scmp.eq.s32.totalorder %s20, 0
    %p47 = por %p45, %p46
    %s49 = sadd.s32 %s48, 1
    %p52 = scmp.eq.s32.totalorder %s14, 1
    %p53 = scmp.ne.s32.totalorder %s48, %s50
    %p54 = scmp.eq.s32.totalorder %s14, 0
    %p55 = por %p53, %p54
    %p56 = scmp.ne.s32.totalorder %s48, %s50
    %p57 = scmp.eq.s32.totalorder %s19, 1
    %p58 = por %p56, %p57
    %p59 = scmp.ne.s32.totalorder %s50, %s51
    %p60 = scmp.eq.s32.totalorder %s19, 0
    %p61 = por %p59, %p60
    %p62 = scmp.ne.s32.totalorder %s50, %s51
    %p63 = scmp.eq.s32.totalorder %s20, 1
    %p64 = por %p62, %p63
    %p66 = scmp.ne.s32.totalorder %s51, %s65
    %p67 = scmp.eq.s32.totalorder %s20, 0
    %p68 = por %p66, %p67
    %s70 = sadd.s32 %s69, 1
    %p73 = scmp.eq.s32.totalorder %s14, 1
    %p74 = scmp.ne.s32.totalorder %s69, %s71
    %p75 = scmp.eq.s32.totalorder %s14, 0
    %p76 = por %p74, %p75
    %p77 = scmp.ne.s32.totalorder %s69, %s71
    %p78 = scmp.eq.s32.totalorder %s19, 1
    %p79 = por %p77, %p78
    %p80 = scmp.ne.s32.totalorder %s71, %s72
    %p81 = scmp.eq.s32.totalorder %s19, 0
    %p82 = por %p80, %p81
    %p83 = scmp.ne.s32.totalorder %s71, %s72
    %p84 = scmp.eq.s32.totalorder %s20, 1
    %p85 = por %p83, %p84
    %p87 = scmp.ne.s32.totalorder %s72, %s86
    %p88 = scmp.eq.s32.totalorder %s20, 0
    %p89 = por %p87, %p88
    %s91 = sadd.s32 %s90, 1
    %p94 = scmp.eq.s32.totalorder %s14, 1
    %p95 = scmp.ne.s32.totalorder %s90, %s92
    %p96 = scmp.eq.s32.totalorder %s14, 0
    %p97 = por %p95, %p96
    %p98 = scmp.ne.s32.totalorder %s90, %s92
    %p99 = scmp.eq.s32.totalorder %s19, 1
    %p100 = por %p98, %p99
    %p101 = scmp.ne.s32.totalorder %s92, %s93
    %p102 = scmp.eq.s32.totalorder %s19, 0
    %p103 = por %p101, %p102
    %p104 = scmp.ne.s32.totalorder %s92, %s93
    %p105 = scmp.eq.s32.totalorder %s20, 1
    %p106 = por %p104, %p105
    %p108 = scmp.ne.s32.totalorder %s93, %s107
    %p109 = scmp.eq.s32.totalorder %s20, 0
    %p110 = por %p108, %p109
    %s112 = sadd.s32 %s111, 1
    %p115 = scmp.eq.s32.totalorder %s14, 1
    %p116 = scmp.ne.s32.totalorder %s111, %s113
    %p117 = scmp.eq.s32.totalorder %s14, 0
    %p118 = por %p116, %p117
    %p119 = scmp.ne.s32.totalorder %s111, %s113
    %p120 = scmp.eq.s32.totalorder %s19, 1
    %p121 = por %p119, %p120
    %p122 = scmp.ne.s32.totalorder %s113, %s114
    %p123 = scmp.eq.s32.totalorder %s19, 0
    %p124 = por %p122, %p123
    %p125 = scmp.ne.s32.totalorder %s113, %s114
    %p126 = scmp.eq.s32.totalorder %s20, 1
    %p127 = por %p125, %p126
    %p129 = scmp.ne.s32.totalorder %s114, %s128
    %p130 = scmp.eq.s32.totalorder %s20, 0
    %p131 = por %p129, %p130
    %s132 = ssub.s32 %s14, %s21
    %p133 = scmp.eq.s32.totalorder %s132, 0
    %s135 = sadd.s32 %s134, 1
    %s136 = scalar_select %p133, %s134, %s135
    %p139 = pneg %p133
    %p140 = scmp.eq.s32.totalorder %s14, 1
    %p141 = por %p139, %p140
    %p142 = scmp.ne.s32.totalorder %s134, %s137
    %p143 = scmp.eq.s32.totalorder %s14, 0
    %p144 = por %p142, %p143
    %p145 = scmp.ne.s32.totalorder %s134, %s137
    %p146 = scmp.eq.s32.totalorder %s19, 1
    %p147 = por %p145, %p146
    %p148 = scmp.ne.s32.totalorder %s137, %s138
    %p149 = scmp.eq.s32.totalorder %s19, 0
    %p150 = por %p148, %p149
    %p151 = scmp.ne.s32.totalorder %s137, %s138
    %p152 = scmp.eq.s32.totalorder %s20, 1
    %p153 = por %p151, %p152
    %p155 = scmp.ne.s32.totalorder %s138, %s154
    %p156 = scmp.eq.s32.totalorder %s20, 0
    %p157 = por %p155, %p156
    %s158 = ssub.s32 %s14, %s21
    %p159 = scmp.eq.s32.totalorder %s158, 0
    %s161 = sadd.s32 %s160, 1
    %s162 = scalar_select %p159, %s160, %s161
    %p165 = pneg %p159
    %p166 = scmp.eq.s32.totalorder %s14, 1
    %p167 = por %p165, %p166
    %p168 = scmp.ne.s32.totalorder %s160, %s163
    %p169 = scmp.eq.s32.totalorder %s14, 0
    %p170 = por %p168, %p169
    %p171 = scmp.ne.s32.totalorder %s160, %s163
    %p172 = scmp.eq.s32.totalorder %s19, 1
    %p173 = por %p171, %p172
    %p174 = scmp.ne.s32.totalorder %s163, %s164
    %p175 = scmp.eq.s32.totalorder %s19, 0
    %p176 = por %p174, %p175
    %p177 = scmp.ne.s32.totalorder %s163, %s164
    %p178 = scmp.eq.s32.totalorder %s20, 1
    %p179 = por %p177, %p178
    %p181 = scmp.ne.s32.totalorder %s164, %s180
    %p182 = scmp.eq.s32.totalorder %s20, 0
    %p183 = por %p181, %p182
    %s184 = ssub.s32 %s14, %s21
    %p185 = scmp.eq.s32.totalorder %s184, 0
    %s187 = sadd.s32 %s186, 1
    %s188 = scalar_select %p185, %s186, %s187
    %p191 = pneg %p185
    %p192 = scmp.eq.s32.totalorder %s14, 1
    %p193 = por %p191, %p192
    %p194 = scmp.ne.s32.totalorder %s186, %s189
    %p195 = scmp.eq.s32.totalorder %s14, 0
    %p196 = por %p194, %p195
    %p197 = scmp.ne.s32.totalorder %s186, %s189
    %p198 = scmp.eq.s32.totalorder %s19, 1
    %p199 = por %p197, %p198
    %p200 = scmp.ne.s32.totalorder %s189, %s190
    %p201 = scmp.eq.s32.totalorder %s19, 0
    %p202 = por %p200, %p201
    %p203 = scmp.ne.s32.totalorder %s189, %s190
    %p204 = scmp.eq.s32.totalorder %s20, 1
    %p205 = por %p203, %p204
    %p207 = scmp.ne.s32.totalorder %s190, %s206
    %p208 = scmp.eq.s32.totalorder %s20, 0
    %p209 = por %p207, %p208
    %p210 = scmp.le.s32.totalorder 1, %s14
    %p211 = scmp.lt.s32.totalorder %s14, 3
    %p212 = pnand %p210, %p211
    %p213 = pneg %p212
    // Predicated region
    $region9: #{basic_block_forward.3} parent=5 // pred_check
      _
    $region10: #{basic_block_forward.3} parent=5 // pred_check_branch
      %215 = sbr.rel (%p212) target = $region12
    $region11: #{basic_block_forward.3} parent=5 // pred_region
      %s216 = ssub.s32 %s14, 1
      // Predicated region
      $region13: #{basic_block_forward.3} parent=11 // pred_check
        %p217 = pneg %p61
      $region14: #{basic_block_forward.3} parent=11 // pred_check_branch
        %219 = sbr.rel (%p217) target = $region16
      $region15: #{basic_block_forward.3} parent=11 // pred_region
        _
      $region16: #{basic_block_forward.3} parent=11 // pred_fallthru
        _
      // Predicated region
      $region17: #{basic_block_forward.3} parent=11 // pred_check
        %p220 = pneg %p82
      $region18: #{basic_block_forward.3} parent=11 // pred_check_branch
        %222 = sbr.rel (%p220) target = $region20
      $region19: #{basic_block_forward.3} parent=11 // pred_region
        _
      $region20: #{basic_block_forward.3} parent=11 // pred_fallthru
        _
      // Predicated region
      $region21: #{basic_block_forward.3} parent=11 // pred_check
        %p223 = pneg %p103
      $region22: #{basic_block_forward.3} parent=11 // pred_check_branch
        %225 = sbr.rel (%p223) target = $region24
      $region23: #{basic_block_forward.3} parent=11 // pred_region
        _
      $region24: #{basic_block_forward.3} parent=11 // pred_fallthru
        _
      // Predicated region
      $region25: #{basic_block_forward.3} parent=11 // pred_check
        %p226 = pneg %p124
      $region26: #{basic_block_forward.3} parent=11 // pred_check_branch
        %228 = sbr.rel (%p226) target = $region28
      $region27: #{basic_block_forward.3} parent=11 // pred_region
        _
      $region28: #{basic_block_forward.3} parent=11 // pred_fallthru
        _
    $region12: #{basic_block_forward.3} parent=5 // pred_fallthru
      _
    %p229 = scmp.lt.s32.totalorder %s14, 2
    // Predicated region
    $region29: #{basic_block_forward.3} parent=5 // pred_check
      %p230 = pneg %p229
    $region30: #{basic_block_forward.3} parent=5 // pred_check_branch
      %232 = sbr.rel (%p230) target = $region32
    $region31: #{basic_block_forward.3} parent=5 // pred_region
      // Predicated region
      $region33: #{basic_block_forward.3} parent=31 // pred_check
        %p233 = pneg %p34
      $region34: #{basic_block_forward.3} parent=31 // pred_check_branch
        %235 = sbr.rel (%p233) target = $region36
      $region35: #{basic_block_forward.3} parent=31 // pred_region
        %p236 = scmp.lt.s32.totalorder %s14, 1
        %s237 = scalar_select %p236, %s14, 1
        %s238 = smul.addr %s237, 2
        %s239 = smul.addr %s238, 4
        %s240 = scalar_lea.vmem %s0, %s239
      $region36: #{basic_block_forward.3} parent=31 // pred_fallthru
        _
    $region32: #{basic_block_forward.3} parent=5 // pred_fallthru
      _
    %p241 = scmp.le.s32.totalorder 1, %s14
    %p242 = scmp.lt.s32.totalorder %s14, 3
    %p243 = pnand %p241, %p242
    %p244 = pneg %p243
    // Predicated region
    $region37: #{basic_block_forward.3} parent=5 // pred_check
      _
    $region38: #{basic_block_forward.3} parent=5 // pred_check_branch
      %246 = sbr.rel (%p243) target = $region40
    $region39: #{basic_block_forward.3} parent=5 // pred_region
      %s247 = ssub.s32 %s14, 1
      %p248 = scmp.lt.s32.totalorder %s19, 1
      %s249 = scalar_select %p248, %s19, 1
      %s250 = smul.addr %s249, 2
      %s251 = smul.addr %s250, 4
      %s252 = scalar_lea.vmem %s0, %s251
      %p253 = pneg %p40
      %p254 = pneg %p37
      %p255 = pneg %p61
      %p256 = pneg %p58
      %p257 = pneg %p82
      %p258 = pneg %p79
      %p259 = pneg %p103
      %p260 = pneg %p100
      %p261 = pneg %p124
      %p262 = pneg %p121
      %p263 = pneg %p150
      %p264 = pneg %p147
      %p265 = scmp.lt.s32.totalorder %s19, 1
      %s266 = scalar_select %p265, %s19, 1
      %s267 = smul.addr %s266, 2
      %s268 = smul.addr %s267, 8
      %s269 = scalar_lea.vmem %s5, %s268
      %p270 = pneg %p176
      %p271 = pneg %p173
      %p272 = scmp.lt.s32.totalorder %s19, 1
      %s273 = scalar_select %p272, %s19, 1
      %s274 = smul.addr %s273, 8
      %s275 = scalar_lea.vmem %s6, %s274
      %p276 = pneg %p202
      %p277 = pneg %p199
      %p278 = scmp.lt.s32.totalorder %s19, 1
      %s279 = scalar_select %p278, %s19, 1
      %s280 = smul.addr %s279, 8
      %s281 = scalar_lea.vmem %s7, %s280
      %p282 = scmp.lt.s32.totalorder %s19, 1
      %s283 = scalar_select %p282, %s19, 1
      %s284 = smul.addr %s283, 2
      %s285 = smul.addr %s284, 4
      %s286 = scalar_lea.vmem %s0, %s285
      %p287 = scmp.lt.s32.totalorder %s19, 1
      %s288 = scalar_select %p287, %s19, 1
      %s289 = smul.addr %s288, 2
      %s290 = smul.addr %s289, 8
      %s291 = scalar_lea.vmem %s5, %s290
      %p292 = scmp.lt.s32.totalorder %s19, 1
      %s293 = scalar_select %p292, %s19, 1
      %s294 = smul.addr %s293, 8
      %s295 = scalar_lea.vmem %s6, %s294
      %p296 = scmp.lt.s32.totalorder %s19, 1
      %s297 = scalar_select %p296, %s19, 1
      %s298 = smul.addr %s297, 8
      %s299 = scalar_lea.vmem %s7, %s298
      %v300 = vld [vmem:[%s286] sm:$0xff]
      %v302 = vcombine.high %v300, %v300
      %303 = vrot.lane.b32.xlu0 %v300, 17
      %v304 = vpop.permute.xlu0 %303
      %305 = vrot.lane.b32.xlu0 %v302, 17
      %v306 = vpop.permute.xlu0 %305
      %vm307 = vcmask 138240
      %v308 = vsel %vm307, %v304, %v306
      %v312 = vsel %vm307, 0.0, %v304
      %v313 = vsel %vm307, %v306, 0.0
      %v314 = vld [vmem:[%s2] sm:$0xff]
      %v315 = vld [vmem:[%s2 + $0x8] sm:$0xff]
      %v316 = vld [vmem:[%s2 + $0x10] sm:$0x1]
      %v317 = vld [vmem:[%s2 + $0x18] sm:$0x1]
      %v318 = vld [vmem:[%s1] sm:$0xff]
      %v319 = vld [vmem:[%s1 + $0x8] sm:$0xff]
      %v320 = vld [vmem:[%s1 + $0x10] sm:$0xff]
      %v321 = vld [vmem:[%s1 + $0x18] sm:$0xff]
      %v322 = vld [vmem:[%s1 + $0x20] sm:$0xff]
      %v323 = vld [vmem:[%s1 + $0x28] sm:$0xff]
      %v324 = vld [vmem:[%s1 + $0x30] sm:$0xff]
      %v325 = vld [vmem:[%s1 + $0x38] sm:$0xff]
      %v326 = vld [vmem:[%s1 + $0x40] sm:$0xff]
      %v327 = vlaneseq
      %v328 = vshrl.u32 %v327, 7
      %v329 = vsub.s32 0, %v328
      %v330 = vrot.slane %v314, %v329
      %v331 = vlaneseq
      %v332 = vshrl.u32 %v331, 7
      %v333 = vsub.s32 0, %v332
      %v334 = vrot.slane %v315, %v333
      %v335 = vmul.f32 %v312, %v330
      %v336 = vmul.f32 %v308, %v334
      %v337 = vlaneseq
      %v338 = vshrl.u32 %v337, 7
      %v339 = vsub.s32 1, %v338
      %v340 = vrot.slane %v314, %v339
      %v341 = vlaneseq
      %v342 = vshrl.u32 %v341, 7
      %v343 = vsub.s32 1, %v342
      %v344 = vrot.slane %v315, %v343
      %347 = vrot.lane.b32.xlu0 %v340, 1
      %v348 = vpop.permute.xlu0 %347
      %349 = vrot.lane.b32.xlu0 %v344, 1
      %v350 = vpop.permute.xlu0 %349
      %vm351 = vcmask 7168
      %v352 = vsel %vm351, %v348, %v350
      %v356 = vmul.f32 %v312, %v348
      %v357 = vmul.f32 %v308, %v352
      %v358 = vmul.f32 %v313, %v350
      %362 = vrot.lane.b32.xlu0 %v356, 127
      %v363 = vpop.permute.xlu0 %362
      %364 = vrot.lane.b32.xlu0 %v357, 127
      %v365 = vpop.permute.xlu0 %364
      %366 = vrot.lane.b32.xlu0 %v358, 127
      %v367 = vpop.permute.xlu0 %366
      %vm368 = vcmask 1039360
      %v369 = vsel %vm368, %v363, %v365
      %v370 = vsel %vm368, %v365, %v367
      %vm371 = vcmask 31744
      %v373 = vsel %vm371, %v319, 0
      %vm375 = vcmask 1043456
      %v376 = vsel %vm375, %v369, 0
      %v378 = vsel %vm375, %v370, 0
      %380 = vmatprep.subr.mxu0 %v378
      %381 = vmatpush1.msra.mxu0 %v376
      %382 = vmatprep.subr.mxu0 0.0
      %383 = vmatpush1.msra.mxu0 0.0
      %384 = vmatprep.subr.mxu0 0.0
      %385 = vmatpush1.msra.mxu0 0.0
      %386 = vmatprep.subr.mxu0 0.0
      %387 = vmatpush1.msra.mxu0 0.0
      %388 = vmatprep.subr.mxu0 0.0
      %389 = vmatpush1.msra.mxu0 0.0
      %390 = vmatprep.subr.mxu0 0.0
      %391 = vmatpush1.msra.mxu0 0.0
      %392 = vmatprep.subr.mxu0 0.0
      %393 = vmatpush1.msra.mxu0 0.0
      %394 = vmatprep.subr.mxu0 0.0
      %395 = vmatpush1.msra.mxu0 0.0
      %396 = vmatprep.subr.mxu0 0.0
      %397 = vmatpush1.msra.mxu0 0.0
      %398 = vmatprep.subr.mxu0 0.0
      %399 = vmatpush1.msra.mxu0 0.0
      %400 = vmatprep.subr.mxu0 0.0
      %401 = vmatpush1.msra.mxu0 0.0
      %402 = vmatprep.subr.mxu0 0.0
      %403 = vmatpush1.msra.mxu0 0.0
      %404 = vmatprep.subr.mxu0 0.0
      %405 = vmatpush1.msra.mxu0 0.0
      %406 = vmatprep.subr.mxu0 0.0
      %407 = vmatpush1.msra.mxu0 0.0
      %408 = vmatprep.subr.mxu0 0.0
      %409 = vmatpush1.msra.mxu0 0.0
      %410 = vmatprep.subr.mxu0 0.0
      %411 = vmatpush1.msra.mxu0 0.0
      %412 = vmatprep.subr.mxu0 0.0
      %413 = vmatpush1.msra.mxu0 0.0
      %414 = vmatprep.subr.mxu0 0.0
      %415 = vmatpush1.msra.mxu0 0.0
      %416 = vmatprep.subr.mxu0 0.0
      %417 = vmatpush1.msra.mxu0 0.0
      %418 = vmatprep.subr.mxu0 0.0
      %419 = vmatpush1.msra.mxu0 0.0
      %420 = vmatprep.subr.mxu0 0.0
      %421 = vmatpush1.msra.mxu0 0.0
      %422 = vmatprep.subr.mxu0 0.0
      %423 = vmatpush1.msra.mxu0 0.0
      %424 = vmatprep.subr.mxu0 0.0
      %425 = vmatpush1.msra.mxu0 0.0
      %426 = vmatprep.subr.mxu0 0.0
      %427 = vmatpush1.msra.mxu0 0.0
      %428 = vmatprep.subr.mxu0 0.0
      %429 = vmatpush1.msra.mxu0 0.0
      %430 = vmatprep.subr.mxu0 0.0
      %431 = vmatpush1.msra.mxu0 0.0
      %432 = vmatprep.subr.mxu0 0.0
      %433 = vmatpush1.msra.mxu0 0.0
      %434 = vmatprep.subr.mxu0 0.0
      %435 = vmatpush1.msra.mxu0 0.0
      %436 = vmatprep.subr.mxu0 0.0
      %437 = vmatpush1.msra.mxu0 0.0
      %438 = vmatprep.subr.mxu0 0.0
      %439 = vmatpush1.msra.mxu0 0.0
      %440 = vmatprep.subr.mxu0 0.0
      %441 = vmatpush1.msra.mxu0 0.0
      %442 = vmatprep.subr.mxu0 0.0
      %443 = vmatpush1.msra.mxu0 0.0
      %444 = vmatprep.mubr.f32.mxu0 0.0
      %445 = vmatmul.mubr.f32.gmra.mrb[0].mxu0 %v373
      %v446 = vpop.f32.mrb[0].mxu0
      %v447 = vadd.f32 0.0, %v446
      %v448 = vpop.f32.mrb[0].mxu0
      %v449 = vadd.f32 0.0, %v448
      %450 = vdwg.mxu0
      %v452 = vsel %vm371, %v318, 0
      %v455 = vsel %vm375, %v335, 0
      %v458 = vsel %vm375, %v336, 0
      %460 = vmatprep.subr.mxu0 %v458
      %461 = vmatpush1.msra.mxu0 %v455
      %462 = vmatprep.subr.mxu0 0.0
      %463 = vmatpush1.msra.mxu0 0.0
      %464 = vmatprep.subr.mxu0 0.0
      %465 = vmatpush1.msra.mxu0 0.0
      %466 = vmatprep.subr.mxu0 0.0
      %467 = vmatpush1.msra.mxu0 0.0
      %468 = vmatprep.subr.mxu0 0.0
      %469 = vmatpush1.msra.mxu0 0.0
      %470 = vmatprep.subr.mxu0 0.0
      %471 = vmatpush1.msra.mxu0 0.0
      %472 = vmatprep.subr.mxu0 0.0
      %473 = vmatpush1.msra.mxu0 0.0
      %474 = vmatprep.subr.mxu0 0.0
      %475 = vmatpush1.msra.mxu0 0.0
      %476 = vmatprep.subr.mxu0 0.0
      %477 = vmatpush1.msra.mxu0 0.0
      %478 = vmatprep.subr.mxu0 0.0
      %479 = vmatpush1.msra.mxu0 0.0
      %480 = vmatprep.subr.mxu0 0.0
      %481 = vmatpush1.msra.mxu0 0.0
      %482 = vmatprep.subr.mxu0 0.0
      %483 = vmatpush1.msra.mxu0 0.0
      %484 = vmatprep.subr.mxu0 0.0
      %485 = vmatpush1.msra.mxu0 0.0
      %486 = vmatprep.subr.mxu0 0.0
      %487 = vmatpush1.msra.mxu0 0.0
      %488 = vmatprep.subr.mxu0 0.0
      %489 = vmatpush1.msra.mxu0 0.0
      %490 = vmatprep.subr.mxu0 0.0
      %491 = vmatpush1.msra.mxu0 0.0
      %492 = vmatprep.subr.mxu0 0.0
      %493 = vmatpush1.msra.mxu0 0.0
      %494 = vmatprep.subr.mxu0 0.0
      %495 = vmatpush1.msra.mxu0 0.0
      %496 = vmatprep.subr.mxu0 0.0
      %497 = vmatpush1.msra.mxu0 0.0
      %498 = vmatprep.subr.mxu0 0.0
      %499 = vmatpush1.msra.mxu0 0.0
      %500 = vmatprep.subr.mxu0 0.0
      %501 = vmatpush1.msra.mxu0 0.0
      %502 = vmatprep.subr.mxu0 0.0
      %503 = vmatpush1.msra.mxu0 0.0
      %504 = vmatprep.subr.mxu0 0.0
      %505 = vmatpush1.msra.mxu0 0.0
      %506 = vmatprep.subr.mxu0 0.0
      %507 = vmatpush1.msra.mxu0 0.0
      %508 = vmatprep.subr.mxu0 0.0
      %509 = vmatpush1.msra.mxu0 0.0
      %510 = vmatprep.subr.mxu0 0.0
      %511 = vmatpush1.msra.mxu0 0.0
      %512 = vmatprep.subr.mxu0 0.0
      %513 = vmatpush1.msra.mxu0 0.0
      %514 = vmatprep.subr.mxu0 0.0
      %515 = vmatpush1.msra.mxu0 0.0
      %516 = vmatprep.subr.mxu0 0.0
      %517 = vmatpush1.msra.mxu0 0.0
      %518 = vmatprep.subr.mxu0 0.0
      %519 = vmatpush1.msra.mxu0 0.0
      %520 = vmatprep.subr.mxu0 0.0
      %521 = vmatpush1.msra.mxu0 0.0
      %522 = vmatprep.subr.mxu0 0.0
      %523 = vmatpush1.msra.mxu0 0.0
      %524 = vmatprep.mubr.f32.mxu0 0.0
      %525 = vmatmul.mubr.f32.gmra.mrb[0].mxu0 %v452
      %v526 = vpop.f32.mrb[0].mxu0
      %v527 = vadd.f32 %v447, %v526
      %v528 = vpop.f32.mrb[0].mxu0
      %v529 = vadd.f32 %v449, %v528
      %530 = vdwg.mxu0
      %v531 = vlaneseq
      %v532 = vshrl.u32 %v531, 7
      %v533 = vsub.s32 2, %v532
      %v534 = vrot.slane %v314, %v533
      %v535 = vlaneseq
      %v536 = vshrl.u32 %v535, 7
      %v537 = vsub.s32 2, %v536
      %v538 = vrot.slane %v315, %v537
      %541 = vrot.lane.b32.xlu0 %v534, 2
      %v542 = vpop.permute.xlu0 %541
      %543 = vrot.lane.b32.xlu0 %v538, 2
      %v544 = vpop.permute.xlu0 %543
      %vm545 = vcmask 15360
      %v546 = vsel %vm545, %v542, %v544
      %v550 = vmul.f32 %v312, %v542
      %v551 = vmul.f32 %v308, %v546
      %v552 = vmul.f32 %v313, %v544
      %556 = vrot.lane.b32.xlu0 %v550, 126
      %v557 = vpop.permute.xlu0 %556
      %558 = vrot.lane.b32.xlu0 %v551, 126
      %v559 = vpop.permute.xlu0 %558
      %560 = vrot.lane.b32.xlu0 %v552, 126
      %v561 = vpop.permute.xlu0 %560
      %vm562 = vcmask 1031168
      %v563 = vsel %vm562, %v557, %v559
      %v564 = vsel %vm562, %v559, %v561
      %v566 = vsel %vm371, %v320, 0
      %v568 = vsel %vm375, %v563, 0
      %v570 = vsel %vm375, %v564, 0
      %572 = vmatprep.subr.mxu0 %v570
      %573 = vmatpush1.msra.mxu0 %v568
      %574 = vmatprep.subr.mxu0 0.0
      %575 = vmatpush1.msra.mxu0 0.0
      %576 = vmatprep.subr.mxu0 0.0
      %577 = vmatpush1.msra.mxu0 0.0
      %578 = vmatprep.subr.mxu0 0.0
      %579 = vmatpush1.msra.mxu0 0.0
      %580 = vmatprep.subr.mxu0 0.0
      %581 = vmatpush1.msra.mxu0 0.0
      %582 = vmatprep.subr.mxu0 0.0
      %583 = vmatpush1.msra.mxu0 0.0
      %584 = vmatprep.subr.mxu0 0.0
      %585 = vmatpush1.msra.mxu0 0.0
      %586 = vmatprep.subr.mxu0 0.0
      %587 = vmatpush1.msra.mxu0 0.0
      %588 = vmatprep.subr.mxu0 0.0
      %589 = vmatpush1.msra.mxu0 0.0
      %590 = vmatprep.subr.mxu0 0.0
      %591 = vmatpush1.msra.mxu0 0.0
      %592 = vmatprep.subr.mxu0 0.0
      %593 = vmatpush1.msra.mxu0 0.0
      %594 = vmatprep.subr.mxu0 0.0
      %595 = vmatpush1.msra.mxu0 0.0
      %596 = vmatprep.subr.mxu0 0.0
      %597 = vmatpush1.msra.mxu0 0.0
      %598 = vmatprep.subr.mxu0 0.0
      %599 = vmatpush1.msra.mxu0 0.0
      %600 = vmatprep.subr.mxu0 0.0
      %601 = vmatpush1.msra.mxu0 0.0
      %602 = vmatprep.subr.mxu0 0.0
      %603 = vmatpush1.msra.mxu0 0.0
      %604 = vmatprep.subr.mxu0 0.0
      %605 = vmatpush1.msra.mxu0 0.0
      %606 = vmatprep.subr.mxu0 0.0
      %607 = vmatpush1.msra.mxu0 0.0
      %608 = vmatprep.subr.mxu0 0.0
      %609 = vmatpush1.msra.mxu0 0.0
      %610 = vmatprep.subr.mxu0 0.0
      %611 = vmatpush1.msra.mxu0 0.0
      %612 = vmatprep.subr.mxu0 0.0
      %613 = vmatpush1.msra.mxu0 0.0
      %614 = vmatprep.subr.mxu0 0.0
      %615 = vmatpush1.msra.mxu0 0.0
      %616 = vmatprep.subr.mxu0 0.0
      %617 = vmatpush1.msra.mxu0 0.0
      %618 = vmatprep.subr.mxu0 0.0
      %619 = vmatpush1.msra.mxu0 0.0
      %620 = vmatprep.subr.mxu0 0.0
      %621 = vmatpush1.msra.mxu0 0.0
      %622 = vmatprep.subr.mxu0 0.0
      %623 = vmatpush1.msra.mxu0 0.0
      %624 = vmatprep.subr.mxu0 0.0
      %625 = vmatpush1.msra.mxu0 0.0
      %626 = vmatprep.subr.mxu0 0.0
      %627 = vmatpush1.msra.mxu0 0.0
      %628 = vmatprep.subr.mxu0 0.0
      %629 = vmatpush1.msra.mxu0 0.0
      %630 = vmatprep.subr.mxu0 0.0
      %631 = vmatpush1.msra.mxu0 0.0
      %632 = vmatprep.subr.mxu0 0.0
      %633 = vmatpush1.msra.mxu0 0.0
      %634 = vmatprep.subr.mxu0 0.0
      %635 = vmatpush1.msra.mxu0 0.0
      %636 = vmatprep.mubr.f32.mxu0 0.0
      %637 = vmatmul.mubr.f32.gmra.mrb[0].mxu0 %v566
      %v638 = vpop.f32.mrb[0].mxu0
      %v639 = vadd.f32 0.0, %v638
      %v640 = vpop.f32.mrb[0].mxu0
      %v641 = vadd.f32 0.0, %v640
      %642 = vdwg.mxu0
      %v643 = vadd.f32 %v527, %v639
      %v644 = vadd.f32 %v529, %v641
      %v645 = vlaneseq
      %v646 = vshrl.u32 %v645, 7
      %v647 = vsub.s32 3, %v646
      %v648 = vrot.slane %v314, %v647
      %v649 = vlaneseq
      %v650 = vshrl.u32 %v649, 7
      %v651 = vsub.s32 3, %v650
      %v652 = vrot.slane %v315, %v651
      %655 = vrot.lane.b32.xlu0 %v648, 16
      %v656 = vpop.permute.xlu0 %655
      %657 = vrot.lane.b32.xlu0 %v652, 16
      %v658 = vpop.permute.xlu0 %657
      %vm659 = vcmask 130048
      %v660 = vsel %vm659, %v656, %v658
      %v664 = vmul.f32 %v312, %v656
      %v665 = vmul.f32 %v308, %v660
      %v666 = vmul.f32 %v313, %v658
      %670 = vrot.lane.b32.xlu0 %v664, 112
      %v671 = vpop.permute.xlu0 %670
      %672 = vrot.lane.b32.xlu0 %v665, 112
      %v673 = vpop.permute.xlu0 %672
      %674 = vrot.lane.b32.xlu0 %v666, 112
      %v675 = vpop.permute.xlu0 %674
      %vm676 = vcmask 916480
      %v677 = vsel %vm676, %v671, %v673
      %v678 = vsel %vm676, %v673, %v675
      %v680 = vsel %vm371, %v321, 0
      %v682 = vsel %vm375, %v677, 0
      %v684 = vsel %vm375, %v678, 0
      %686 = vmatprep.subr.mxu0 %v684
      %687 = vmatpush1.msra.mxu0 %v682
      %688 = vmatprep.subr.mxu0 0.0
      %689 = vmatpush1.msra.mxu0 0.0
      %690 = vmatprep.subr.mxu0 0.0
      %691 = vmatpush1.msra.mxu0 0.0
      %692 = vmatprep.subr.mxu0 0.0
      %693 = vmatpush1.msra.mxu0 0.0
      %694 = vmatprep.subr.mxu0 0.0
      %695 = vmatpush1.msra.mxu0 0.0
      %696 = vmatprep.subr.mxu0 0.0
      %697 = vmatpush1.msra.mxu0 0.0
      %698 = vmatprep.subr.mxu0 0.0
      %699 = vmatpush1.msra.mxu0 0.0
      %700 = vmatprep.subr.mxu0 0.0
      %701 = vmatpush1.msra.mxu0 0.0
      %702 = vmatprep.subr.mxu0 0.0
      %703 = vmatpush1.msra.mxu0 0.0
      %704 = vmatprep.subr.mxu0 0.0
      %705 = vmatpush1.msra.mxu0 0.0
      %706 = vmatprep.subr.mxu0 0.0
      %707 = vmatpush1.msra.mxu0 0.0
      %708 = vmatprep.subr.mxu0 0.0
      %709 = vmatpush1.msra.mxu0 0.0
      %710 = vmatprep.subr.mxu0 0.0
      %711 = vmatpush1.msra.mxu0 0.0
      %712 = vmatprep.subr.mxu0 0.0
      %713 = vmatpush1.msra.mxu0 0.0
      %714 = vmatprep.subr.mxu0 0.0
      %715 = vmatpush1.msra.mxu0 0.0
      %716 = vmatprep.subr.mxu0 0.0
      %717 = vmatpush1.msra.mxu0 0.0
      %718 = vmatprep.subr.mxu0 0.0
      %719 = vmatpush1.msra.mxu0 0.0
      %720 = vmatprep.subr.mxu0 0.0
      %721 = vmatpush1.msra.mxu0 0.0
      %722 = vmatprep.subr.mxu0 0.0
      %723 = vmatpush1.msra.mxu0 0.0
      %724 = vmatprep.subr.mxu0 0.0
      %725 = vmatpush1.msra.mxu0 0.0
      %726 = vmatprep.subr.mxu0 0.0
      %727 = vmatpush1.msra.mxu0 0.0
      %728 = vmatprep.subr.mxu0 0.0
      %729 = vmatpush1.msra.mxu0 0.0
      %730 = vmatprep.subr.mxu0 0.0
      %731 = vmatpush1.msra.mxu0 0.0
      %732 = vmatprep.subr.mxu0 0.0
      %733 = vmatpush1.msra.mxu0 0.0
      %734 = vmatprep.subr.mxu0 0.0
      %735 = vmatpush1.msra.mxu0 0.0
      %736 = vmatprep.subr.mxu0 0.0
      %737 = vmatpush1.msra.mxu0 0.0
      %738 = vmatprep.subr.mxu0 0.0
      %739 = vmatpush1.msra.mxu0 0.0
      %740 = vmatprep.subr.mxu0 0.0
      %741 = vmatpush1.msra.mxu0 0.0
      %742 = vmatprep.subr.mxu0 0.0
      %743 = vmatpush1.msra.mxu0 0.0
      %744 = vmatprep.subr.mxu0 0.0
      %745 = vmatpush1.msra.mxu0 0.0
      %746 = vmatprep.subr.mxu0 0.0
      %747 = vmatpush1.msra.mxu0 0.0
      %748 = vmatprep.subr.mxu0 0.0
      %749 = vmatpush1.msra.mxu0 0.0
      %750 = vmatprep.mubr.f32.mxu0 0.0
      %751 = vmatmul.mubr.f32.gmra.mrb[0].mxu0 %v680
      %v752 = vpop.f32.mrb[0].mxu0
      %v753 = vadd.f32 0.0, %v752
      %v754 = vpop.f32.mrb[0].mxu0
      %v755 = vadd.f32 0.0, %v754
      %756 = vdwg.mxu0
      %v757 = vadd.f32 %v643, %v753
      %v758 = vadd.f32 %v644, %v755
      %v759 = vlaneseq
      %v760 = vshrl.u32 %v759, 7
      %v761 = vsub.s32 4, %v760
      %v762 = vrot.slane %v314, %v761
      %v763 = vlaneseq
      %v764 = vshrl.u32 %v763, 7
      %v765 = vsub.s32 4, %v764
      %v766 = vrot.slane %v315, %v765
      %769 = vrot.lane.b32.xlu0 %v762, 17
      %v770 = vpop.permute.xlu0 %769
      %771 = vrot.lane.b32.xlu0 %v766, 17
      %v772 = vpop.permute.xlu0 %771
      %v773 = vsel %vm307, %v770, %v772
      %v777 = vmul.f32 %v312, %v770
      %v778 = vmul.f32 %v308, %v773
      %v779 = vmul.f32 %v313, %v772
      %783 = vrot.lane.b32.xlu0 %v777, 111
      %v784 = vpop.permute.xlu0 %783
      %785 = vrot.lane.b32.xlu0 %v778, 111
      %v786 = vpop.permute.xlu0 %785
      %787 = vrot.lane.b32.xlu0 %v779, 111
      %v788 = vpop.permute.xlu0 %787
      %vm789 = vcmask 908288
      %v790 = vsel %vm789, %v784, %v786
      %v791 = vsel %vm789, %v786, %v788
      %v793 = vsel %vm371, %v322, 0
      %v795 = vsel %vm375, %v790, 0
      %v797 = vsel %vm375, %v791, 0
      %799 = vmatprep.subr.mxu0 %v797
      %800 = vmatpush1.msra.mxu0 %v795
      %801 = vmatprep.subr.mxu0 0.0
      %802 = vmatpush1.msra.mxu0 0.0
      %803 = vmatprep.subr.mxu0 0.0
      %804 = vmatpush1.msra.mxu0 0.0
      %805 = vmatprep.subr.mxu0 0.0
      %806 = vmatpush1.msra.mxu0 0.0
      %807 = vmatprep.subr.mxu0 0.0
      %808 = vmatpush1.msra.mxu0 0.0
      %809 = vmatprep.subr.mxu0 0.0
      %810 = vmatpush1.msra.mxu0 0.0
      %811 = vmatprep.subr.mxu0 0.0
      %812 = vmatpush1.msra.mxu0 0.0
      %813 = vmatprep.subr.mxu0 0.0
      %814 = vmatpush1.msra.mxu0 0.0
      %815 = vmatprep.subr.mxu0 0.0
      %816 = vmatpush1.msra.mxu0 0.0
      %817 = vmatprep.subr.mxu0 0.0
      %818 = vmatpush1.msra.mxu0 0.0
      %819 = vmatprep.subr.mxu0 0.0
      %820 = vmatpush1.msra.mxu0 0.0
      %821 = vmatprep.subr.mxu0 0.0
      %822 = vmatpush1.msra.mxu0 0.0
      %823 = vmatprep.subr.mxu0 0.0
      %824 = vmatpush1.msra.mxu0 0.0
      %825 = vmatprep.subr.mxu0 0.0
      %826 = vmatpush1.msra.mxu0 0.0
      %827 = vmatprep.subr.mxu0 0.0
      %828 = vmatpush1.msra.mxu0 0.0
      %829 = vmatprep.subr.mxu0 0.0
      %830 = vmatpush1.msra.mxu0 0.0
      %831 = vmatprep.subr.mxu0 0.0
      %832 = vmatpush1.msra.mxu0 0.0
      %833 = vmatprep.subr.mxu0 0.0
      %834 = vmatpush1.msra.mxu0 0.0
      %835 = vmatprep.subr.mxu0 0.0
      %836 = vmatpush1.msra.mxu0 0.0
      %837 = vmatprep.subr.mxu0 0.0
      %838 = vmatpush1.msra.mxu0 0.0
      %839 = vmatprep.subr.mxu0 0.0
      %840 = vmatpush1.msra.mxu0 0.0
      %841 = vmatprep.subr.mxu0 0.0
      %842 = vmatpush1.msra.mxu0 0.0
      %843 = vmatprep.subr.mxu0 0.0
      %844 = vmatpush1.msra.mxu0 0.0
      %845 = vmatprep.subr.mxu0 0.0
      %846 = vmatpush1.msra.mxu0 0.0
      %847 = vmatprep.subr.mxu0 0.0
      %848 = vmatpush1.msra.mxu0 0.0
      %849 = vmatprep.subr.mxu0 0.0
      %850 = vmatpush1.msra.mxu0 0.0
      %851 = vmatprep.subr.mxu0 0.0
      %852 = vmatpush1.msra.mxu0 0.0
      %853 = vmatprep.subr.mxu0 0.0
      %854 = vmatpush1.msra.mxu0 0.0
      %855 = vmatprep.subr.mxu0 0.0
      %856 = vmatpush1.msra.mxu0 0.0
      %857 = vmatprep.subr.mxu0 0.0
      %858 = vmatpush1.msra.mxu0 0.0
      %859 = vmatprep.subr.mxu0 0.0
      %860 = vmatpush1.msra.mxu0 0.0
      %861 = vmatprep.subr.mxu0 0.0
      %862 = vmatpush1.msra.mxu0 0.0
      %863 = vmatprep.mubr.f32.mxu0 0.0
      %864 = vmatmul.mubr.f32.gmra.mrb[0].mxu0 %v793
      %v865 = vpop.f32.mrb[0].mxu0
      %v866 = vadd.f32 0.0, %v865
      %v867 = vpop.f32.mrb[0].mxu0
      %v868 = vadd.f32 0.0, %v867
      %869 = vdwg.mxu0
      %v870 = vadd.f32 %v757, %v866
      %v871 = vadd.f32 %v758, %v868
      %v872 = vlaneseq
      %v873 = vshrl.u32 %v872, 7
      %v874 = vsub.s32 5, %v873
      %v875 = vrot.slane %v314, %v874
      %v876 = vlaneseq
      %v877 = vshrl.u32 %v876, 7
      %v878 = vsub.s32 5, %v877
      %v879 = vrot.slane %v315, %v878
      %882 = vrot.lane.b32.xlu0 %v875, 18
      %v883 = vpop.permute.xlu0 %882
      %884 = vrot.lane.b32.xlu0 %v879, 18
      %v885 = vpop.permute.xlu0 %884
      %vm886 = vcmask 146432
      %v887 = vsel %vm886, %v883, %v885
      %v891 = vmul.f32 %v312, %v883
      %v892 = vmul.f32 %v308, %v887
      %v893 = vmul.f32 %v313, %v885
      %897 = vrot.lane.b32.xlu0 %v891, 110
      %v898 = vpop.permute.xlu0 %897
      %899 = vrot.lane.b32.xlu0 %v892, 110
      %v900 = vpop.permute.xlu0 %899
      %901 = vrot.lane.b32.xlu0 %v893, 110
      %v902 = vpop.permute.xlu0 %901
      %vm903 = vcmask 900096
      %v904 = vsel %vm903, %v898, %v900
      %v905 = vsel %vm903, %v900, %v902
      %v907 = vsel %vm371, %v323, 0
      %v909 = vsel %vm375, %v904, 0
      %v911 = vsel %vm375, %v905, 0
      %913 = vmatprep.subr.mxu0 %v911
      %914 = vmatpush1.msra.mxu0 %v909
      %915 = vmatprep.subr.mxu0 0.0
      %916 = vmatpush1.msra.mxu0 0.0
      %917 = vmatprep.subr.mxu0 0.0
      %918 = vmatpush1.msra.mxu0 0.0
      %919 = vmatprep.subr.mxu0 0.0
      %920 = vmatpush1.msra.mxu0 0.0
      %921 = vmatprep.subr.mxu0 0.0
      %922 = vmatpush1.msra.mxu0 0.0
      %923 = vmatprep.subr.mxu0 0.0
      %924 = vmatpush1.msra.mxu0 0.0
      %925 = vmatprep.subr.mxu0 0.0
      %926 = vmatpush1.msra.mxu0 0.0
      %927 = vmatprep.subr.mxu0 0.0
      %928 = vmatpush1.msra.mxu0 0.0
      %929 = vmatprep.subr.mxu0 0.0
      %930 = vmatpush1.msra.mxu0 0.0
      %931 = vmatprep.subr.mxu0 0.0
      %932 = vmatpush1.msra.mxu0 0.0
      %933 = vmatprep.subr.mxu0 0.0
      %934 = vmatpush1.msra.mxu0 0.0
      %935 = vmatprep.subr.mxu0 0.0
      %936 = vmatpush1.msra.mxu0 0.0
      %937 = vmatprep.subr.mxu0 0.0
      %938 = vmatpush1.msra.mxu0 0.0
      %939 = vmatprep.subr.mxu0 0.0
      %940 = vmatpush1.msra.mxu0 0.0
      %941 = vmatprep.subr.mxu0 0.0
      %942 = vmatpush1.msra.mxu0 0.0
      %943 = vmatprep.subr.mxu0 0.0
      %944 = vmatpush1.msra.mxu0 0.0
      %945 = vmatprep.subr.mxu0 0.0
      %946 = vmatpush1.msra.mxu0 0.0
      %947 = vmatprep.subr.mxu0 0.0
      %948 = vmatpush1.msra.mxu0 0.0
      %949 = vmatprep.subr.mxu0 0.0
      %950 = vmatpush1.msra.mxu0 0.0
      %951 = vmatprep.subr.mxu0 0.0
      %952 = vmatpush1.msra.mxu0 0.0
      %953 = vmatprep.subr.mxu0 0.0
      %954 = vmatpush1.msra.mxu0 0.0
      %955 = vmatprep.subr.mxu0 0.0
      %956 = vmatpush1.msra.mxu0 0.0
      %957 = vmatprep.subr.mxu0 0.0
      %958 = vmatpush1.msra.mxu0 0.0
      %959 = vmatprep.subr.mxu0 0.0
      %960 = vmatpush1.msra.mxu0 0.0
      %961 = vmatprep.subr.mxu0 0.0
      %962 = vmatpush1.msra.mxu0 0.0
      %963 = vmatprep.subr.mxu0 0.0
      %964 = vmatpush1.msra.mxu0 0.0
      %965 = vmatprep.subr.mxu0 0.0
      %966 = vmatpush1.msra.mxu0 0.0
      %967 = vmatprep.subr.mxu0 0.0
      %968 = vmatpush1.msra.mxu0 0.0
      %969 = vmatprep.subr.mxu0 0.0
      %970 = vmatpush1.msra.mxu0 0.0
      %971 = vmatprep.subr.mxu0 0.0
      %972 = vmatpush1.msra.mxu0 0.0
      %973 = vmatprep.subr.mxu0 0.0
      %974 = vmatpush1.msra.mxu0 0.0
      %975 = vmatprep.subr.mxu0 0.0
      %976 = vmatpush1.msra.mxu0 0.0
      %977 = vmatprep.mubr.f32.mxu0 0.0
      %978 = vmatmul.mubr.f32.gmra.mrb[0].mxu0 %v907
      %v979 = vpop.f32.mrb[0].mxu0
      %v980 = vadd.f32 0.0, %v979
      %v981 = vpop.f32.mrb[0].mxu0
      %v982 = vadd.f32 0.0, %v981
      %983 = vdwg.mxu0
      %v984 = vadd.f32 %v870, %v980
      %v985 = vadd.f32 %v871, %v982
      %v986 = vlaneseq
      %v987 = vshrl.u32 %v986, 7
      %v988 = vsub.s32 6, %v987
      %v989 = vrot.slane %v314, %v988
      %v990 = vlaneseq
      %v991 = vshrl.u32 %v990, 7
      %v992 = vsub.s32 6, %v991
      %v993 = vrot.slane %v315, %v992
      %996 = vrot.lane.b32.xlu0 %v989, 32
      %v997 = vpop.permute.xlu0 %996
      %998 = vrot.lane.b32.xlu0 %v993, 32
      %v999 = vpop.permute.xlu0 %998
      %vm1000 = vcmask 261120
      %v1001 = vsel %vm1000, %v997, %v999
      %v1005 = vmul.f32 %v312, %v997
      %v1006 = vmul.f32 %v308, %v1001
      %v1007 = vmul.f32 %v313, %v999
      %1011 = vrot.lane.b32.xlu0 %v1005, 96
      %v1012 = vpop.permute.xlu0 %1011
      %1013 = vrot.lane.b32.xlu0 %v1006, 96
      %v1014 = vpop.permute.xlu0 %1013
      %1015 = vrot.lane.b32.xlu0 %v1007, 96
      %v1016 = vpop.permute.xlu0 %1015
      %vm1017 = vcmask 785408
      %v1018 = vsel %vm1017, %v1012, %v1014
      %v1019 = vsel %vm1017, %v1014, %v1016
      %v1021 = vsel %vm371, %v324, 0
      %v1023 = vsel %vm375, %v1018, 0
      %v1025 = vsel %vm375, %v1019, 0
      %1027 = vmatprep.subr.mxu0 %v1025
      %1028 = vmatpush1.msra.mxu0 %v1023
      %1029 = vmatprep.subr.mxu0 0.0
      %1030 = vmatpush1.msra.mxu0 0.0
      %1031 = vmatprep.subr.mxu0 0.0
      %1032 = vmatpush1.msra.mxu0 0.0
      %1033 = vmatprep.subr.mxu0 0.0
      %1034 = vmatpush1.msra.mxu0 0.0
      %1035 = vmatprep.subr.mxu0 0.0
      %1036 = vmatpush1.msra.mxu0 0.0
      %1037 = vmatprep.subr.mxu0 0.0
      %1038 = vmatpush1.msra.mxu0 0.0
      %1039 = vmatprep.subr.mxu0 0.0
      %1040 = vmatpush1.msra.mxu0 0.0
      %1041 = vmatprep.subr.mxu0 0.0
      %1042 = vmatpush1.msra.mxu0 0.0
      %1043 = vmatprep.subr.mxu0 0.0
      %1044 = vmatpush1.msra.mxu0 0.0
      %1045 = vmatprep.subr.mxu0 0.0
      %1046 = vmatpush1.msra.mxu0 0.0
      %1047 = vmatprep.subr.mxu0 0.0
      %1048 = vmatpush1.msra.mxu0 0.0
      %1049 = vmatprep.subr.mxu0 0.0
      %1050 = vmatpush1.msra.mxu0 0.0
      %1051 = vmatprep.subr.mxu0 0.0
      %1052 = vmatpush1.msra.mxu0 0.0
      %1053 = vmatprep.subr.mxu0 0.0
      %1054 = vmatpush1.msra.mxu0 0.0
      %1055 = vmatprep.subr.mxu0 0.0
      %1056 = vmatpush1.msra.mxu0 0.0
      %1057 = vmatprep.subr.mxu0 0.0
      %1058 = vmatpush1.msra.mxu0 0.0
      %1059 = vmatprep.subr.mxu0 0.0
      %1060 = vmatpush1.msra.mxu0 0.0
      %1061 = vmatprep.subr.mxu0 0.0
      %1062 = vmatpush1.msra.mxu0 0.0
      %1063 = vmatprep.subr.mxu0 0.0
      %1064 = vmatpush1.msra.mxu0 0.0
      %1065 = vmatprep.subr.mxu0 0.0
      %1066 = vmatpush1.msra.mxu0 0.0
      %1067 = vmatprep.subr.mxu0 0.0
      %1068 = vmatpush1.msra.mxu0 0.0
      %1069 = vmatprep.subr.mxu0 0.0
      %1070 = vmatpush1.msra.mxu0 0.0
      %1071 = vmatprep.subr.mxu0 0.0
      %1072 = vmatpush1.msra.mxu0 0.0
      %1073 = vmatprep.subr.mxu0 0.0
      %1074 = vmatpush1.msra.mxu0 0.0
      %1075 = vmatprep.subr.mxu0 0.0
      %1076 = vmatpush1.msra.mxu0 0.0
      %1077 = vmatprep.subr.mxu0 0.0
      %1078 = vmatpush1.msra.mxu0 0.0
      %1079 = vmatprep.subr.mxu0 0.0
      %1080 = vmatpush1.msra.mxu0 0.0
      %1081 = vmatprep.subr.mxu0 0.0
      %1082 = vmatpush1.msra.mxu0 0.0
      %1083 = vmatprep.subr.mxu0 0.0
      %1084 = vmatpush1.msra.mxu0 0.0
      %1085 = vmatprep.subr.mxu0 0.0
      %1086 = vmatpush1.msra.mxu0 0.0
      %1087 = vmatprep.subr.mxu0 0.0
      %1088 = vmatpush1.msra.mxu0 0.0
      %1089 = vmatprep.subr.mxu0 0.0
      %1090 = vmatpush1.msra.mxu0 0.0
      %1091 = vmatprep.mubr.f32.mxu0 0.0
      %1092 = vmatmul.mubr.f32.gmra.mrb[0].mxu0 %v1021
      %v1093 = vpop.f32.mrb[0].mxu0
      %v1094 = vadd.f32 0.0, %v1093
      %v1095 = vpop.f32.mrb[0].mxu0
      %v1096 = vadd.f32 0.0, %v1095
      %1097 = vdwg.mxu0
      %v1098 = vadd.f32 %v984, %v1094
      %v1099 = vadd.f32 %v985, %v1096
      %v1100 = vlaneseq
      %v1101 = vshrl.u32 %v1100, 7
      %v1102 = vsub.s32 7, %v1101
      %v1103 = vrot.slane %v314, %v1102
      %v1104 = vlaneseq
      %v1105 = vshrl.u32 %v1104, 7
      %v1106 = vsub.s32 7, %v1105
      %v1107 = vrot.slane %v315, %v1106
      %1110 = vrot.lane.b32.xlu0 %v1103, 33
      %v1111 = vpop.permute.xlu0 %1110
      %1112 = vrot.lane.b32.xlu0 %v1107, 33
      %v1113 = vpop.permute.xlu0 %1112
      %vm1114 = vcmask 269312
      %v1115 = vsel %vm1114, %v1111, %v1113
      %v1119 = vmul.f32 %v312, %v1111
      %v1120 = vmul.f32 %v308, %v1115
      %v1121 = vmul.f32 %v313, %v1113
      %1125 = vrot.lane.b32.xlu0 %v1119, 95
      %v1126 = vpop.permute.xlu0 %1125
      %1127 = vrot.lane.b32.xlu0 %v1120, 95
      %v1128 = vpop.permute.xlu0 %1127
      %1129 = vrot.lane.b32.xlu0 %v1121, 95
      %v1130 = vpop.permute.xlu0 %1129
      %vm1131 = vcmask 777216
      %v1132 = vsel %vm1131, %v1126, %v1128
      %v1133 = vsel %vm1131, %v1128, %v1130
      %v1135 = vsel %vm371, %v325, 0
      %v1137 = vsel %vm375, %v1132, 0
      %v1139 = vsel %vm375, %v1133, 0
      %1141 = vmatprep.subr.mxu0 %v1139
      %1142 = vmatpush1.msra.mxu0 %v1137
      %1143 = vmatprep.subr.mxu0 0.0
      %1144 = vmatpush1.msra.mxu0 0.0
      %1145 = vmatprep.subr.mxu0 0.0
      %1146 = vmatpush1.msra.mxu0 0.0
      %1147 = vmatprep.subr.mxu0 0.0
      %1148 = vmatpush1.msra.mxu0 0.0
      %1149 = vmatprep.subr.mxu0 0.0
      %1150 = vmatpush1.msra.mxu0 0.0
      %1151 = vmatprep.subr.mxu0 0.0
      %1152 = vmatpush1.msra.mxu0 0.0
      %1153 = vmatprep.subr.mxu0 0.0
      %1154 = vmatpush1.msra.mxu0 0.0
      %1155 = vmatprep.subr.mxu0 0.0
      %1156 = vmatpush1.msra.mxu0 0.0
      %1157 = vmatprep.subr.mxu0 0.0
      %1158 = vmatpush1.msra.mxu0 0.0
      %1159 = vmatprep.subr.mxu0 0.0
      %1160 = vmatpush1.msra.mxu0 0.0
      %1161 = vmatprep.subr.mxu0 0.0
      %1162 = vmatpush1.msra.mxu0 0.0
      %1163 = vmatprep.subr.mxu0 0.0
      %1164 = vmatpush1.msra.mxu0 0.0
      %1165 = vmatprep.subr.mxu0 0.0
      %1166 = vmatpush1.msra.mxu0 0.0
      %1167 = vmatprep.subr.mxu0 0.0
      %1168 = vmatpush1.msra.mxu0 0.0
      %1169 = vmatprep.subr.mxu0 0.0
      %1170 = vmatpush1.msra.mxu0 0.0
      %1171 = vmatprep.subr.mxu0 0.0
      %1172 = vmatpush1.msra.mxu0 0.0
      %1173 = vmatprep.subr.mxu0 0.0
      %1174 = vmatpush1.msra.mxu0 0.0
      %1175 = vmatprep.subr.mxu0 0.0
      %1176 = vmatpush1.msra.mxu0 0.0
      %1177 = vmatprep.subr.mxu0 0.0
      %1178 = vmatpush1.msra.mxu0 0.0
      %1179 = vmatprep.subr.mxu0 0.0
      %1180 = vmatpush1.msra.mxu0 0.0
      %1181 = vmatprep.subr.mxu0 0.0
      %1182 = vmatpush1.msra.mxu0 0.0
      %1183 = vmatprep.subr.mxu0 0.0
      %1184 = vmatpush1.msra.mxu0 0.0
      %1185 = vmatprep.subr.mxu0 0.0
      %1186 = vmatpush1.msra.mxu0 0.0
      %1187 = vmatprep.subr.mxu0 0.0
      %1188 = vmatpush1.msra.mxu0 0.0
      %1189 = vmatprep.subr.mxu0 0.0
      %1190 = vmatpush1.msra.mxu0 0.0
      %1191 = vmatprep.subr.mxu0 0.0
      %1192 = vmatpush1.msra.mxu0 0.0
      %1193 = vmatprep.subr.mxu0 0.0
      %1194 = vmatpush1.msra.mxu0 0.0
      %1195 = vmatprep.subr.mxu0 0.0
      %1196 = vmatpush1.msra.mxu0 0.0
      %1197 = vmatprep.subr.mxu0 0.0
      %1198 = vmatpush1.msra.mxu0 0.0
      %1199 = vmatprep.subr.mxu0 0.0
      %1200 = vmatpush1.msra.mxu0 0.0
      %1201 = vmatprep.subr.mxu0 0.0
      %1202 = vmatpush1.msra.mxu0 0.0
      %1203 = vmatprep.subr.mxu0 0.0
      %1204 = vmatpush1.msra.mxu0 0.0
      %1205 = vmatprep.mubr.f32.mxu0 0.0
      %1206 = vmatmul.mubr.f32.gmra.mrb[0].mxu0 %v1135
      %v1207 = vpop.f32.mrb[0].mxu0
      %v1208 = vadd.f32 0.0, %v1207
      %v1209 = vpop.f32.mrb[0].mxu0
      %v1210 = vadd.f32 0.0, %v1209
      %1211 = vdwg.mxu0
      %v1212 = vadd.f32 %v1098, %v1208
      %v1213 = vadd.f32 %v1099, %v1210
      %v1214 = vlaneseq
      %v1215 = vshrl.u32 %v1214, 7
      %v1216 = vsub.s32 0, %v1215
      %v1217 = vrot.slane %v316, %v1216
      %v1218 = vlaneseq
      %v1219 = vshrl.u32 %v1218, 7
      %v1220 = vsub.s32 0, %v1219
      %v1221 = vrot.slane %v317, %v1220
      %1224 = vrot.lane.b32.xlu0 %v1217, 34
      %v1225 = vpop.permute.xlu0 %1224
      %1226 = vrot.lane.b32.xlu0 %v1221, 34
      %v1227 = vpop.permute.xlu0 %1226
      %vm1228 = vcmask 277504
      %v1229 = vsel %vm1228, %v1225, %v1227
      %v1233 = vmul.f32 %v312, %v1225
      %v1234 = vmul.f32 %v308, %v1229
      %v1235 = vmul.f32 %v313, %v1227
      %1239 = vrot.lane.b32.xlu0 %v1233, 94
      %v1240 = vpop.permute.xlu0 %1239
      %1241 = vrot.lane.b32.xlu0 %v1234, 94
      %v1242 = vpop.permute.xlu0 %1241
      %1243 = vrot.lane.b32.xlu0 %v1235, 94
      %v1244 = vpop.permute.xlu0 %1243
      %vm1245 = vcmask 769024
      %v1246 = vsel %vm1245, %v1240, %v1242
      %v1247 = vsel %vm1245, %v1242, %v1244
      %v1249 = vsel %vm371, %v326, 0
      %v1251 = vsel %vm375, %v1246, 0
      %v1253 = vsel %vm375, %v1247, 0
      %1255 = vmatprep.subr.mxu0 %v1253
      %1256 = vmatpush1.msra.mxu0 %v1251
      %1257 = vmatprep.subr.mxu0 0.0
      %1258 = vmatpush1.msra.mxu0 0.0
      %1259 = vmatprep.subr.mxu0 0.0
      %1260 = vmatpush1.msra.mxu0 0.0
      %1261 = vmatprep.subr.mxu0 0.0
      %1262 = vmatpush1.msra.mxu0 0.0
      %1263 = vmatprep.subr.mxu0 0.0
      %1264 = vmatpush1.msra.mxu0 0.0
      %1265 = vmatprep.subr.mxu0 0.0
      %1266 = vmatpush1.msra.mxu0 0.0
      %1267 = vmatprep.subr.mxu0 0.0
      %1268 = vmatpush1.msra.mxu0 0.0
      %1269 = vmatprep.subr.mxu0 0.0
      %1270 = vmatpush1.msra.mxu0 0.0
      %1271 = vmatprep.subr.mxu0 0.0
      %1272 = vmatpush1.msra.mxu0 0.0
      %1273 = vmatprep.subr.mxu0 0.0
      %1274 = vmatpush1.msra.mxu0 0.0
      %1275 = vmatprep.subr.mxu0 0.0
      %1276 = vmatpush1.msra.mxu0 0.0
      %1277 = vmatprep.subr.mxu0 0.0
      %1278 = vmatpush1.msra.mxu0 0.0
      %1279 = vmatprep.subr.mxu0 0.0
      %1280 = vmatpush1.msra.mxu0 0.0
      %1281 = vmatprep.subr.mxu0 0.0
      %1282 = vmatpush1.msra.mxu0 0.0
      %1283 = vmatprep.subr.mxu0 0.0
      %1284 = vmatpush1.msra.mxu0 0.0
      %1285 = vmatprep.subr.mxu0 0.0
      %1286 = vmatpush1.msra.mxu0 0.0
      %1287 = vmatprep.subr.mxu0 0.0
      %1288 = vmatpush1.msra.mxu0 0.0
      %1289 = vmatprep.subr.mxu0 0.0
      %1290 = vmatpush1.msra.mxu0 0.0
      %1291 = vmatprep.subr.mxu0 0.0
      %1292 = vmatpush1.msra.mxu0 0.0
      %1293 = vmatprep.subr.mxu0 0.0
      %1294 = vmatpush1.msra.mxu0 0.0
      %1295 = vmatprep.subr.mxu0 0.0
      %1296 = vmatpush1.msra.mxu0 0.0
      %1297 = vmatprep.subr.mxu0 0.0
      %1298 = vmatpush1.msra.mxu0 0.0
      %1299 = vmatprep.subr.mxu0 0.0
      %1300 = vmatpush1.msra.mxu0 0.0
      %1301 = vmatprep.subr.mxu0 0.0
      %1302 = vmatpush1.msra.mxu0 0.0
      %1303 = vmatprep.subr.mxu0 0.0
      %1304 = vmatpush1.msra.mxu0 0.0
      %1305 = vmatprep.subr.mxu0 0.0
      %1306 = vmatpush1.msra.mxu0 0.0
      %1307 = vmatprep.subr.mxu0 0.0
      %1308 = vmatpush1.msra.mxu0 0.0
      %1309 = vmatprep.subr.mxu0 0.0
      %1310 = vmatpush1.msra.mxu0 0.0
      %1311 = vmatprep.subr.mxu0 0.0
      %1312 = vmatpush1.msra.mxu0 0.0
      %1313 = vmatprep.subr.mxu0 0.0
      %1314 = vmatpush1.msra.mxu0 0.0
      %1315 = vmatprep.subr.mxu0 0.0
      %1316 = vmatpush1.msra.mxu0 0.0
      %1317 = vmatprep.subr.mxu0 0.0
      %1318 = vmatpush1.msra.mxu0 0.0
      %1319 = vmatprep.mubr.f32.mxu0 0.0
      %1320 = vmatmul.mubr.f32.gmra.mrb[0].mxu0 %v1249
      %v1321 = vpop.f32.mrb[0].mxu0
      %v1322 = vadd.f32 0.0, %v1321
      %v1323 = vpop.f32.mrb[0].mxu0
      %v1324 = vadd.f32 0.0, %v1323
      %1325 = vdwg.mxu0
      %v1326 = vadd.f32 %v1212, %v1322
      %v1327 = vadd.f32 %v1213, %v1324
      %1328 = vst [vmem:[%s291] sm:$0xff] %v1326
      %1329 = vst [vmem:[%s291 + $0x8] sm:$0xff] %v1327
      %v1330 = vadd.f32 %v1326, %v1327
      %1331 = vadd.xlane.f32.xlu0 %v1330
      %v1332 = vpop.xlane.xlu0 %1331
      %1333 = vst.msk [vmem:[%s295] sm:$0xff] %vm351, %v1332
      %v1334 = vmul.f32 %v1326, %v1326
      %v1335 = vmul.f32 %v1327, %v1327
      %v1336 = vadd.f32 %v1334, %v1335
      %1337 = vadd.xlane.f32.xlu0 %v1336
      %v1338 = vpop.xlane.xlu0 %1337
      %1339 = vst.msk [vmem:[%s299] sm:$0xff] %vm351, %v1338
      %p1340 = scmp.lt.s32.totalorder %s19, 1
      %s1341 = scalar_select %p1340, %s19, 1
      %s1342 = smul.addr %s1341, 2
      %s1343 = smul.addr %s1342, 8
      %s1344 = scalar_lea.vmem %s5, %s1343
      %p1345 = scmp.lt.s32.totalorder %s19, 1
      %s1346 = scalar_select %p1345, %s19, 1
      %s1347 = smul.addr %s1346, 8
      %s1348 = scalar_lea.vmem %s6, %s1347
      %p1349 = scmp.lt.s32.totalorder %s19, 1
      %s1350 = scalar_select %p1349, %s19, 1
      %s1351 = smul.addr %s1350, 8
      %s1352 = scalar_lea.vmem %s7, %s1351
      // Predicated region
      $region41: #{basic_block_forward.3} parent=39 // pred_check
        %p1353 = pneg %p147
      $region42: #{basic_block_forward.3} parent=39 // pred_check_branch
        %1355 = sbr.rel (%p1353) target = $region44
      $region43: #{basic_block_forward.3} parent=39 // pred_region
        _
      $region44: #{basic_block_forward.3} parent=39 // pred_fallthru
        _
      // Predicated region
      $region45: #{basic_block_forward.3} parent=39 // pred_check
        %p1356 = pneg %p173
      $region46: #{basic_block_forward.3} parent=39 // pred_check_branch
        %1358 = sbr.rel (%p1356) target = $region48
      $region47: #{basic_block_forward.3} parent=39 // pred_region
        _
      $region48: #{basic_block_forward.3} parent=39 // pred_fallthru
        _
      // Predicated region
      $region49: #{basic_block_forward.3} parent=39 // pred_check
        %p1359 = pneg %p199
      $region50: #{basic_block_forward.3} parent=39 // pred_check_branch
        %1361 = sbr.rel (%p1359) target = $region52
      $region51: #{basic_block_forward.3} parent=39 // pred_region
        _
      $region52: #{basic_block_forward.3} parent=39 // pred_fallthru
        _
    $region40: #{basic_block_forward.3} parent=5 // pred_fallthru
      _
    %p1362 = scmp.le.s32.totalorder 2, %s14
    // Predicated region
    $region53: #{basic_block_forward.3} parent=5 // pred_check
      %p1363 = pneg %p1362
    $region54: #{basic_block_forward.3} parent=5 // pred_check_branch
      %1365 = sbr.rel (%p1363) target = $region56
    $region55: #{basic_block_forward.3} parent=5 // pred_region
      %s1366 = ssub.s32 %s14, 2
      // Predicated region
      $region57: #{basic_block_forward.3} parent=55 // pred_check
        %p1367 = pneg %p153
      $region58: #{basic_block_forward.3} parent=55 // pred_check_branch
        %1369 = sbr.rel (%p1367) target = $region60
      $region59: #{basic_block_forward.3} parent=55 // pred_region
        %p1370 = scmp.lt.s32.totalorder %s20, 1
        %s1371 = scalar_select %p1370, %s20, 1
        %s1372 = smul.addr %s1371, 2
        %s1373 = smul.addr %s1372, 8
        %s1374 = scalar_lea.vmem %s5, %s1373
      $region60: #{basic_block_forward.3} parent=55 // pred_fallthru
        _
      // Predicated region
      $region61: #{basic_block_forward.3} parent=55 // pred_check
        %p1375 = pneg %p179
      $region62: #{basic_block_forward.3} parent=55 // pred_check_branch
        %1377 = sbr.rel (%p1375) target = $region64
      $region63: #{basic_block_forward.3} parent=55 // pred_region
        %p1378 = scmp.lt.s32.totalorder %s20, 1
        %s1379 = scalar_select %p1378, %s20, 1
        %s1380 = smul.addr %s1379, 8
        %s1381 = scalar_lea.vmem %s6, %s1380
      $region64: #{basic_block_forward.3} parent=55 // pred_fallthru
        _
      // Predicated region
      $region65: #{basic_block_forward.3} parent=55 // pred_check
        %p1382 = pneg %p205
      $region66: #{basic_block_forward.3} parent=55 // pred_check_branch
        %1384 = sbr.rel (%p1382) target = $region68
      $region67: #{basic_block_forward.3} parent=55 // pred_region
        %p1385 = scmp.lt.s32.totalorder %s20, 1
        %s1386 = scalar_select %p1385, %s20, 1
        %s1387 = smul.addr %s1386, 8
        %s1388 = scalar_lea.vmem %s7, %s1387
      $region68: #{basic_block_forward.3} parent=55 // pred_fallthru
        _
    $region56: #{basic_block_forward.3} parent=5 // pred_fallthru
      _
  $region6: #{basic_block_forward.3} parent=0 // loop_footer
    %s18 = sadd.s32 1, %s14
  $region7: #{basic_block_forward.3} parent=0 // loop_footer_branch
    %13 = sbr.rel target = $region3
  $region8: #{basic_block_forward.3} parent=0 // loop_exit
    _

// kernel: basic_block_forward.4
$region0: #{basic_block_forward.4}
  #allocation0 [shape = 'u32[]', space=smem, size = 0x4, offset = 0x4, fixed_abs, tag = 'smem constant byte address 0x4 - core index']
  #allocation1 [shape = 'u32[144,128]{1,0:T(1,128)}', space=vmem, size = 0x12000, scoped, tag = 'internal scratch']
  %s0 = inlined_call_operand.vmem [shape: f32[2,8,256], index: 0, kind: input, shape index: {}]
  %s1 = inlined_call_operand.vmem [shape: f32[9,8,8], index: 1, kind: input, shape index: {}]
  %s2 = inlined_call_operand.vmem [shape: f32[9,256], index: 2, kind: input, shape index: {}]
  %s3 = inlined_call_operand.vmem [shape: f32[8,1], index: 3, kind: input, shape index: {}]
  %s4 = inlined_call_operand.vmem [shape: f32[8,1], index: 4, kind: input, shape index: {}]
  %s5 = inlined_call_operand.vmem [shape: f32[2,8,256], index: 5, kind: output, shape index: {0}]
  %s6 = inlined_call_operand.vmem [shape: f32[2,8,1], index: 6, kind: output, shape index: {1}]
  %s7 = inlined_call_operand.vmem [shape: f32[2,8,1], index: 7, kind: output, shape index: {2}]
  %8 = xla_tuple %s5, %s6, %s7
  %s9 = sld [smem:[#allocation0]]
  $region69: #{basic_block_forward.4} parent=0
    _
  %s11 = ssub.s32 1, %s9
  %s12 = scalar_select 0, %s11, %s9
  loop: start=0, step=1, limit=4
  $region2: #{basic_block_forward.4} parent=0 // loop_pre_header
    _
  $region3: #{basic_block_forward.4} parent=0 // loop_header
    %s14 = sphi 0, %s18
    %p15 = scmp.ge.s32.totalorder %s14, 4
    %s24 = sphi 0, %s26
    %s27 = sphi 0, %s24
    %s28 = sphi 0, %s27
    %s44 = sphi 0, %s28
    %s48 = sphi 0, %s48
    %s50 = sphi 0, %s48
    %s51 = sphi 0, %s50
    %s65 = sphi 0, %s51
    %s69 = sphi 0, %s69
    %s71 = sphi 0, %s69
    %s72 = sphi 0, %s71
    %s86 = sphi 0, %s72
    %s90 = sphi 0, %s90
    %s92 = sphi 0, %s90
    %s93 = sphi 0, %s92
    %s107 = sphi 0, %s93
    %s111 = sphi 0, %s111
    %s113 = sphi 0, %s111
    %s114 = sphi 0, %s113
    %s128 = sphi 0, %s114
    %s134 = sphi 0, %s136
    %s137 = sphi 0, %s134
    %s138 = sphi 0, %s137
    %s154 = sphi 0, %s138
    %s160 = sphi 0, %s162
    %s163 = sphi 0, %s160
    %s164 = sphi 0, %s163
    %s180 = sphi 0, %s164
    %s186 = sphi 0, %s188
    %s189 = sphi 0, %s186
    %s190 = sphi 0, %s189
    %s206 = sphi 0, %s190
  $region4: #{basic_block_forward.4} parent=0 // loop_header_branch
    %17 = sbr.rel (%p15) target = $region8
  $region5: #{basic_block_forward.4} parent=0 // loop_body
    %s19 = ssub.s32 %s14, 1
    %s20 = ssub.s32 %s14, 2
    %s21 = sadd.s32 %s14, 1
    %s22 = ssub.s32 %s14, %s21
    %p23 = scmp.eq.s32.totalorder %s22, 0
    %s25 = sadd.s32 %s24, 1
    %s26 = scalar_select %p23, %s24, %s25
    %p29 = pneg %p23
    %p30 = scmp.eq.s32.totalorder %s14, 1
    %p31 = por %p29, %p30
    %p32 = scmp.ne.s32.totalorder %s24, %s27
    %p33 = scmp.eq.s32.totalorder %s14, 0
    %p34 = por %p32, %p33
    %p35 = scmp.ne.s32.totalorder %s24, %s27
    %p36 = scmp.eq.s32.totalorder %s19, 1
    %p37 = por %p35, %p36
    %p38 = scmp.ne.s32.totalorder %s27, %s28
    %p39 = scmp.eq.s32.totalorder %s19, 0
    %p40 = por %p38, %p39
    %p41 = scmp.ne.s32.totalorder %s27, %s28
    %p42 = scmp.eq.s32.totalorder %s20, 1
    %p43 = por %p41, %p42
    %p45 = scmp.ne.s32.totalorder %s28, %s44
    %p46 = scmp.eq.s32.totalorder %s20, 0
    %p47 = por %p45, %p46
    %s49 = sadd.s32 %s48, 1
    %p52 = scmp.eq.s32.totalorder %s14, 1
    %p53 = scmp.ne.s32.totalorder %s48, %s50
    %p54 = scmp.eq.s32.totalorder %s14, 0
    %p55 = por %p53, %p54
    %p56 = scmp.ne.s32.totalorder %s48, %s50
    %p57 = scmp.eq.s32.totalorder %s19, 1
    %p58 = por %p56, %p57
    %p59 = scmp.ne.s32.totalorder %s50, %s51
    %p60 = scmp.eq.s32.totalorder %s19, 0
    %p61 = por %p59, %p60
    %p62 = scmp.ne.s32.totalorder %s50, %s51
    %p63 = scmp.eq.s32.totalorder %s20, 1
    %p64 = por %p62, %p63
    %p66 = scmp.ne.s32.totalorder %s51, %s65
    %p67 = scmp.eq.s32.totalorder %s20, 0
    %p68 = por %p66, %p67
    %s70 = sadd.s32 %s69, 1
    %p73 = scmp.eq.s32.totalorder %s14, 1
    %p74 = scmp.ne.s32.totalorder %s69, %s71
    %p75 = scmp.eq.s32.totalorder %s14, 0
    %p76 = por %p74, %p75
    %p77 = scmp.ne.s32.totalorder %s69, %s71
    %p78 = scmp.eq.s32.totalorder %s19, 1
    %p79 = por %p77, %p78
    %p80 = scmp.ne.s32.totalorder %s71, %s72
    %p81 = scmp.eq.s32.totalorder %s19, 0
    %p82 = por %p80, %p81
    %p83 = scmp.ne.s32.totalorder %s71, %s72
    %p84 = scmp.eq.s32.totalorder %s20, 1
    %p85 = por %p83, %p84
    %p87 = scmp.ne.s32.totalorder %s72, %s86
    %p88 = scmp.eq.s32.totalorder %s20, 0
    %p89 = por %p87, %p88
    %s91 = sadd.s32 %s90, 1
    %p94 = scmp.eq.s32.totalorder %s14, 1
    %p95 = scmp.ne.s32.totalorder %s90, %s92
    %p96 = scmp.eq.s32.totalorder %s14, 0
    %p97 = por %p95, %p96
    %p98 = scmp.ne.s32.totalorder %s90, %s92
    %p99 = scmp.eq.s32.totalorder %s19, 1
    %p100 = por %p98, %p99
    %p101 = scmp.ne.s32.totalorder %s92, %s93
    %p102 = scmp.eq.s32.totalorder %s19, 0
    %p103 = por %p101, %p102
    %p104 = scmp.ne.s32.totalorder %s92, %s93
    %p105 = scmp.eq.s32.totalorder %s20, 1
    %p106 = por %p104, %p105
    %p108 = scmp.ne.s32.totalorder %s93, %s107
    %p109 = scmp.eq.s32.totalorder %s20, 0
    %p110 = por %p108, %p109
    %s112 = sadd.s32 %s111, 1
    %p115 = scmp.eq.s32.totalorder %s14, 1
    %p116 = scmp.ne.s32.totalorder %s111, %s113
    %p117 = scmp.eq.s32.totalorder %s14, 0
    %p118 = por %p116, %p117
    %p119 = scmp.ne.s32.totalorder %s111, %s113
    %p120 = scmp.eq.s32.totalorder %s19, 1
    %p121 = por %p119, %p120
    %p122 = scmp.ne.s32.totalorder %s113, %s114
    %p123 = scmp.eq.s32.totalorder %s19, 0
    %p124 = por %p122, %p123
    %p125 = scmp.ne.s32.totalorder %s113, %s114
    %p126 = scmp.eq.s32.totalorder %s20, 1
    %p127 = por %p125, %p126
    %p129 = scmp.ne.s32.totalorder %s114, %s128
    %p130 = scmp.eq.s32.totalorder %s20, 0
    %p131 = por %p129, %p130
    %s132 = ssub.s32 %s14, %s21
    %p133 = scmp.eq.s32.totalorder %s132, 0
    %s135 = sadd.s32 %s134, 1
    %s136 = scalar_select %p133, %s134, %s135
    %p139 = pneg %p133
    %p140 = scmp.eq.s32.totalorder %s14, 1
    %p141 = por %p139, %p140
    %p142 = scmp.ne.s32.totalorder %s134, %s137
    %p143 = scmp.eq.s32.totalorder %s14, 0
    %p144 = por %p142, %p143
    %p145 = scmp.ne.s32.totalorder %s134, %s137
    %p146 = scmp.eq.s32.totalorder %s19, 1
    %p147 = por %p145, %p146
    %p148 = scmp.ne.s32.totalorder %s137, %s138
    %p149 = scmp.eq.s32.totalorder %s19, 0
    %p150 = por %p148, %p149
    %p151 = scmp.ne.s32.totalorder %s137, %s138
    %p152 = scmp.eq.s32.totalorder %s20, 1
    %p153 = por %p151, %p152
    %p155 = scmp.ne.s32.totalorder %s138, %s154
    %p156 = scmp.eq.s32.totalorder %s20, 0
    %p157 = por %p155, %p156
    %s158 = ssub.s32 %s14, %s21
    %p159 = scmp.eq.s32.totalorder %s158, 0
    %s161 = sadd.s32 %s160, 1
    %s162 = scalar_select %p159, %s160, %s161
    %p165 = pneg %p159
    %p166 = scmp.eq.s32.totalorder %s14, 1
    %p167 = por %p165, %p166
    %p168 = scmp.ne.s32.totalorder %s160, %s163
    %p169 = scmp.eq.s32.totalorder %s14, 0
    %p170 = por %p168, %p169
    %p171 = scmp.ne.s32.totalorder %s160, %s163
    %p172 = scmp.eq.s32.totalorder %s19, 1
    %p173 = por %p171, %p172
    %p174 = scmp.ne.s32.totalorder %s163, %s164
    %p175 = scmp.eq.s32.totalorder %s19, 0
    %p176 = por %p174, %p175
    %p177 = scmp.ne.s32.totalorder %s163, %s164
    %p178 = scmp.eq.s32.totalorder %s20, 1
    %p179 = por %p177, %p178
    %p181 = scmp.ne.s32.totalorder %s164, %s180
    %p182 = scmp.eq.s32.totalorder %s20, 0
    %p183 = por %p181, %p182
    %s184 = ssub.s32 %s14, %s21
    %p185 = scmp.eq.s32.totalorder %s184, 0
    %s187 = sadd.s32 %s186, 1
    %s188 = scalar_select %p185, %s186, %s187
    %p191 = pneg %p185
    %p192 = scmp.eq.s32.totalorder %s14, 1
    %p193 = por %p191, %p192
    %p194 = scmp.ne.s32.totalorder %s186, %s189
    %p195 = scmp.eq.s32.totalorder %s14, 0
    %p196 = por %p194, %p195
    %p197 = scmp.ne.s32.totalorder %s186, %s189
    %p198 = scmp.eq.s32.totalorder %s19, 1
    %p199 = por %p197, %p198
    %p200 = scmp.ne.s32.totalorder %s189, %s190
    %p201 = scmp.eq.s32.totalorder %s19, 0
    %p202 = por %p200, %p201
    %p203 = scmp.ne.s32.totalorder %s189, %s190
    %p204 = scmp.eq.s32.totalorder %s20, 1
    %p205 = por %p203, %p204
    %p207 = scmp.ne.s32.totalorder %s190, %s206
    %p208 = scmp.eq.s32.totalorder %s20, 0
    %p209 = por %p207, %p208
    %p210 = scmp.le.s32.totalorder 1, %s14
    %p211 = scmp.lt.s32.totalorder %s14, 3
    %p212 = pnand %p210, %p211
    %p213 = pneg %p212
    // Predicated region
    $region9: #{basic_block_forward.4} parent=5 // pred_check
      _
    $region10: #{basic_block_forward.4} parent=5 // pred_check_branch
      %215 = sbr.rel (%p212) target = $region12
    $region11: #{basic_block_forward.4} parent=5 // pred_region
      %s216 = ssub.s32 %s14, 1
      // Predicated region
      $region13: #{basic_block_forward.4} parent=11 // pred_check
        %p217 = pneg %p61
      $region14: #{basic_block_forward.4} parent=11 // pred_check_branch
        %219 = sbr.rel (%p217) target = $region16
      $region15: #{basic_block_forward.4} parent=11 // pred_region
        _
      $region16: #{basic_block_forward.4} parent=11 // pred_fallthru
        _
      // Predicated region
      $region17: #{basic_block_forward.4} parent=11 // pred_check
        %p220 = pneg %p82
      $region18: #{basic_block_forward.4} parent=11 // pred_check_branch
        %222 = sbr.rel (%p220) target = $region20
      $region19: #{basic_block_forward.4} parent=11 // pred_region
        _
      $region20: #{basic_block_forward.4} parent=11 // pred_fallthru
        _
      // Predicated region
      $region21: #{basic_block_forward.4} parent=11 // pred_check
        %p223 = pneg %p103
      $region22: #{basic_block_forward.4} parent=11 // pred_check_branch
        %225 = sbr.rel (%p223) target = $region24
      $region23: #{basic_block_forward.4} parent=11 // pred_region
        _
      $region24: #{basic_block_forward.4} parent=11 // pred_fallthru
        _
      // Predicated region
      $region25: #{basic_block_forward.4} parent=11 // pred_check
        %p226 = pneg %p124
      $region26: #{basic_block_forward.4} parent=11 // pred_check_branch
        %228 = sbr.rel (%p226) target = $region28
      $region27: #{basic_block_forward.4} parent=11 // pred_region
        _
      $region28: #{basic_block_forward.4} parent=11 // pred_fallthru
        _
    $region12: #{basic_block_forward.4} parent=5 // pred_fallthru
      _
    %p229 = scmp.lt.s32.totalorder %s14, 2
    // Predicated region
    $region29: #{basic_block_forward.4} parent=5 // pred_check
      %p230 = pneg %p229
    $region30: #{basic_block_forward.4} parent=5 // pred_check_branch
      %232 = sbr.rel (%p230) target = $region32
    $region31: #{basic_block_forward.4} parent=5 // pred_region
      // Predicated region
      $region33: #{basic_block_forward.4} parent=31 // pred_check
        %p233 = pneg %p34
      $region34: #{basic_block_forward.4} parent=31 // pred_check_branch
        %235 = sbr.rel (%p233) target = $region36
      $region35: #{basic_block_forward.4} parent=31 // pred_region
        %p236 = scmp.lt.s32.totalorder %s14, 1
        %s237 = scalar_select %p236, %s14, 1
        %s238 = smul.addr %s237, 2
        %s239 = smul.addr %s238, 8
        %s240 = scalar_lea.vmem %s0, %s239
      $region36: #{basic_block_forward.4} parent=31 // pred_fallthru
        _
    $region32: #{basic_block_forward.4} parent=5 // pred_fallthru
      _
    %p241 = scmp.le.s32.totalorder 1, %s14
    %p242 = scmp.lt.s32.totalorder %s14, 3
    %p243 = pnand %p241, %p242
    %p244 = pneg %p243
    // Predicated region
    $region37: #{basic_block_forward.4} parent=5 // pred_check
      _
    $region38: #{basic_block_forward.4} parent=5 // pred_check_branch
      %246 = sbr.rel (%p243) target = $region40
    $region39: #{basic_block_forward.4} parent=5 // pred_region
      %s247 = ssub.s32 %s14, 1
      %p248 = scmp.lt.s32.totalorder %s19, 1
      %s249 = scalar_select %p248, %s19, 1
      %s250 = smul.addr %s249, 2
      %s251 = smul.addr %s250, 8
      %s252 = scalar_lea.vmem %s0, %s251
      %p253 = pneg %p40
      %p254 = pneg %p37
      %p255 = pneg %p61
      %p256 = pneg %p58
      %p257 = pneg %p82
      %p258 = pneg %p79
      %p259 = pneg %p103
      %p260 = pneg %p100
      %p261 = pneg %p124
      %p262 = pneg %p121
      %p263 = pneg %p150
      %p264 = pneg %p147
      %p265 = scmp.lt.s32.totalorder %s19, 1
      %s266 = scalar_select %p265, %s19, 1
      %s267 = smul.addr %s266, 2
      %s268 = smul.addr %s267, 8
      %s269 = scalar_lea.vmem %s5, %s268
      %p270 = pneg %p176
      %p271 = pneg %p173
      %p272 = scmp.lt.s32.totalorder %s19, 1
      %s273 = scalar_select %p272, %s19, 1
      %s274 = smul.addr %s273, 8
      %s275 = scalar_lea.vmem %s6, %s274
      %p276 = pneg %p202
      %p277 = pneg %p199
      %p278 = scmp.lt.s32.totalorder %s19, 1
      %s279 = scalar_select %p278, %s19, 1
      %s280 = smul.addr %s279, 8
      %s281 = scalar_lea.vmem %s7, %s280
      %p282 = scmp.lt.s32.totalorder %s19, 1
      %s283 = scalar_select %p282, %s19, 1
      %s284 = smul.addr %s283, 2
      %s285 = smul.addr %s284, 8
      %s286 = scalar_lea.vmem %s0, %s285
      %p287 = scmp.lt.s32.totalorder %s19, 1
      %s288 = scalar_select %p287, %s19, 1
      %s289 = smul.addr %s288, 2
      %s290 = smul.addr %s289, 8
      %s291 = scalar_lea.vmem %s5, %s290
      %p292 = scmp.lt.s32.totalorder %s19, 1
      %s293 = scalar_select %p292, %s19, 1
      %s294 = smul.addr %s293, 8
      %s295 = scalar_lea.vmem %s6, %s294
      %p296 = scmp.lt.s32.totalorder %s19, 1
      %s297 = scalar_select %p296, %s19, 1
      %s298 = smul.addr %s297, 8
      %s299 = scalar_lea.vmem %s7, %s298
      %v300 = vld [vmem:[%s286] sm:$0xff]
      %v301 = vld [vmem:[%s286 + $0x8] sm:$0xff]
      %v302 = vld [vmem:[%s3] sm:$0xff]
      %304 = vset.pattern.permute.xlu0 0
      %305 = vperm.xlu0 %304, %v302
      %v306 = vpop.permute.xlu0 %305
      %v308 = vmul.f32 %v300, %v306
      %v309 = vmul.f32 %v301, %v306
      %v310 = vld [vmem:[%s4] sm:$0xff]
      %312 = vset.pattern.permute.xlu0 0
      %313 = vperm.xlu0 %312, %v310
      %v314 = vpop.permute.xlu0 %313
      %v316 = vadd.f32 %v308, %v314
      %v317 = vadd.f32 %v309, %v314
      %v318 = vmax.f32 %v316, 0.0
      %v319 = vmax.f32 %v317, 0.0
      %322 = vrot.lane.b32.xlu0 %v318, 17
      %v323 = vpop.permute.xlu0 %322
      %324 = vrot.lane.b32.xlu0 %v319, 17
      %v325 = vpop.permute.xlu0 %324
      %vm326 = vcmask 138240
      %v327 = vsel %vm326, %v323, %v325
      %v331 = vsel %vm326, 0.0, %v323
      %v332 = vsel %vm326, %v325, 0.0
      %v333 = vld [vmem:[%s2] sm:$0xff]
      %v334 = vld [vmem:[%s2 + $0x8] sm:$0xff]
      %v335 = vld [vmem:[%s2 + $0x10] sm:$0x1]
      %v336 = vld [vmem:[%s2 + $0x18] sm:$0x1]
      %v337 = vld [vmem:[%s1] sm:$0xff]
      %v338 = vld [vmem:[%s1 + $0x8] sm:$0xff]
      %v339 = vld [vmem:[%s1 + $0x10] sm:$0xff]
      %v340 = vld [vmem:[%s1 + $0x18] sm:$0xff]
      %v341 = vld [vmem:[%s1 + $0x20] sm:$0xff]
      %v342 = vld [vmem:[%s1 + $0x28] sm:$0xff]
      %v343 = vld [vmem:[%s1 + $0x30] sm:$0xff]
      %v344 = vld [vmem:[%s1 + $0x38] sm:$0xff]
      %v345 = vld [vmem:[%s1 + $0x40] sm:$0xff]
      %v346 = vlaneseq
      %v347 = vshrl.u32 %v346, 7
      %v348 = vsub.s32 0, %v347
      %v349 = vrot.slane %v333, %v348
      %v350 = vlaneseq
      %v351 = vshrl.u32 %v350, 7
      %v352 = vsub.s32 0, %v351
      %v353 = vrot.slane %v334, %v352
      %v354 = vmul.f32 %v331, %v349
      %v355 = vmul.f32 %v327, %v353
      %v356 = vlaneseq
      %v357 = vshrl.u32 %v356, 7
      %v358 = vsub.s32 1, %v357
      %v359 = vrot.slane %v333, %v358
      %v360 = vlaneseq
      %v361 = vshrl.u32 %v360, 7
      %v362 = vsub.s32 1, %v361
      %v363 = vrot.slane %v334, %v362
      %366 = vrot.lane.b32.xlu0 %v359, 1
      %v367 = vpop.permute.xlu0 %366
      %368 = vrot.lane.b32.xlu0 %v363, 1
      %v369 = vpop.permute.xlu0 %368
      %vm370 = vcmask 7168
      %v371 = vsel %vm370, %v367, %v369
      %v375 = vmul.f32 %v331, %v367
      %v376 = vmul.f32 %v327, %v371
      %v377 = vmul.f32 %v332, %v369
      %381 = vrot.lane.b32.xlu0 %v375, 127
      %v382 = vpop.permute.xlu0 %381
      %383 = vrot.lane.b32.xlu0 %v376, 127
      %v384 = vpop.permute.xlu0 %383
      %385 = vrot.lane.b32.xlu0 %v377, 127
      %v386 = vpop.permute.xlu0 %385
      %vm387 = vcmask 1039360
      %v388 = vsel %vm387, %v382, %v384
      %v389 = vsel %vm387, %v384, %v386
      %vm392 = vcmask 64512
      %v394 = vsel %vm392, %v338, 0
      %396 = vmatprep.subr.mxu0 %v389
      %397 = vmatpush1.msra.mxu0 %v388
      %398 = vmatprep.subr.mxu0 0.0
      %399 = vmatpush1.msra.mxu0 0.0
      %400 = vmatprep.subr.mxu0 0.0
      %401 = vmatpush1.msra.mxu0 0.0
      %402 = vmatprep.subr.mxu0 0.0
      %403 = vmatpush1.msra.mxu0 0.0
      %404 = vmatprep.subr.mxu0 0.0
      %405 = vmatpush1.msra.mxu0 0.0
      %406 = vmatprep.subr.mxu0 0.0
      %407 = vmatpush1.msra.mxu0 0.0
      %408 = vmatprep.subr.mxu0 0.0
      %409 = vmatpush1.msra.mxu0 0.0
      %410 = vmatprep.subr.mxu0 0.0
      %411 = vmatpush1.msra.mxu0 0.0
      %412 = vmatprep.subr.mxu0 0.0
      %413 = vmatpush1.msra.mxu0 0.0
      %414 = vmatprep.subr.mxu0 0.0
      %415 = vmatpush1.msra.mxu0 0.0
      %416 = vmatprep.subr.mxu0 0.0
      %417 = vmatpush1.msra.mxu0 0.0
      %418 = vmatprep.subr.mxu0 0.0
      %419 = vmatpush1.msra.mxu0 0.0
      %420 = vmatprep.subr.mxu0 0.0
      %421 = vmatpush1.msra.mxu0 0.0
      %422 = vmatprep.subr.mxu0 0.0
      %423 = vmatpush1.msra.mxu0 0.0
      %424 = vmatprep.subr.mxu0 0.0
      %425 = vmatpush1.msra.mxu0 0.0
      %426 = vmatprep.subr.mxu0 0.0
      %427 = vmatpush1.msra.mxu0 0.0
      %428 = vmatprep.subr.mxu0 0.0
      %429 = vmatpush1.msra.mxu0 0.0
      %430 = vmatprep.subr.mxu0 0.0
      %431 = vmatpush1.msra.mxu0 0.0
      %432 = vmatprep.subr.mxu0 0.0
      %433 = vmatpush1.msra.mxu0 0.0
      %434 = vmatprep.subr.mxu0 0.0
      %435 = vmatpush1.msra.mxu0 0.0
      %436 = vmatprep.subr.mxu0 0.0
      %437 = vmatpush1.msra.mxu0 0.0
      %438 = vmatprep.subr.mxu0 0.0
      %439 = vmatpush1.msra.mxu0 0.0
      %440 = vmatprep.subr.mxu0 0.0
      %441 = vmatpush1.msra.mxu0 0.0
      %442 = vmatprep.subr.mxu0 0.0
      %443 = vmatpush1.msra.mxu0 0.0
      %444 = vmatprep.subr.mxu0 0.0
      %445 = vmatpush1.msra.mxu0 0.0
      %446 = vmatprep.subr.mxu0 0.0
      %447 = vmatpush1.msra.mxu0 0.0
      %448 = vmatprep.subr.mxu0 0.0
      %449 = vmatpush1.msra.mxu0 0.0
      %450 = vmatprep.subr.mxu0 0.0
      %451 = vmatpush1.msra.mxu0 0.0
      %452 = vmatprep.subr.mxu0 0.0
      %453 = vmatpush1.msra.mxu0 0.0
      %454 = vmatprep.subr.mxu0 0.0
      %455 = vmatpush1.msra.mxu0 0.0
      %456 = vmatprep.subr.mxu0 0.0
      %457 = vmatpush1.msra.mxu0 0.0
      %458 = vmatprep.subr.mxu0 0.0
      %459 = vmatpush1.msra.mxu0 0.0
      %460 = vmatprep.mubr.f32.mxu0 0.0
      %461 = vmatmul.mubr.f32.gmra.mrb[0].mxu0 %v394
      %v462 = vpop.f32.mrb[0].mxu0
      %v463 = vadd.f32 0.0, %v462
      %v464 = vpop.f32.mrb[0].mxu0
      %v465 = vadd.f32 0.0, %v464
      %466 = vdwg.mxu0
      %v468 = vsel %vm392, %v337, 0
      %470 = vmatprep.subr.mxu0 %v355
      %471 = vmatpush1.msra.mxu0 %v354
      %472 = vmatprep.subr.mxu0 0.0
      %473 = vmatpush1.msra.mxu0 0.0
      %474 = vmatprep.subr.mxu0 0.0
      %475 = vmatpush1.msra.mxu0 0.0
      %476 = vmatprep.subr.mxu0 0.0
      %477 = vmatpush1.msra.mxu0 0.0
      %478 = vmatprep.subr.mxu0 0.0
      %479 = vmatpush1.msra.mxu0 0.0
      %480 = vmatprep.subr.mxu0 0.0
      %481 = vmatpush1.msra.mxu0 0.0
      %482 = vmatprep.subr.mxu0 0.0
      %483 = vmatpush1.msra.mxu0 0.0
      %484 = vmatprep.subr.mxu0 0.0
      %485 = vmatpush1.msra.mxu0 0.0
      %486 = vmatprep.subr.mxu0 0.0
      %487 = vmatpush1.msra.mxu0 0.0
      %488 = vmatprep.subr.mxu0 0.0
      %489 = vmatpush1.msra.mxu0 0.0
      %490 = vmatprep.subr.mxu0 0.0
      %491 = vmatpush1.msra.mxu0 0.0
      %492 = vmatprep.subr.mxu0 0.0
      %493 = vmatpush1.msra.mxu0 0.0
      %494 = vmatprep.subr.mxu0 0.0
      %495 = vmatpush1.msra.mxu0 0.0
      %496 = vmatprep.subr.mxu0 0.0
      %497 = vmatpush1.msra.mxu0 0.0
      %498 = vmatprep.subr.mxu0 0.0
      %499 = vmatpush1.msra.mxu0 0.0
      %500 = vmatprep.subr.mxu0 0.0
      %501 = vmatpush1.msra.mxu0 0.0
      %502 = vmatprep.subr.mxu0 0.0
      %503 = vmatpush1.msra.mxu0 0.0
      %504 = vmatprep.subr.mxu0 0.0
      %505 = vmatpush1.msra.mxu0 0.0
      %506 = vmatprep.subr.mxu0 0.0
      %507 = vmatpush1.msra.mxu0 0.0
      %508 = vmatprep.subr.mxu0 0.0
      %509 = vmatpush1.msra.mxu0 0.0
      %510 = vmatprep.subr.mxu0 0.0
      %511 = vmatpush1.msra.mxu0 0.0
      %512 = vmatprep.subr.mxu0 0.0
      %513 = vmatpush1.msra.mxu0 0.0
      %514 = vmatprep.subr.mxu0 0.0
      %515 = vmatpush1.msra.mxu0 0.0
      %516 = vmatprep.subr.mxu0 0.0
      %517 = vmatpush1.msra.mxu0 0.0
      %518 = vmatprep.subr.mxu0 0.0
      %519 = vmatpush1.msra.mxu0 0.0
      %520 = vmatprep.subr.mxu0 0.0
      %521 = vmatpush1.msra.mxu0 0.0
      %522 = vmatprep.subr.mxu0 0.0
      %523 = vmatpush1.msra.mxu0 0.0
      %524 = vmatprep.subr.mxu0 0.0
      %525 = vmatpush1.msra.mxu0 0.0
      %526 = vmatprep.subr.mxu0 0.0
      %527 = vmatpush1.msra.mxu0 0.0
      %528 = vmatprep.subr.mxu0 0.0
      %529 = vmatpush1.msra.mxu0 0.0
      %530 = vmatprep.subr.mxu0 0.0
      %531 = vmatpush1.msra.mxu0 0.0
      %532 = vmatprep.subr.mxu0 0.0
      %533 = vmatpush1.msra.mxu0 0.0
      %534 = vmatprep.mubr.f32.mxu0 0.0
      %535 = vmatmul.mubr.f32.gmra.mrb[0].mxu0 %v468
      %v536 = vpop.f32.mrb[0].mxu0
      %v537 = vadd.f32 %v463, %v536
      %v538 = vpop.f32.mrb[0].mxu0
      %v539 = vadd.f32 %v465, %v538
      %540 = vdwg.mxu0
      %v541 = vlaneseq
      %v542 = vshrl.u32 %v541, 7
      %v543 = vsub.s32 2, %v542
      %v544 = vrot.slane %v333, %v543
      %v545 = vlaneseq
      %v546 = vshrl.u32 %v545, 7
      %v547 = vsub.s32 2, %v546
      %v548 = vrot.slane %v334, %v547
      %551 = vrot.lane.b32.xlu0 %v544, 2
      %v552 = vpop.permute.xlu0 %551
      %553 = vrot.lane.b32.xlu0 %v548, 2
      %v554 = vpop.permute.xlu0 %553
      %vm555 = vcmask 15360
      %v556 = vsel %vm555, %v552, %v554
      %v560 = vmul.f32 %v331, %v552
      %v561 = vmul.f32 %v327, %v556
      %v562 = vmul.f32 %v332, %v554
      %566 = vrot.lane.b32.xlu0 %v560, 126
      %v567 = vpop.permute.xlu0 %566
      %568 = vrot.lane.b32.xlu0 %v561, 126
      %v569 = vpop.permute.xlu0 %568
      %570 = vrot.lane.b32.xlu0 %v562, 126
      %v571 = vpop.permute.xlu0 %570
      %vm572 = vcmask 1031168
      %v573 = vsel %vm572, %v567, %v569
      %v574 = vsel %vm572, %v569, %v571
      %v578 = vsel %vm392, %v339, 0
      %580 = vmatprep.subr.mxu0 %v574
      %581 = vmatpush1.msra.mxu0 %v573
      %582 = vmatprep.subr.mxu0 0.0
      %583 = vmatpush1.msra.mxu0 0.0
      %584 = vmatprep.subr.mxu0 0.0
      %585 = vmatpush1.msra.mxu0 0.0
      %586 = vmatprep.subr.mxu0 0.0
      %587 = vmatpush1.msra.mxu0 0.0
      %588 = vmatprep.subr.mxu0 0.0
      %589 = vmatpush1.msra.mxu0 0.0
      %590 = vmatprep.subr.mxu0 0.0
      %591 = vmatpush1.msra.mxu0 0.0
      %592 = vmatprep.subr.mxu0 0.0
      %593 = vmatpush1.msra.mxu0 0.0
      %594 = vmatprep.subr.mxu0 0.0
      %595 = vmatpush1.msra.mxu0 0.0
      %596 = vmatprep.subr.mxu0 0.0
      %597 = vmatpush1.msra.mxu0 0.0
      %598 = vmatprep.subr.mxu0 0.0
      %599 = vmatpush1.msra.mxu0 0.0
      %600 = vmatprep.subr.mxu0 0.0
      %601 = vmatpush1.msra.mxu0 0.0
      %602 = vmatprep.subr.mxu0 0.0
      %603 = vmatpush1.msra.mxu0 0.0
      %604 = vmatprep.subr.mxu0 0.0
      %605 = vmatpush1.msra.mxu0 0.0
      %606 = vmatprep.subr.mxu0 0.0
      %607 = vmatpush1.msra.mxu0 0.0
      %608 = vmatprep.subr.mxu0 0.0
      %609 = vmatpush1.msra.mxu0 0.0
      %610 = vmatprep.subr.mxu0 0.0
      %611 = vmatpush1.msra.mxu0 0.0
      %612 = vmatprep.subr.mxu0 0.0
      %613 = vmatpush1.msra.mxu0 0.0
      %614 = vmatprep.subr.mxu0 0.0
      %615 = vmatpush1.msra.mxu0 0.0
      %616 = vmatprep.subr.mxu0 0.0
      %617 = vmatpush1.msra.mxu0 0.0
      %618 = vmatprep.subr.mxu0 0.0
      %619 = vmatpush1.msra.mxu0 0.0
      %620 = vmatprep.subr.mxu0 0.0
      %621 = vmatpush1.msra.mxu0 0.0
      %622 = vmatprep.subr.mxu0 0.0
      %623 = vmatpush1.msra.mxu0 0.0
      %624 = vmatprep.subr.mxu0 0.0
      %625 = vmatpush1.msra.mxu0 0.0
      %626 = vmatprep.subr.mxu0 0.0
      %627 = vmatpush1.msra.mxu0 0.0
      %628 = vmatprep.subr.mxu0 0.0
      %629 = vmatpush1.msra.mxu0 0.0
      %630 = vmatprep.subr.mxu0 0.0
      %631 = vmatpush1.msra.mxu0 0.0
      %632 = vmatprep.subr.mxu0 0.0
      %633 = vmatpush1.msra.mxu0 0.0
      %634 = vmatprep.subr.mxu0 0.0
      %635 = vmatpush1.msra.mxu0 0.0
      %636 = vmatprep.subr.mxu0 0.0
      %637 = vmatpush1.msra.mxu0 0.0
      %638 = vmatprep.subr.mxu0 0.0
      %639 = vmatpush1.msra.mxu0 0.0
      %640 = vmatprep.subr.mxu0 0.0
      %641 = vmatpush1.msra.mxu0 0.0
      %642 = vmatprep.subr.mxu0 0.0
      %643 = vmatpush1.msra.mxu0 0.0
      %644 = vmatprep.mubr.f32.mxu0 0.0
      %645 = vmatmul.mubr.f32.gmra.mrb[0].mxu0 %v578
      %v646 = vpop.f32.mrb[0].mxu0
      %v647 = vadd.f32 0.0, %v646
      %v648 = vpop.f32.mrb[0].mxu0
      %v649 = vadd.f32 0.0, %v648
      %650 = vdwg.mxu0
      %v651 = vadd.f32 %v537, %v647
      %v652 = vadd.f32 %v539, %v649
      %v653 = vlaneseq
      %v654 = vshrl.u32 %v653, 7
      %v655 = vsub.s32 3, %v654
      %v656 = vrot.slane %v333, %v655
      %v657 = vlaneseq
      %v658 = vshrl.u32 %v657, 7
      %v659 = vsub.s32 3, %v658
      %v660 = vrot.slane %v334, %v659
      %663 = vrot.lane.b32.xlu0 %v656, 16
      %v664 = vpop.permute.xlu0 %663
      %665 = vrot.lane.b32.xlu0 %v660, 16
      %v666 = vpop.permute.xlu0 %665
      %vm667 = vcmask 130048
      %v668 = vsel %vm667, %v664, %v666
      %v672 = vmul.f32 %v331, %v664
      %v673 = vmul.f32 %v327, %v668
      %v674 = vmul.f32 %v332, %v666
      %678 = vrot.lane.b32.xlu0 %v672, 112
      %v679 = vpop.permute.xlu0 %678
      %680 = vrot.lane.b32.xlu0 %v673, 112
      %v681 = vpop.permute.xlu0 %680
      %682 = vrot.lane.b32.xlu0 %v674, 112
      %v683 = vpop.permute.xlu0 %682
      %vm684 = vcmask 916480
      %v685 = vsel %vm684, %v679, %v681
      %v686 = vsel %vm684, %v681, %v683
      %v690 = vsel %vm392, %v340, 0
      %692 = vmatprep.subr.mxu0 %v686
      %693 = vmatpush1.msra.mxu0 %v685
      %694 = vmatprep.subr.mxu0 0.0
      %695 = vmatpush1.msra.mxu0 0.0
      %696 = vmatprep.subr.mxu0 0.0
      %697 = vmatpush1.msra.mxu0 0.0
      %698 = vmatprep.subr.mxu0 0.0
      %699 = vmatpush1.msra.mxu0 0.0
      %700 = vmatprep.subr.mxu0 0.0
      %701 = vmatpush1.msra.mxu0 0.0
      %702 = vmatprep.subr.mxu0 0.0
      %703 = vmatpush1.msra.mxu0 0.0
      %704 = vmatprep.subr.mxu0 0.0
      %705 = vmatpush1.msra.mxu0 0.0
      %706 = vmatprep.subr.mxu0 0.0
      %707 = vmatpush1.msra.mxu0 0.0
      %708 = vmatprep.subr.mxu0 0.0
      %709 = vmatpush1.msra.mxu0 0.0
      %710 = vmatprep.subr.mxu0 0.0
      %711 = vmatpush1.msra.mxu0 0.0
      %712 = vmatprep.subr.mxu0 0.0
      %713 = vmatpush1.msra.mxu0 0.0
      %714 = vmatprep.subr.mxu0 0.0
      %715 = vmatpush1.msra.mxu0 0.0
      %716 = vmatprep.subr.mxu0 0.0
      %717 = vmatpush1.msra.mxu0 0.0
      %718 = vmatprep.subr.mxu0 0.0
      %719 = vmatpush1.msra.mxu0 0.0
      %720 = vmatprep.subr.mxu0 0.0
      %721 = vmatpush1.msra.mxu0 0.0
      %722 = vmatprep.subr.mxu0 0.0
      %723 = vmatpush1.msra.mxu0 0.0
      %724 = vmatprep.subr.mxu0 0.0
      %725 = vmatpush1.msra.mxu0 0.0
      %726 = vmatprep.subr.mxu0 0.0
      %727 = vmatpush1.msra.mxu0 0.0
      %728 = vmatprep.subr.mxu0 0.0
      %729 = vmatpush1.msra.mxu0 0.0
      %730 = vmatprep.subr.mxu0 0.0
      %731 = vmatpush1.msra.mxu0 0.0
      %732 = vmatprep.subr.mxu0 0.0
      %733 = vmatpush1.msra.mxu0 0.0
      %734 = vmatprep.subr.mxu0 0.0
      %735 = vmatpush1.msra.mxu0 0.0
      %736 = vmatprep.subr.mxu0 0.0
      %737 = vmatpush1.msra.mxu0 0.0
      %738 = vmatprep.subr.mxu0 0.0
      %739 = vmatpush1.msra.mxu0 0.0
      %740 = vmatprep.subr.mxu0 0.0
      %741 = vmatpush1.msra.mxu0 0.0
      %742 = vmatprep.subr.mxu0 0.0
      %743 = vmatpush1.msra.mxu0 0.0
      %744 = vmatprep.subr.mxu0 0.0
      %745 = vmatpush1.msra.mxu0 0.0
      %746 = vmatprep.subr.mxu0 0.0
      %747 = vmatpush1.msra.mxu0 0.0
      %748 = vmatprep.subr.mxu0 0.0
      %749 = vmatpush1.msra.mxu0 0.0
      %750 = vmatprep.subr.mxu0 0.0
      %751 = vmatpush1.msra.mxu0 0.0
      %752 = vmatprep.subr.mxu0 0.0
      %753 = vmatpush1.msra.mxu0 0.0
      %754 = vmatprep.subr.mxu0 0.0
      %755 = vmatpush1.msra.mxu0 0.0
      %756 = vmatprep.mubr.f32.mxu0 0.0
      %757 = vmatmul.mubr.f32.gmra.mrb[0].mxu0 %v690
      %v758 = vpop.f32.mrb[0].mxu0
      %v759 = vadd.f32 0.0, %v758
      %v760 = vpop.f32.mrb[0].mxu0
      %v761 = vadd.f32 0.0, %v760
      %762 = vdwg.mxu0
      %v763 = vadd.f32 %v651, %v759
      %v764 = vadd.f32 %v652, %v761
      %v765 = vlaneseq
      %v766 = vshrl.u32 %v765, 7
      %v767 = vsub.s32 4, %v766
      %v768 = vrot.slane %v333, %v767
      %v769 = vlaneseq
      %v770 = vshrl.u32 %v769, 7
      %v771 = vsub.s32 4, %v770
      %v772 = vrot.slane %v334, %v771
      %775 = vrot.lane.b32.xlu0 %v768, 17
      %v776 = vpop.permute.xlu0 %775
      %777 = vrot.lane.b32.xlu0 %v772, 17
      %v778 = vpop.permute.xlu0 %777
      %v779 = vsel %vm326, %v776, %v778
      %v783 = vmul.f32 %v331, %v776
      %v784 = vmul.f32 %v327, %v779
      %v785 = vmul.f32 %v332, %v778
      %789 = vrot.lane.b32.xlu0 %v783, 111
      %v790 = vpop.permute.xlu0 %789
      %791 = vrot.lane.b32.xlu0 %v784, 111
      %v792 = vpop.permute.xlu0 %791
      %793 = vrot.lane.b32.xlu0 %v785, 111
      %v794 = vpop.permute.xlu0 %793
      %vm795 = vcmask 908288
      %v796 = vsel %vm795, %v790, %v792
      %v797 = vsel %vm795, %v792, %v794
      %v801 = vsel %vm392, %v341, 0
      %803 = vmatprep.subr.mxu0 %v797
      %804 = vmatpush1.msra.mxu0 %v796
      %805 = vmatprep.subr.mxu0 0.0
      %806 = vmatpush1.msra.mxu0 0.0
      %807 = vmatprep.subr.mxu0 0.0
      %808 = vmatpush1.msra.mxu0 0.0
      %809 = vmatprep.subr.mxu0 0.0
      %810 = vmatpush1.msra.mxu0 0.0
      %811 = vmatprep.subr.mxu0 0.0
      %812 = vmatpush1.msra.mxu0 0.0
      %813 = vmatprep.subr.mxu0 0.0
      %814 = vmatpush1.msra.mxu0 0.0
      %815 = vmatprep.subr.mxu0 0.0
      %816 = vmatpush1.msra.mxu0 0.0
      %817 = vmatprep.subr.mxu0 0.0
      %818 = vmatpush1.msra.mxu0 0.0
      %819 = vmatprep.subr.mxu0 0.0
      %820 = vmatpush1.msra.mxu0 0.0
      %821 = vmatprep.subr.mxu0 0.0
      %822 = vmatpush1.msra.mxu0 0.0
      %823 = vmatprep.subr.mxu0 0.0
      %824 = vmatpush1.msra.mxu0 0.0
      %825 = vmatprep.subr.mxu0 0.0
      %826 = vmatpush1.msra.mxu0 0.0
      %827 = vmatprep.subr.mxu0 0.0
      %828 = vmatpush1.msra.mxu0 0.0
      %829 = vmatprep.subr.mxu0 0.0
      %830 = vmatpush1.msra.mxu0 0.0
      %831 = vmatprep.subr.mxu0 0.0
      %832 = vmatpush1.msra.mxu0 0.0
      %833 = vmatprep.subr.mxu0 0.0
      %834 = vmatpush1.msra.mxu0 0.0
      %835 = vmatprep.subr.mxu0 0.0
      %836 = vmatpush1.msra.mxu0 0.0
      %837 = vmatprep.subr.mxu0 0.0
      %838 = vmatpush1.msra.mxu0 0.0
      %839 = vmatprep.subr.mxu0 0.0
      %840 = vmatpush1.msra.mxu0 0.0
      %841 = vmatprep.subr.mxu0 0.0
      %842 = vmatpush1.msra.mxu0 0.0
      %843 = vmatprep.subr.mxu0 0.0
      %844 = vmatpush1.msra.mxu0 0.0
      %845 = vmatprep.subr.mxu0 0.0
      %846 = vmatpush1.msra.mxu0 0.0
      %847 = vmatprep.subr.mxu0 0.0
      %848 = vmatpush1.msra.mxu0 0.0
      %849 = vmatprep.subr.mxu0 0.0
      %850 = vmatpush1.msra.mxu0 0.0
      %851 = vmatprep.subr.mxu0 0.0
      %852 = vmatpush1.msra.mxu0 0.0
      %853 = vmatprep.subr.mxu0 0.0
      %854 = vmatpush1.msra.mxu0 0.0
      %855 = vmatprep.subr.mxu0 0.0
      %856 = vmatpush1.msra.mxu0 0.0
      %857 = vmatprep.subr.mxu0 0.0
      %858 = vmatpush1.msra.mxu0 0.0
      %859 = vmatprep.subr.mxu0 0.0
      %860 = vmatpush1.msra.mxu0 0.0
      %861 = vmatprep.subr.mxu0 0.0
      %862 = vmatpush1.msra.mxu0 0.0
      %863 = vmatprep.subr.mxu0 0.0
      %864 = vmatpush1.msra.mxu0 0.0
      %865 = vmatprep.subr.mxu0 0.0
      %866 = vmatpush1.msra.mxu0 0.0
      %867 = vmatprep.mubr.f32.mxu0 0.0
      %868 = vmatmul.mubr.f32.gmra.mrb[0].mxu0 %v801
      %v869 = vpop.f32.mrb[0].mxu0
      %v870 = vadd.f32 0.0, %v869
      %v871 = vpop.f32.mrb[0].mxu0
      %v872 = vadd.f32 0.0, %v871
      %873 = vdwg.mxu0
      %v874 = vadd.f32 %v763, %v870
      %v875 = vadd.f32 %v764, %v872
      %v876 = vlaneseq
      %v877 = vshrl.u32 %v876, 7
      %v878 = vsub.s32 5, %v877
      %v879 = vrot.slane %v333, %v878
      %v880 = vlaneseq
      %v881 = vshrl.u32 %v880, 7
      %v882 = vsub.s32 5, %v881
      %v883 = vrot.slane %v334, %v882
      %886 = vrot.lane.b32.xlu0 %v879, 18
      %v887 = vpop.permute.xlu0 %886
      %888 = vrot.lane.b32.xlu0 %v883, 18
      %v889 = vpop.permute.xlu0 %888
      %vm890 = vcmask 146432
      %v891 = vsel %vm890, %v887, %v889
      %v895 = vmul.f32 %v331, %v887
      %v896 = vmul.f32 %v327, %v891
      %v897 = vmul.f32 %v332, %v889
      %901 = vrot.lane.b32.xlu0 %v895, 110
      %v902 = vpop.permute.xlu0 %901
      %903 = vrot.lane.b32.xlu0 %v896, 110
      %v904 = vpop.permute.xlu0 %903
      %905 = vrot.lane.b32.xlu0 %v897, 110
      %v906 = vpop.permute.xlu0 %905
      %vm907 = vcmask 900096
      %v908 = vsel %vm907, %v902, %v904
      %v909 = vsel %vm907, %v904, %v906
      %v913 = vsel %vm392, %v342, 0
      %915 = vmatprep.subr.mxu0 %v909
      %916 = vmatpush1.msra.mxu0 %v908
      %917 = vmatprep.subr.mxu0 0.0
      %918 = vmatpush1.msra.mxu0 0.0
      %919 = vmatprep.subr.mxu0 0.0
      %920 = vmatpush1.msra.mxu0 0.0
      %921 = vmatprep.subr.mxu0 0.0
      %922 = vmatpush1.msra.mxu0 0.0
      %923 = vmatprep.subr.mxu0 0.0
      %924 = vmatpush1.msra.mxu0 0.0
      %925 = vmatprep.subr.mxu0 0.0
      %926 = vmatpush1.msra.mxu0 0.0
      %927 = vmatprep.subr.mxu0 0.0
      %928 = vmatpush1.msra.mxu0 0.0
      %929 = vmatprep.subr.mxu0 0.0
      %930 = vmatpush1.msra.mxu0 0.0
      %931 = vmatprep.subr.mxu0 0.0
      %932 = vmatpush1.msra.mxu0 0.0
      %933 = vmatprep.subr.mxu0 0.0
      %934 = vmatpush1.msra.mxu0 0.0
      %935 = vmatprep.subr.mxu0 0.0
      %936 = vmatpush1.msra.mxu0 0.0
      %937 = vmatprep.subr.mxu0 0.0
      %938 = vmatpush1.msra.mxu0 0.0
      %939 = vmatprep.subr.mxu0 0.0
      %940 = vmatpush1.msra.mxu0 0.0
      %941 = vmatprep.subr.mxu0 0.0
      %942 = vmatpush1.msra.mxu0 0.0
      %943 = vmatprep.subr.mxu0 0.0
      %944 = vmatpush1.msra.mxu0 0.0
      %945 = vmatprep.subr.mxu0 0.0
      %946 = vmatpush1.msra.mxu0 0.0
      %947 = vmatprep.subr.mxu0 0.0
      %948 = vmatpush1.msra.mxu0 0.0
      %949 = vmatprep.subr.mxu0 0.0
      %950 = vmatpush1.msra.mxu0 0.0
      %951 = vmatprep.subr.mxu0 0.0
      %952 = vmatpush1.msra.mxu0 0.0
      %953 = vmatprep.subr.mxu0 0.0
      %954 = vmatpush1.msra.mxu0 0.0
      %955 = vmatprep.subr.mxu0 0.0
      %956 = vmatpush1.msra.mxu0 0.0
      %957 = vmatprep.subr.mxu0 0.0
      %958 = vmatpush1.msra.mxu0 0.0
      %959 = vmatprep.subr.mxu0 0.0
      %960 = vmatpush1.msra.mxu0 0.0
      %961 = vmatprep.subr.mxu0 0.0
      %962 = vmatpush1.msra.mxu0 0.0
      %963 = vmatprep.subr.mxu0 0.0
      %964 = vmatpush1.msra.mxu0 0.0
      %965 = vmatprep.subr.mxu0 0.0
      %966 = vmatpush1.msra.mxu0 0.0
      %967 = vmatprep.subr.mxu0 0.0
      %968 = vmatpush1.msra.mxu0 0.0
      %969 = vmatprep.subr.mxu0 0.0
      %970 = vmatpush1.msra.mxu0 0.0
      %971 = vmatprep.subr.mxu0 0.0
      %972 = vmatpush1.msra.mxu0 0.0
      %973 = vmatprep.subr.mxu0 0.0
      %974 = vmatpush1.msra.mxu0 0.0
      %975 = vmatprep.subr.mxu0 0.0
      %976 = vmatpush1.msra.mxu0 0.0
      %977 = vmatprep.subr.mxu0 0.0
      %978 = vmatpush1.msra.mxu0 0.0
      %979 = vmatprep.mubr.f32.mxu0 0.0
      %980 = vmatmul.mubr.f32.gmra.mrb[0].mxu0 %v913
      %v981 = vpop.f32.mrb[0].mxu0
      %v982 = vadd.f32 0.0, %v981
      %v983 = vpop.f32.mrb[0].mxu0
      %v984 = vadd.f32 0.0, %v983
      %985 = vdwg.mxu0
      %v986 = vadd.f32 %v874, %v982
      %v987 = vadd.f32 %v875, %v984
      %v988 = vlaneseq
      %v989 = vshrl.u32 %v988, 7
      %v990 = vsub.s32 6, %v989
      %v991 = vrot.slane %v333, %v990
      %v992 = vlaneseq
      %v993 = vshrl.u32 %v992, 7
      %v994 = vsub.s32 6, %v993
      %v995 = vrot.slane %v334, %v994
      %998 = vrot.lane.b32.xlu0 %v991, 32
      %v999 = vpop.permute.xlu0 %998
      %1000 = vrot.lane.b32.xlu0 %v995, 32
      %v1001 = vpop.permute.xlu0 %1000
      %vm1002 = vcmask 261120
      %v1003 = vsel %vm1002, %v999, %v1001
      %v1007 = vmul.f32 %v331, %v999
      %v1008 = vmul.f32 %v327, %v1003
      %v1009 = vmul.f32 %v332, %v1001
      %1013 = vrot.lane.b32.xlu0 %v1007, 96
      %v1014 = vpop.permute.xlu0 %1013
      %1015 = vrot.lane.b32.xlu0 %v1008, 96
      %v1016 = vpop.permute.xlu0 %1015
      %1017 = vrot.lane.b32.xlu0 %v1009, 96
      %v1018 = vpop.permute.xlu0 %1017
      %vm1019 = vcmask 785408
      %v1020 = vsel %vm1019, %v1014, %v1016
      %v1021 = vsel %vm1019, %v1016, %v1018
      %v1025 = vsel %vm392, %v343, 0
      %1027 = vmatprep.subr.mxu0 %v1021
      %1028 = vmatpush1.msra.mxu0 %v1020
      %1029 = vmatprep.subr.mxu0 0.0
      %1030 = vmatpush1.msra.mxu0 0.0
      %1031 = vmatprep.subr.mxu0 0.0
      %1032 = vmatpush1.msra.mxu0 0.0
      %1033 = vmatprep.subr.mxu0 0.0
      %1034 = vmatpush1.msra.mxu0 0.0
      %1035 = vmatprep.subr.mxu0 0.0
      %1036 = vmatpush1.msra.mxu0 0.0
      %1037 = vmatprep.subr.mxu0 0.0
      %1038 = vmatpush1.msra.mxu0 0.0
      %1039 = vmatprep.subr.mxu0 0.0
      %1040 = vmatpush1.msra.mxu0 0.0
      %1041 = vmatprep.subr.mxu0 0.0
      %1042 = vmatpush1.msra.mxu0 0.0
      %1043 = vmatprep.subr.mxu0 0.0
      %1044 = vmatpush1.msra.mxu0 0.0
      %1045 = vmatprep.subr.mxu0 0.0
      %1046 = vmatpush1.msra.mxu0 0.0
      %1047 = vmatprep.subr.mxu0 0.0
      %1048 = vmatpush1.msra.mxu0 0.0
      %1049 = vmatprep.subr.mxu0 0.0
      %1050 = vmatpush1.msra.mxu0 0.0
      %1051 = vmatprep.subr.mxu0 0.0
      %1052 = vmatpush1.msra.mxu0 0.0
      %1053 = vmatprep.subr.mxu0 0.0
      %1054 = vmatpush1.msra.mxu0 0.0
      %1055 = vmatprep.subr.mxu0 0.0
      %1056 = vmatpush1.msra.mxu0 0.0
      %1057 = vmatprep.subr.mxu0 0.0
      %1058 = vmatpush1.msra.mxu0 0.0
      %1059 = vmatprep.subr.mxu0 0.0
      %1060 = vmatpush1.msra.mxu0 0.0
      %1061 = vmatprep.subr.mxu0 0.0
      %1062 = vmatpush1.msra.mxu0 0.0
      %1063 = vmatprep.subr.mxu0 0.0
      %1064 = vmatpush1.msra.mxu0 0.0
      %1065 = vmatprep.subr.mxu0 0.0
      %1066 = vmatpush1.msra.mxu0 0.0
      %1067 = vmatprep.subr.mxu0 0.0
      %1068 = vmatpush1.msra.mxu0 0.0
      %1069 = vmatprep.subr.mxu0 0.0
      %1070 = vmatpush1.msra.mxu0 0.0
      %1071 = vmatprep.subr.mxu0 0.0
      %1072 = vmatpush1.msra.mxu0 0.0
      %1073 = vmatprep.subr.mxu0 0.0
      %1074 = vmatpush1.msra.mxu0 0.0
      %1075 = vmatprep.subr.mxu0 0.0
      %1076 = vmatpush1.msra.mxu0 0.0
      %1077 = vmatprep.subr.mxu0 0.0
      %1078 = vmatpush1.msra.mxu0 0.0
      %1079 = vmatprep.subr.mxu0 0.0
      %1080 = vmatpush1.msra.mxu0 0.0
      %1081 = vmatprep.subr.mxu0 0.0
      %1082 = vmatpush1.msra.mxu0 0.0
      %1083 = vmatprep.subr.mxu0 0.0
      %1084 = vmatpush1.msra.mxu0 0.0
      %1085 = vmatprep.subr.mxu0 0.0
      %1086 = vmatpush1.msra.mxu0 0.0
      %1087 = vmatprep.subr.mxu0 0.0
      %1088 = vmatpush1.msra.mxu0 0.0
      %1089 = vmatprep.subr.mxu0 0.0
      %1090 = vmatpush1.msra.mxu0 0.0
      %1091 = vmatprep.mubr.f32.mxu0 0.0
      %1092 = vmatmul.mubr.f32.gmra.mrb[0].mxu0 %v1025
      %v1093 = vpop.f32.mrb[0].mxu0
      %v1094 = vadd.f32 0.0, %v1093
      %v1095 = vpop.f32.mrb[0].mxu0
      %v1096 = vadd.f32 0.0, %v1095
      %1097 = vdwg.mxu0
      %v1098 = vadd.f32 %v986, %v1094
      %v1099 = vadd.f32 %v987, %v1096
      %v1100 = vlaneseq
      %v1101 = vshrl.u32 %v1100, 7
      %v1102 = vsub.s32 7, %v1101
      %v1103 = vrot.slane %v333, %v1102
      %v1104 = vlaneseq
      %v1105 = vshrl.u32 %v1104, 7
      %v1106 = vsub.s32 7, %v1105
      %v1107 = vrot.slane %v334, %v1106
      %1110 = vrot.lane.b32.xlu0 %v1103, 33
      %v1111 = vpop.permute.xlu0 %1110
      %1112 = vrot.lane.b32.xlu0 %v1107, 33
      %v1113 = vpop.permute.xlu0 %1112
      %vm1114 = vcmask 269312
      %v1115 = vsel %vm1114, %v1111, %v1113
      %v1119 = vmul.f32 %v331, %v1111
      %v1120 = vmul.f32 %v327, %v1115
      %v1121 = vmul.f32 %v332, %v1113
      %1125 = vrot.lane.b32.xlu0 %v1119, 95
      %v1126 = vpop.permute.xlu0 %1125
      %1127 = vrot.lane.b32.xlu0 %v1120, 95
      %v1128 = vpop.permute.xlu0 %1127
      %1129 = vrot.lane.b32.xlu0 %v1121, 95
      %v1130 = vpop.permute.xlu0 %1129
      %vm1131 = vcmask 777216
      %v1132 = vsel %vm1131, %v1126, %v1128
      %v1133 = vsel %vm1131, %v1128, %v1130
      %v1137 = vsel %vm392, %v344, 0
      %1139 = vmatprep.subr.mxu0 %v1133
      %1140 = vmatpush1.msra.mxu0 %v1132
      %1141 = vmatprep.subr.mxu0 0.0
      %1142 = vmatpush1.msra.mxu0 0.0
      %1143 = vmatprep.subr.mxu0 0.0
      %1144 = vmatpush1.msra.mxu0 0.0
      %1145 = vmatprep.subr.mxu0 0.0
      %1146 = vmatpush1.msra.mxu0 0.0
      %1147 = vmatprep.subr.mxu0 0.0
      %1148 = vmatpush1.msra.mxu0 0.0
      %1149 = vmatprep.subr.mxu0 0.0
      %1150 = vmatpush1.msra.mxu0 0.0
      %1151 = vmatprep.subr.mxu0 0.0
      %1152 = vmatpush1.msra.mxu0 0.0
      %1153 = vmatprep.subr.mxu0 0.0
      %1154 = vmatpush1.msra.mxu0 0.0
      %1155 = vmatprep.subr.mxu0 0.0
      %1156 = vmatpush1.msra.mxu0 0.0
      %1157 = vmatprep.subr.mxu0 0.0
      %1158 = vmatpush1.msra.mxu0 0.0
      %1159 = vmatprep.subr.mxu0 0.0
      %1160 = vmatpush1.msra.mxu0 0.0
      %1161 = vmatprep.subr.mxu0 0.0
      %1162 = vmatpush1.msra.mxu0 0.0
      %1163 = vmatprep.subr.mxu0 0.0
      %1164 = vmatpush1.msra.mxu0 0.0
      %1165 = vmatprep.subr.mxu0 0.0
      %1166 = vmatpush1.msra.mxu0 0.0
      %1167 = vmatprep.subr.mxu0 0.0
      %1168 = vmatpush1.msra.mxu0 0.0
      %1169 = vmatprep.subr.mxu0 0.0
      %1170 = vmatpush1.msra.mxu0 0.0
      %1171 = vmatprep.subr.mxu0 0.0
      %1172 = vmatpush1.msra.mxu0 0.0
      %1173 = vmatprep.subr.mxu0 0.0
      %1174 = vmatpush1.msra.mxu0 0.0
      %1175 = vmatprep.subr.mxu0 0.0
      %1176 = vmatpush1.msra.mxu0 0.0
      %1177 = vmatprep.subr.mxu0 0.0
      %1178 = vmatpush1.msra.mxu0 0.0
      %1179 = vmatprep.subr.mxu0 0.0
      %1180 = vmatpush1.msra.mxu0 0.0
      %1181 = vmatprep.subr.mxu0 0.0
      %1182 = vmatpush1.msra.mxu0 0.0
      %1183 = vmatprep.subr.mxu0 0.0
      %1184 = vmatpush1.msra.mxu0 0.0
      %1185 = vmatprep.subr.mxu0 0.0
      %1186 = vmatpush1.msra.mxu0 0.0
      %1187 = vmatprep.subr.mxu0 0.0
      %1188 = vmatpush1.msra.mxu0 0.0
      %1189 = vmatprep.subr.mxu0 0.0
      %1190 = vmatpush1.msra.mxu0 0.0
      %1191 = vmatprep.subr.mxu0 0.0
      %1192 = vmatpush1.msra.mxu0 0.0
      %1193 = vmatprep.subr.mxu0 0.0
      %1194 = vmatpush1.msra.mxu0 0.0
      %1195 = vmatprep.subr.mxu0 0.0
      %1196 = vmatpush1.msra.mxu0 0.0
      %1197 = vmatprep.subr.mxu0 0.0
      %1198 = vmatpush1.msra.mxu0 0.0
      %1199 = vmatprep.subr.mxu0 0.0
      %1200 = vmatpush1.msra.mxu0 0.0
      %1201 = vmatprep.subr.mxu0 0.0
      %1202 = vmatpush1.msra.mxu0 0.0
      %1203 = vmatprep.mubr.f32.mxu0 0.0
      %1204 = vmatmul.mubr.f32.gmra.mrb[0].mxu0 %v1137
      %v1205 = vpop.f32.mrb[0].mxu0
      %v1206 = vadd.f32 0.0, %v1205
      %v1207 = vpop.f32.mrb[0].mxu0
      %v1208 = vadd.f32 0.0, %v1207
      %1209 = vdwg.mxu0
      %v1210 = vadd.f32 %v1098, %v1206
      %v1211 = vadd.f32 %v1099, %v1208
      %v1212 = vlaneseq
      %v1213 = vshrl.u32 %v1212, 7
      %v1214 = vsub.s32 0, %v1213
      %v1215 = vrot.slane %v335, %v1214
      %v1216 = vlaneseq
      %v1217 = vshrl.u32 %v1216, 7
      %v1218 = vsub.s32 0, %v1217
      %v1219 = vrot.slane %v336, %v1218
      %1222 = vrot.lane.b32.xlu0 %v1215, 34
      %v1223 = vpop.permute.xlu0 %1222
      %1224 = vrot.lane.b32.xlu0 %v1219, 34
      %v1225 = vpop.permute.xlu0 %1224
      %vm1226 = vcmask 277504
      %v1227 = vsel %vm1226, %v1223, %v1225
      %v1231 = vmul.f32 %v331, %v1223
      %v1232 = vmul.f32 %v327, %v1227
      %v1233 = vmul.f32 %v332, %v1225
      %1237 = vrot.lane.b32.xlu0 %v1231, 94
      %v1238 = vpop.permute.xlu0 %1237
      %1239 = vrot.lane.b32.xlu0 %v1232, 94
      %v1240 = vpop.permute.xlu0 %1239
      %1241 = vrot.lane.b32.xlu0 %v1233, 94
      %v1242 = vpop.permute.xlu0 %1241
      %vm1243 = vcmask 769024
      %v1244 = vsel %vm1243, %v1238, %v1240
      %v1245 = vsel %vm1243, %v1240, %v1242
      %v1249 = vsel %vm392, %v345, 0
      %1251 = vmatprep.subr.mxu0 %v1245
      %1252 = vmatpush1.msra.mxu0 %v1244
      %1253 = vmatprep.subr.mxu0 0.0
      %1254 = vmatpush1.msra.mxu0 0.0
      %1255 = vmatprep.subr.mxu0 0.0
      %1256 = vmatpush1.msra.mxu0 0.0
      %1257 = vmatprep.subr.mxu0 0.0
      %1258 = vmatpush1.msra.mxu0 0.0
      %1259 = vmatprep.subr.mxu0 0.0
      %1260 = vmatpush1.msra.mxu0 0.0
      %1261 = vmatprep.subr.mxu0 0.0
      %1262 = vmatpush1.msra.mxu0 0.0
      %1263 = vmatprep.subr.mxu0 0.0
      %1264 = vmatpush1.msra.mxu0 0.0
      %1265 = vmatprep.subr.mxu0 0.0
      %1266 = vmatpush1.msra.mxu0 0.0
      %1267 = vmatprep.subr.mxu0 0.0
      %1268 = vmatpush1.msra.mxu0 0.0
      %1269 = vmatprep.subr.mxu0 0.0
      %1270 = vmatpush1.msra.mxu0 0.0
      %1271 = vmatprep.subr.mxu0 0.0
      %1272 = vmatpush1.msra.mxu0 0.0
      %1273 = vmatprep.subr.mxu0 0.0
      %1274 = vmatpush1.msra.mxu0 0.0
      %1275 = vmatprep.subr.mxu0 0.0
      %1276 = vmatpush1.msra.mxu0 0.0
      %1277 = vmatprep.subr.mxu0 0.0
      %1278 = vmatpush1.msra.mxu0 0.0
      %1279 = vmatprep.subr.mxu0 0.0
      %1280 = vmatpush1.msra.mxu0 0.0
      %1281 = vmatprep.subr.mxu0 0.0
      %1282 = vmatpush1.msra.mxu0 0.0
      %1283 = vmatprep.subr.mxu0 0.0
      %1284 = vmatpush1.msra.mxu0 0.0
      %1285 = vmatprep.subr.mxu0 0.0
      %1286 = vmatpush1.msra.mxu0 0.0
      %1287 = vmatprep.subr.mxu0 0.0
      %1288 = vmatpush1.msra.mxu0 0.0
      %1289 = vmatprep.subr.mxu0 0.0
      %1290 = vmatpush1.msra.mxu0 0.0
      %1291 = vmatprep.subr.mxu0 0.0
      %1292 = vmatpush1.msra.mxu0 0.0
      %1293 = vmatprep.subr.mxu0 0.0
      %1294 = vmatpush1.msra.mxu0 0.0
      %1295 = vmatprep.subr.mxu0 0.0
      %1296 = vmatpush1.msra.mxu0 0.0
      %1297 = vmatprep.subr.mxu0 0.0
      %1298 = vmatpush1.msra.mxu0 0.0
      %1299 = vmatprep.subr.mxu0 0.0
      %1300 = vmatpush1.msra.mxu0 0.0
      %1301 = vmatprep.subr.mxu0 0.0
      %1302 = vmatpush1.msra.mxu0 0.0
      %1303 = vmatprep.subr.mxu0 0.0
      %1304 = vmatpush1.msra.mxu0 0.0
      %1305 = vmatprep.subr.mxu0 0.0
      %1306 = vmatpush1.msra.mxu0 0.0
      %1307 = vmatprep.subr.mxu0 0.0
      %1308 = vmatpush1.msra.mxu0 0.0
      %1309 = vmatprep.subr.mxu0 0.0
      %1310 = vmatpush1.msra.mxu0 0.0
      %1311 = vmatprep.subr.mxu0 0.0
      %1312 = vmatpush1.msra.mxu0 0.0
      %1313 = vmatprep.subr.mxu0 0.0
      %1314 = vmatpush1.msra.mxu0 0.0
      %1315 = vmatprep.mubr.f32.mxu0 0.0
      %1316 = vmatmul.mubr.f32.gmra.mrb[0].mxu0 %v1249
      %v1317 = vpop.f32.mrb[0].mxu0
      %v1318 = vadd.f32 0.0, %v1317
      %v1319 = vpop.f32.mrb[0].mxu0
      %v1320 = vadd.f32 0.0, %v1319
      %1321 = vdwg.mxu0
      %v1322 = vadd.f32 %v1210, %v1318
      %v1323 = vadd.f32 %v1211, %v1320
      %1324 = vst [vmem:[%s291] sm:$0xff] %v1322
      %1325 = vst [vmem:[%s291 + $0x8] sm:$0xff] %v1323
      %v1326 = vadd.f32 %v1322, %v1323
      %1327 = vadd.xlane.f32.xlu0 %v1326
      %v1328 = vpop.xlane.xlu0 %1327
      %1329 = vst.msk [vmem:[%s295] sm:$0xff] %vm370, %v1328
      %v1330 = vmul.f32 %v1322, %v1322
      %v1331 = vmul.f32 %v1323, %v1323
      %v1332 = vadd.f32 %v1330, %v1331
      %1333 = vadd.xlane.f32.xlu0 %v1332
      %v1334 = vpop.xlane.xlu0 %1333
      %1335 = vst.msk [vmem:[%s299] sm:$0xff] %vm370, %v1334
      %p1336 = scmp.lt.s32.totalorder %s19, 1
      %s1337 = scalar_select %p1336, %s19, 1
      %s1338 = smul.addr %s1337, 2
      %s1339 = smul.addr %s1338, 8
      %s1340 = scalar_lea.vmem %s5, %s1339
      %p1341 = scmp.lt.s32.totalorder %s19, 1
      %s1342 = scalar_select %p1341, %s19, 1
      %s1343 = smul.addr %s1342, 8
      %s1344 = scalar_lea.vmem %s6, %s1343
      %p1345 = scmp.lt.s32.totalorder %s19, 1
      %s1346 = scalar_select %p1345, %s19, 1
      %s1347 = smul.addr %s1346, 8
      %s1348 = scalar_lea.vmem %s7, %s1347
      // Predicated region
      $region41: #{basic_block_forward.4} parent=39 // pred_check
        %p1349 = pneg %p147
      $region42: #{basic_block_forward.4} parent=39 // pred_check_branch
        %1351 = sbr.rel (%p1349) target = $region44
      $region43: #{basic_block_forward.4} parent=39 // pred_region
        _
      $region44: #{basic_block_forward.4} parent=39 // pred_fallthru
        _
      // Predicated region
      $region45: #{basic_block_forward.4} parent=39 // pred_check
        %p1352 = pneg %p173
      $region46: #{basic_block_forward.4} parent=39 // pred_check_branch
        %1354 = sbr.rel (%p1352) target = $region48
      $region47: #{basic_block_forward.4} parent=39 // pred_region
        _
      $region48: #{basic_block_forward.4} parent=39 // pred_fallthru
        _
      // Predicated region
      $region49: #{basic_block_forward.4} parent=39 // pred_check
        %p1355 = pneg %p199
      $region50: #{basic_block_forward.4} parent=39 // pred_check_branch
        %1357 = sbr.rel (%p1355) target = $region52
      $region51: #{basic_block_forward.4} parent=39 // pred_region
        _
      $region52: #{basic_block_forward.4} parent=39 // pred_fallthru
        _
    $region40: #{basic_block_forward.4} parent=5 // pred_fallthru
      _
    %p1358 = scmp.le.s32.totalorder 2, %s14
    // Predicated region
    $region53: #{basic_block_forward.4} parent=5 // pred_check
      %p1359 = pneg %p1358
    $region54: #{basic_block_forward.4} parent=5 // pred_check_branch
      %1361 = sbr.rel (%p1359) target = $region56
    $region55: #{basic_block_forward.4} parent=5 // pred_region
      %s1362 = ssub.s32 %s14, 2
      // Predicated region
      $region57: #{basic_block_forward.4} parent=55 // pred_check
        %p1363 = pneg %p153
      $region58: #{basic_block_forward.4} parent=55 // pred_check_branch
        %1365 = sbr.rel (%p1363) target = $region60
      $region59: #{basic_block_forward.4} parent=55 // pred_region
        %p1366 = scmp.lt.s32.totalorder %s20, 1
        %s1367 = scalar_select %p1366, %s20, 1
        %s1368 = smul.addr %s1367, 2
        %s1369 = smul.addr %s1368, 8
        %s1370 = scalar_lea.vmem %s5, %s1369
      $region60: #{basic_block_forward.4} parent=55 // pred_fallthru
        _
      // Predicated region
      $region61: #{basic_block_forward.4} parent=55 // pred_check
        %p1371 = pneg %p179
      $region62: #{basic_block_forward.4} parent=55 // pred_check_branch
        %1373 = sbr.rel (%p1371) target = $region64
      $region63: #{basic_block_forward.4} parent=55 // pred_region
        %p1374 = scmp.lt.s32.totalorder %s20, 1
        %s1375 = scalar_select %p1374, %s20, 1
        %s1376 = smul.addr %s1375, 8
        %s1377 = scalar_lea.vmem %s6, %s1376
      $region64: #{basic_block_forward.4} parent=55 // pred_fallthru
        _
      // Predicated region
      $region65: #{basic_block_forward.4} parent=55 // pred_check
        %p1378 = pneg %p205
      $region66: #{basic_block_forward.4} parent=55 // pred_check_branch
        %1380 = sbr.rel (%p1378) target = $region68
      $region67: #{basic_block_forward.4} parent=55 // pred_region
        %p1381 = scmp.lt.s32.totalorder %s20, 1
        %s1382 = scalar_select %p1381, %s20, 1
        %s1383 = smul.addr %s1382, 8
        %s1384 = scalar_lea.vmem %s7, %s1383
      $region68: #{basic_block_forward.4} parent=55 // pred_fallthru
        _
    $region56: #{basic_block_forward.4} parent=5 // pred_fallthru
      _
  $region6: #{basic_block_forward.4} parent=0 // loop_footer
    %s18 = sadd.s32 1, %s14
  $region7: #{basic_block_forward.4} parent=0 // loop_footer_branch
    %13 = sbr.rel target = $region3
  $region8: #{basic_block_forward.4} parent=0 // loop_exit
    _

</llo_original>
